<compile_context>
chip_gen: v7x
topology: tpu7x:2x2x1
jax: 0.10.0
libtpu: 0.0.40
codegen_flags: <defaults>
</compile_context>

<pallas_src>
import jax
import jax.numpy as jnp
import numpy as np
from jax.experimental import pallas as pl
from jax.experimental.pallas import tpu as pltpu

D_MODEL = 187
N_HEAD = 1
DIM_FF = 512
EPS = 1e-5              # nn.LayerNorm default
E_PAD = 256             # d_model zero-padded up to a 128-lane multiple
MXU_ROW_TARGET = 256    # rows (= b_tile*S) to aim for per grid step (v6e/v7x 2x256 MXU)
MAX_ROWS = 512          # cap so the flattened (rows, rows) score matrix stays cheap
NEG_INF = -1e30         # additive mask value (finite -> no inf-inf NaNs)


def _round_up(x, m):
    return ((x + m - 1) // m) * m


def _layernorm(x, gamma, beta, feat_mask):
    """Row-wise LayerNorm over the true D_MODEL features of a zero-padded (M, E_PAD) tile.

    Two-pass mean/variance (safer than E[x^2]-mean^2 against cancellation). Padded lanes
    are excluded from the variance via `feat_mask` and come out exactly zero (gamma/beta
    are zero-padded), preserving the zero-pad invariant end-to-end."""
    inv_n = 1.0 / D_MODEL
    mean = jnp.sum(x, axis=-1, keepdims=True) * inv_n
    d = jnp.where(feat_mask, x - mean, 0.0)
    var = jnp.sum(d * d, axis=-1, keepdims=True) * inv_n
    return d * jax.lax.rsqrt(var + EPS) * gamma + beta


def encoder_layer_kernel(src_ref, mask_ref,
                         wqkv_ref, bqkv_ref, wo_ref, bo_ref,
                         g1_ref, be1_ref,
                         w1_ref, bf1_ref, w2_ref, bf2_ref,
                         g2_ref, be2_ref,
                         out_ref, attn_ref):
    S, B, E_in = src_ref.shape            # E_in is 187 (raw) or 256 (padded, zero pads)
    EP = wqkv_ref.shape[0]                # 256
    BS = S * B                            # matmul M dimension for this grid step
    cdt = wqkv_ref.dtype                  # MXU operand dtype (bf16 by default)
    f32 = jnp.float32

    # (S, B, E) -> (S*B, E): rows stay in seq-major order i = s*B + b, so no transpose.
    x = src_ref[...].reshape(BS, E_in)
    if E_in < EP:                          # raw 187-lane input: zero-pad lanes in VMEM
        x = jnp.concatenate([x, jnp.zeros((BS, EP - E_in), f32)], axis=-1)

    feat_mask = jax.lax.broadcasted_iota(jnp.int32, (1, EP), 1) < D_MODEL

    # ---- fused QKV projection (softmax 1/sqrt(d) pre-folded into Wq/bq) ----
    qkv = jnp.dot(x.astype(cdt), wqkv_ref[...],
                  preferred_element_type=f32) + bqkv_ref[...]           # (BS, 3*EP)
    q = qkv[:, 0 * EP:1 * EP]
    k = qkv[:, 1 * EP:2 * EP]
    v = qkv[:, 2 * EP:3 * EP]

    # ---- single-head attention as ONE flattened (BS, BS) score matmul ----
    # mask_ref carries the additive block-diagonal (same-batch) mask (+ optional
    # src_mask), so cross-batch pairs vanish in the softmax.
    scores = jnp.einsum('qd,kd->qk', q.astype(cdt), k.astype(cdt),
                        preferred_element_type=f32) + mask_ref[...]     # (BS, BS)
    scores = scores - jnp.max(scores, axis=-1, keepdims=True)
    e = jnp.exp(scores)
    # Exact divide (not the approximate EUP reciprocal): attn weights are returned.
    attn = e / jnp.sum(e, axis=-1, keepdims=True)

    ctx = jnp.dot(attn.astype(cdt), v.astype(cdt),
                  preferred_element_type=f32)                           # (BS, EP)
    attn_out = jnp.dot(ctx.astype(cdt), wo_ref[...],
                       preferred_element_type=f32) + bo_ref[...]

    # ---- add & norm 1 ----
    x1 = _layernorm(x + attn_out, g1_ref[...], be1_ref[...], feat_mask)

    # ---- feed forward ----
    h = jnp.maximum(
        jnp.dot(x1.astype(cdt), w1_ref[...],
                preferred_element_type=f32) + bf1_ref[...], 0.0)
    ff = jnp.dot(h.astype(cdt), w2_ref[...],
                 preferred_element_type=f32) + bf2_ref[...]

    # ---- add & norm 2 ----
    x2 = _layernorm(x1 + ff, g2_ref[...], be2_ref[...], feat_mask)

    out_ref[...] = x2.reshape(S, B, EP)    # lane-dense (256-wide) store, padded layout

    # ---- attention weights: lane-dense flattened store; block-diag extraction is done
    #      on this tiny array in the wrapper (keeps the kernel free of lane-splitting
    #      reshapes). Cross-batch entries are exactly zero after the masked softmax. ----
    if attn_ref.shape[-1] > BS:
        attn = jnp.concatenate(
            [attn, jnp.zeros((BS, attn_ref.shape[-1] - BS), f32)], axis=-1)
    attn_ref[...] = attn


def pack_params(params, compute_dtype=jnp.bfloat16):
    """Fuse QKV, fold the softmax scale into Q, zero-pad d_model 187 -> 256.

    Weight matrices are cast to `compute_dtype` (bfloat16 by default: recommended on
    every TPU generation -- it halves the weight DMA, which dominates HBM traffic here).
    Biases, gamma and beta stay float32 (added to f32 accumulators)."""
    (wq, bq, wk, bk, wv, bv, wo, bo,
     g1, be1, w1, bf1, w2, bf2, g2, be2) = params
    scale = 1.0 / np.sqrt(D_MODEL // N_HEAD)

    def pad_mat(w, rows, cols):
        return jnp.zeros((rows, cols), jnp.float32).at[:w.shape[0], :w.shape[1]].set(w)

    def pad_row(b, cols):
        return jnp.zeros((1, cols), jnp.float32).at[:, :b.shape[1]].set(b)

    wqkv = jnp.concatenate([pad_mat(wq * scale, E_PAD, E_PAD),
                            pad_mat(wk, E_PAD, E_PAD),
                            pad_mat(wv, E_PAD, E_PAD)], axis=1)          # (E_PAD, 3*E_PAD)
    bqkv = jnp.concatenate([pad_row(bq * scale, E_PAD),
                            pad_row(bk, E_PAD),
                            pad_row(bv, E_PAD)], axis=1)                 # (1, 3*E_PAD)

    return dict(
        wqkv=wqkv.astype(compute_dtype), bqkv=bqkv,
        wo=pad_mat(wo, E_PAD, E_PAD).astype(compute_dtype), bo=pad_row(bo, E_PAD),
        g1=pad_row(g1, E_PAD), be1=pad_row(be1, E_PAD),
        w1=pad_mat(w1, E_PAD, DIM_FF).astype(compute_dtype), bf1=bf1.reshape(1, DIM_FF),
        w2=pad_mat(w2, DIM_FF, E_PAD).astype(compute_dtype), bf2=pad_row(bf2, E_PAD),
        g2=pad_row(g2, E_PAD), be2=pad_row(be2, E_PAD),
    )


def _choose_b_tile(n, s):
    """Pick batch-block size: fill the MXU rows (>=256 per step when possible), keep the
    flattened score matrix <= MAX_ROWS^2, satisfy the TPU block-shape constraint
    (b_tile == N or a multiple of 8), and prefer >=2 grid steps (v7x megacore) when that
    does not drop below the MXU row target."""
    cands = [b for b in range(1, n + 1)
             if n % b == 0 and (b == n or b % 8 == 0) and b * s <= MAX_ROWS]
    if not cands:
        return n
    bt = max(cands)
    if n // bt == 1:
        multi = [b for b in cands if n // b >= 2 and b * s >= MXU_ROW_TARGET]
        if multi:
            bt = max(multi)
    return bt


def _additive_mask(b_tile, s, src_mask):
    """Additive mask for the flattened (b_tile*S, b_tile*S) scores: block-diagonal
    same-batch structure plus (optionally) PyTorch's src_mask broadcast over the batch."""
    bs = b_tile * s
    b_ids = np.arange(bs, dtype=np.int64) % b_tile          # rows are seq-major: i = q*B + b
    base = np.where(b_ids[:, None] == b_ids[None, :], 0.0, NEG_INF).astype(np.float32)
    m = jnp.asarray(base)
    if src_mask is not None:
        sm = jnp.asarray(src_mask)
        if sm.dtype == jnp.bool_:
            sm = jnp.where(sm, NEG_INF, 0.0)                 # PyTorch: True = masked out
        sm = sm.astype(jnp.float32)
        m = m + jnp.repeat(jnp.repeat(sm, b_tile, axis=0), b_tile, axis=1)
    return m


def transformer_encoder_layer(src, packed, src_mask=None, *, b_tile=None,
                              output_padded=False, single_buffer_weights=True):
    """src: (S, N, E) seq-first float32, with E == D_MODEL (187, raw) or E_PAD (256,
    zero-padded, e.g. the padded output of a previous layer in a stack).

    Returns (out, attn_weights):
      out  : (S, N, D_MODEL), or the padded (S, N, E_PAD) layout if output_padded=True
             (pass padded outputs straight into the next layer to avoid re-pad/slice
             HBM passes in a stack),
      attn : (N, S, S) softmax weights (nhead=1), matching nn.MultiheadAttention."""
    S, N, E = src.shape
    assert E in (D_MODEL, E_PAD)
    if b_tile is None:
        b_tile = _choose_b_tile(N, S)
    assert N % b_tile == 0 and (b_tile == N or b_tile % 8 == 0)
    grid_steps = N // b_tile
    BS = b_tile * S
    bs_pad = _round_up(max(BS, 128), 128)

    mask = _additive_mask(b_tile, S, src_mask)               # (BS, BS), constant per step

    order = ['wqkv', 'bqkv', 'wo', 'bo', 'g1', 'be1',
             'w1', 'bf1', 'w2', 'bf2', 'g2', 'be2']
    weights = [packed[k] for k in order]

    # Advisory cost estimate so XLA schedules neighbouring ops around the custom call.
    flops = 2 * BS * (4 * E_PAD * E_PAD + 2 * E_PAD * DIM_FF + 2 * BS * E_PAD) * grid_steps
    transcendentals = grid_steps * BS * (BS + 2)
    weight_bytes = sum(int(np.prod(w.shape)) * w.dtype.itemsize for w in weights)
    act_bytes = (int(src.size) * src.dtype.itemsize + int(mask.size) * 4
                 + N * S * E_PAD * 4 + N * S * bs_pad * 4)
    cost = pl.CostEstimate(flops=int(flops), transcendentals=int(transcendentals),
                           bytes_accessed=int(weight_bytes + act_bytes))

    def build(use_single_buffer):
        def const_spec(a):
            # Constant index map: the block never changes, so Pallas DMAs it exactly once.
            # Single buffering halves its VMEM footprint (weights never need a 2nd buffer).
            kwargs = dict(pipeline_mode=pl.Buffered(1)) if use_single_buffer else {}
            return pl.BlockSpec(a.shape, lambda g, n=a.ndim: (0,) * n, **kwargs)

        in_specs = ([pl.BlockSpec((S, b_tile, E), lambda g: (0, g, 0)),
                     const_spec(mask)]
                    + [const_spec(w) for w in weights])
        out_specs = [pl.BlockSpec((S, b_tile, E_PAD), lambda g: (0, g, 0)),
                     pl.BlockSpec((BS, bs_pad), lambda g: (g, 0))]
        out_shape = [jax.ShapeDtypeStruct((S, N, E_PAD), jnp.float32),
                     jax.ShapeDtypeStruct((grid_steps * BS, bs_pad), jnp.float32)]
        return pl.pallas_call(
            encoder_layer_kernel,
            grid=(grid_steps,),
            in_specs=in_specs,
            out_specs=out_specs,
            out_shape=out_shape,
            compiler_params=pltpu.CompilerParams(
                dimension_semantics=("parallel",),          # megacore-shardable (v7x)
                vmem_limit_bytes=32 * 1024 * 1024),         # explicit; safe on v7x 64 MiB
            cost_estimate=cost)

    try:
        out_pad, attn_raw = build(single_buffer_weights)(src, mask, *weights)
    except Exception:
        # pl.Buffered(1) single-buffering of the constant operands is a pure VMEM
        # optimization; fall back to default double buffering if this jax/Mosaic
        # version does not accept pipeline_mode here.
        out_pad, attn_raw = build(False)(src, mask, *weights)

    out = out_pad if output_padded else out_pad[:, :, :D_MODEL]

    # Tiny wrapper-side block-diagonal extraction of the attention weights:
    # rows of attn_raw are ordered (grid step g, query q, batch b); columns (key k, batch b2).
    A = attn_raw[:, :BS].reshape(grid_steps, S, b_tile, S, b_tile)
    D = jnp.diagonal(A, axis1=2, axis2=4)                   # (G, S, S, b_tile)
    attn = jnp.transpose(D, (0, 3, 1, 2)).reshape(N, S, S)
    return out, attn


# ----------------- pure-JAX reference for correctness checking -----------------
def reference(src_sne, params):
    (wq, bq, wk, bk, wv, bv, wo, bo,
     g1, be1, w1, bf1, w2, bf2, g2, be2) = params
    x = jnp.transpose(src_sne, (1, 0, 2))  # (N, S, E)

    def ln(z, g, b):
        m = jnp.mean(z, axis=-1, keepdims=True)
        v = jnp.mean((z - m) ** 2, axis=-1, keepdims=True)
        return (z - m) / jnp.sqrt(v + EPS) * g + b

    def one(xb):
        scale = 1.0 / jnp.sqrt(jnp.float32(D_MODEL // N_HEAD))
        q = xb @ wq + bq
        k = xb @ wk + bk
        v = xb @ wv + bv
        s = (q * scale) @ k.T
        a = jax.nn.softmax(s, axis=-1)
        ao = (a @ v) @ wo + bo
        x1 = ln(xb + ao, g1, be1)
        h = jax.nn.relu(x1 @ w1 + bf1)
        x2 = ln(x1 + h @ w2 + bf2, g2, be2)
        return x2, a

    out, attn = jax.vmap(one)(x)
    return jnp.transpose(out, (1, 0, 2)), attn


def make_params(key):
    ks = jax.random.split(key, 20)
    def w(k, shape, scale=0.05):
        return jax.random.normal(k, shape, jnp.float32) * scale
    wq = w(ks[0], (D_MODEL, D_MODEL)); bq = w(ks[1], (1, D_MODEL))
    wk = w(ks[2], (D_MODEL, D_MODEL)); bk = w(ks[3], (1, D_MODEL))
    wv = w(ks[4], (D_MODEL, D_MODEL)); bv = w(ks[5], (1, D_MODEL))
    wo = w(ks[6], (D_MODEL, D_MODEL)); bo = w(ks[7], (1, D_MODEL))
    g1 = 1.0 + w(ks[8], (1, D_MODEL), 0.1); be1 = w(ks[9], (1, D_MODEL), 0.1)
    w1 = w(ks[10], (D_MODEL, DIM_FF)); bf1 = w(ks[11], (1, DIM_FF))
    w2 = w(ks[12], (DIM_FF, D_MODEL)); bf2 = w(ks[13], (1, D_MODEL))
    g2 = 1.0 + w(ks[14], (1, D_MODEL), 0.1); be2 = w(ks[15], (1, D_MODEL), 0.1)
    return (wq, bq, wk, bk, wv, bv, wo, bo, g1, be1, w1, bf1, w2, bf2, g2, be2)


if __name__ == "__main__":
    key = jax.random.PRNGKey(0)
    k_src, k_par = jax.random.split(key)

    S, N = 8, 2  # seq length, batch (small, consistent with (S, N, d_model) attention input)
    src = jax.random.normal(k_src, (S, N, D_MODEL), jnp.float32)
    params = make_params(k_par)

    ref_out, ref_attn = reference(src, params)

    # float32 MXU operands: exact-softmax / two-pass-LayerNorm path, tight check.
    out, attn = transformer_encoder_layer(src, pack_params(params, jnp.float32))
    jax.block_until_ready((out, attn))
    np.testing.assert_allclose(np.asarray(out), np.asarray(ref_out), rtol=2e-3, atol=2e-3)
    np.testing.assert_allclose(np.asarray(attn), np.asarray(ref_attn), rtol=2e-3, atol=2e-3)

    # bfloat16 MXU operands (the default: recommended on all TPU generations, halves the
    # weight DMA); accumulation, softmax, LayerNorm and residuals stay float32.
    out_bf, attn_bf = transformer_encoder_layer(src, pack_params(params))
    jax.block_until_ready((out_bf, attn_bf))
    np.testing.assert_allclose(np.asarray(out_bf), np.asarray(ref_out), rtol=5e-2, atol=5e-2)
    np.testing.assert_allclose(np.asarray(attn_bf), np.asarray(ref_attn), rtol=5e-2, atol=5e-2)

    assert out.shape == (S, N, D_MODEL)
    assert attn.shape == (N, S, S)
    print("KERNEL_OK")
</pallas_src>

<mosaic_0001>
module attributes {stable_mosaic.version = 11 : i64} {
  func.func @encoder_layer_kernel(%arg0: i32, %arg1: memref<8x2x187xf32, #tpu.memory_space<vmem>>, %arg2: memref<16x16xf32, #tpu.memory_space<vmem>>, %arg3: memref<256x768xf32, #tpu.memory_space<vmem>>, %arg4: memref<1x768xf32, #tpu.memory_space<vmem>>, %arg5: memref<256x256xf32, #tpu.memory_space<vmem>>, %arg6: memref<1x256xf32, #tpu.memory_space<vmem>>, %arg7: memref<1x256xf32, #tpu.memory_space<vmem>>, %arg8: memref<1x256xf32, #tpu.memory_space<vmem>>, %arg9: memref<256x512xf32, #tpu.memory_space<vmem>>, %arg10: memref<1x512xf32, #tpu.memory_space<vmem>>, %arg11: memref<512x256xf32, #tpu.memory_space<vmem>>, %arg12: memref<1x256xf32, #tpu.memory_space<vmem>>, %arg13: memref<1x256xf32, #tpu.memory_space<vmem>>, %arg14: memref<1x256xf32, #tpu.memory_space<vmem>>, %arg15: memref<8x2x256xf32, #tpu.memory_space<vmem>>, %arg16: memref<16x128xf32, #tpu.memory_space<vmem>>) attributes {dimension_semantics = [#tpu.dimension_semantics<parallel>], iteration_bounds = array<i64: 1>, scalar_prefetch = 0 : i64, scratch_operands = 0 : i64, tpu.core_type = #tpu.core_type<tc>, window_params = [{transform_indices = @transform_0, window_bounds = array<i64: 8, 2, 187>}, {pipeline_mode = #tpu.pipeline_mode<synchronous>, transform_indices = @transform_1, window_bounds = array<i64: 16, 16>}, {pipeline_mode = #tpu.pipeline_mode<synchronous>, transform_indices = @transform_2, window_bounds = array<i64: 256, 768>}, {pipeline_mode = #tpu.pipeline_mode<synchronous>, transform_indices = @transform_3, window_bounds = array<i64: 1, 768>}, {pipeline_mode = #tpu.pipeline_mode<synchronous>, transform_indices = @transform_4, window_bounds = array<i64: 256, 256>}, {pipeline_mode = #tpu.pipeline_mode<synchronous>, transform_indices = @transform_5, window_bounds = array<i64: 1, 256>}, {pipeline_mode = #tpu.pipeline_mode<synchronous>, transform_indices = @transform_6, window_bounds = array<i64: 1, 256>}, {pipeline_mode = #tpu.pipeline_mode<synchronous>, transform_indices = @transform_7, window_bounds = array<i64: 1, 256>}, {pipeline_mode = #tpu.pipeline_mode<synchronous>, transform_indices = @transform_8, window_bounds = array<i64: 256, 512>}, {pipeline_mode = #tpu.pipeline_mode<synchronous>, transform_indices = @transform_9, window_bounds = array<i64: 1, 512>}, {pipeline_mode = #tpu.pipeline_mode<synchronous>, transform_indices = @transform_10, window_bounds = array<i64: 512, 256>}, {pipeline_mode = #tpu.pipeline_mode<synchronous>, transform_indices = @transform_11, window_bounds = array<i64: 1, 256>}, {pipeline_mode = #tpu.pipeline_mode<synchronous>, transform_indices = @transform_12, window_bounds = array<i64: 1, 256>}, {pipeline_mode = #tpu.pipeline_mode<synchronous>, transform_indices = @transform_13, window_bounds = array<i64: 1, 256>}, {transform_indices = @transform_14, window_bounds = array<i64: 8, 2, 256>}, {transform_indices = @transform_15, window_bounds = array<i64: 16, 128>}]} {
    %c0 = arith.constant 0 : index
    %c0_0 = arith.constant 0 : index
    %c0_1 = arith.constant 0 : index
    %0 = vector.load %arg1[%c0, %c0_0, %c0_1] : memref<8x2x187xf32, #tpu.memory_space<vmem>>, vector<8x2x187xf32>
    %1 = vector.shape_cast %0 : vector<8x2x187xf32> to vector<16x187xf32>
    %cst = arith.constant 0.000000e+00 : f32
    %2 = vector.broadcast %cst : f32 to vector<16x69xf32>
    %3 = tpu.concatenate %1, %2 in 1 : vector<16x187xf32>, vector<16x69xf32> -> vector<16x256xf32>
    %4 = tpu.iota {dimensions = array<i32: 1>} : vector<1x256xi32>
    %c187_i32 = arith.constant 187 : i32
    %5 = vector.broadcast %c187_i32 : i32 to vector<1x256xi32>
    %6 = arith.cmpi slt, %4, %5 : vector<1x256xi32>
    %c0_2 = arith.constant 0 : index
    %c0_3 = arith.constant 0 : index
    %7 = vector.load %arg3[%c0_2, %c0_3] : memref<256x768xf32, #tpu.memory_space<vmem>>, vector<256x768xf32>
    %cst_4 = arith.constant dense<0.000000e+00> : vector<16x768xf32>
    %8 = tpu.matmul %3, %7, %cst_4 {dimension_numbers = #tpu.dot_dimension_numbers<[1], [0], [0], [1], [0, 0, 1, 1], [], []>} : vector<16x256xf32>, vector<256x768xf32>, vector<16x768xf32> -> vector<16x768xf32>
    %c0_5 = arith.constant 0 : index
    %c0_6 = arith.constant 0 : index
    %9 = vector.load %arg4[%c0_5, %c0_6] : memref<1x768xf32, #tpu.memory_space<vmem>>, vector<1x768xf32>
    %10 = vector.broadcast %9 : vector<1x768xf32> to vector<16x768xf32>
    %11 = arith.addf %8, %10 : vector<16x768xf32>
    %12 = vector.extract_strided_slice %11 {offsets = [0, 0], sizes = [16, 256], strides = [1, 1]} : vector<16x768xf32> to vector<16x256xf32>
    %13 = vector.extract_strided_slice %11 {offsets = [0, 256], sizes = [16, 256], strides = [1, 1]} : vector<16x768xf32> to vector<16x256xf32>
    %14 = vector.extract_strided_slice %11 {offsets = [0, 512], sizes = [16, 256], strides = [1, 1]} : vector<16x768xf32> to vector<16x256xf32>
    "tpu.trace_start"() <{level = 10 : i32, message = "qd,kd->qk"}> : () -> ()
    %cst_7 = arith.constant dense<0.000000e+00> : vector<16x16xf32>
    %15 = tpu.matmul %12, %13, %cst_7 {dimension_numbers = #tpu.dot_dimension_numbers<[1], [1], [0], [0], [0, 0, 1, 0], [], []>} : vector<16x256xf32>, vector<16x256xf32>, vector<16x16xf32> -> vector<16x16xf32>
    "tpu.trace_stop"() : () -> ()
    %c0_8 = arith.constant 0 : index
    %c0_9 = arith.constant 0 : index
    %16 = vector.load %arg2[%c0_8, %c0_9] : memref<16x16xf32, #tpu.memory_space<vmem>>, vector<16x16xf32>
    %17 = arith.addf %15, %16 : vector<16x16xf32>
    %cst_10 = arith.constant dense<0xFF800000> : vector<16xf32>
    %18 = vector.multi_reduction <maximumf>, %17, %cst_10 [1] : vector<16x16xf32> to vector<16xf32>
    %19 = vector.shape_cast %18 : vector<16xf32> to vector<16x1xf32>
    %20 = vector.broadcast %19 : vector<16x1xf32> to vector<16x16xf32>
    %21 = arith.subf %17, %20 : vector<16x16xf32>
    %22 = math.exp %21 : vector<16x16xf32>
    %cst_11 = arith.constant dense<0.000000e+00> : vector<16xf32>
    %23 = vector.multi_reduction <add>, %22, %cst_11 [1] : vector<16x16xf32> to vector<16xf32>
    %24 = vector.shape_cast %23 : vector<16xf32> to vector<16x1xf32>
    %25 = vector.broadcast %24 : vector<16x1xf32> to vector<16x16xf32>
    %26 = arith.divf %22, %25 : vector<16x16xf32>
    %cst_12 = arith.constant dense<0.000000e+00> : vector<16x256xf32>
    %27 = tpu.matmul %26, %14, %cst_12 {dimension_numbers = #tpu.dot_dimension_numbers<[1], [0], [0], [1], [0, 0, 1, 1], [], []>} : vector<16x16xf32>, vector<16x256xf32>, vector<16x256xf32> -> vector<16x256xf32>
    %c0_13 = arith.constant 0 : index
    %c0_14 = arith.constant 0 : index
    %28 = vector.load %arg5[%c0_13, %c0_14] : memref<256x256xf32, #tpu.memory_space<vmem>>, vector<256x256xf32>
    %cst_15 = arith.constant dense<0.000000e+00> : vector<16x256xf32>
    %29 = tpu.matmul %27, %28, %cst_15 {dimension_numbers = #tpu.dot_dimension_numbers<[1], [0], [0], [1], [0, 0, 1, 1], [], []>} : vector<16x256xf32>, vector<256x256xf32>, vector<16x256xf32> -> vector<16x256xf32>
    %c0_16 = arith.constant 0 : index
    %c0_17 = arith.constant 0 : index
    %30 = vector.load %arg6[%c0_16, %c0_17] : memref<1x256xf32, #tpu.memory_space<vmem>>, vector<1x256xf32>
    %31 = vector.broadcast %30 : vector<1x256xf32> to vector<16x256xf32>
    %32 = arith.addf %29, %31 : vector<16x256xf32>
    %33 = arith.addf %3, %32 : vector<16x256xf32>
    %c0_18 = arith.constant 0 : index
    %c0_19 = arith.constant 0 : index
    %34 = vector.load %arg7[%c0_18, %c0_19] : memref<1x256xf32, #tpu.memory_space<vmem>>, vector<1x256xf32>
    %c0_20 = arith.constant 0 : index
    %c0_21 = arith.constant 0 : index
    %35 = vector.load %arg8[%c0_20, %c0_21] : memref<1x256xf32, #tpu.memory_space<vmem>>, vector<1x256xf32>
    %cst_22 = arith.constant dense<0.000000e+00> : vector<16xf32>
    %36 = vector.multi_reduction <add>, %33, %cst_22 [1] : vector<16x256xf32> to vector<16xf32>
    %37 = vector.shape_cast %36 : vector<16xf32> to vector<16x1xf32>
    %cst_23 = arith.constant 0.00534759369 : f32
    %38 = vector.broadcast %cst_23 : f32 to vector<16x1xf32>
    %39 = arith.mulf %37, %38 : vector<16x1xf32>
    %40 = vector.broadcast %39 : vector<16x1xf32> to vector<16x256xf32>
    %41 = arith.subf %33, %40 : vector<16x256xf32>
    %cst_24 = arith.constant 0.000000e+00 : f32
    %42 = vector.shape_cast %6 : vector<1x256xi1> to vector<1x256xi1>
    %43 = vector.broadcast %42 : vector<1x256xi1> to vector<16x256xi1>
    %44 = vector.broadcast %cst_24 : f32 to vector<16x256xf32>
    %45 = arith.select %43, %41, %44 : vector<16x256xi1>, vector<16x256xf32>
    %46 = arith.mulf %45, %45 : vector<16x256xf32>
    %cst_25 = arith.constant dense<0.000000e+00> : vector<16xf32>
    %47 = vector.multi_reduction <add>, %46, %cst_25 [1] : vector<16x256xf32> to vector<16xf32>
    %48 = vector.shape_cast %47 : vector<16xf32> to vector<16x1xf32>
    %cst_26 = arith.constant 0.00534759369 : f32
    %49 = vector.broadcast %cst_26 : f32 to vector<16x1xf32>
    %50 = arith.mulf %48, %49 : vector<16x1xf32>
    %cst_27 = arith.constant 9.99999974E-6 : f32
    %51 = vector.broadcast %cst_27 : f32 to vector<16x1xf32>
    %52 = arith.addf %50, %51 : vector<16x1xf32>
    %53 = math.rsqrt %52 : vector<16x1xf32>
    %54 = vector.broadcast %53 : vector<16x1xf32> to vector<16x256xf32>
    %55 = arith.mulf %45, %54 : vector<16x256xf32>
    %56 = vector.broadcast %34 : vector<1x256xf32> to vector<16x256xf32>
    %57 = arith.mulf %55, %56 : vector<16x256xf32>
    %58 = vector.broadcast %35 : vector<1x256xf32> to vector<16x256xf32>
    %59 = arith.addf %57, %58 : vector<16x256xf32>
    %c0_28 = arith.constant 0 : index
    %c0_29 = arith.constant 0 : index
    %60 = vector.load %arg9[%c0_28, %c0_29] : memref<256x512xf32, #tpu.memory_space<vmem>>, vector<256x512xf32>
    %cst_30 = arith.constant dense<0.000000e+00> : vector<16x512xf32>
    %61 = tpu.matmul %59, %60, %cst_30 {dimension_numbers = #tpu.dot_dimension_numbers<[1], [0], [0], [1], [0, 0, 1, 1], [], []>} : vector<16x256xf32>, vector<256x512xf32>, vector<16x512xf32> -> vector<16x512xf32>
    %c0_31 = arith.constant 0 : index
    %c0_32 = arith.constant 0 : index
    %62 = vector.load %arg10[%c0_31, %c0_32] : memref<1x512xf32, #tpu.memory_space<vmem>>, vector<1x512xf32>
    %63 = vector.broadcast %62 : vector<1x512xf32> to vector<16x512xf32>
    %64 = arith.addf %61, %63 : vector<16x512xf32>
    %cst_33 = arith.constant 0.000000e+00 : f32
    %65 = vector.broadcast %cst_33 : f32 to vector<16x512xf32>
    %66 = arith.maximumf %64, %65 : vector<16x512xf32>
    %c0_34 = arith.constant 0 : index
    %c0_35 = arith.constant 0 : index
    %67 = vector.load %arg11[%c0_34, %c0_35] : memref<512x256xf32, #tpu.memory_space<vmem>>, vector<512x256xf32>
    %cst_36 = arith.constant dense<0.000000e+00> : vector<16x256xf32>
    %68 = tpu.matmul %66, %67, %cst_36 {dimension_numbers = #tpu.dot_dimension_numbers<[1], [0], [0], [1], [0, 0, 1, 1], [], []>} : vector<16x512xf32>, vector<512x256xf32>, vector<16x256xf32> -> vector<16x256xf32>
    %c0_37 = arith.constant 0 : index
    %c0_38 = arith.constant 0 : index
    %69 = vector.load %arg12[%c0_37, %c0_38] : memref<1x256xf32, #tpu.memory_space<vmem>>, vector<1x256xf32>
    %70 = vector.broadcast %69 : vector<1x256xf32> to vector<16x256xf32>
    %71 = arith.addf %68, %70 : vector<16x256xf32>
    %72 = arith.addf %59, %71 : vector<16x256xf32>
    %c0_39 = arith.constant 0 : index
    %c0_40 = arith.constant 0 : index
    %73 = vector.load %arg13[%c0_39, %c0_40] : memref<1x256xf32, #tpu.memory_space<vmem>>, vector<1x256xf32>
    %c0_41 = arith.constant 0 : index
    %c0_42 = arith.constant 0 : index
    %74 = vector.load %arg14[%c0_41, %c0_42] : memref<1x256xf32, #tpu.memory_space<vmem>>, vector<1x256xf32>
    %cst_43 = arith.constant dense<0.000000e+00> : vector<16xf32>
    %75 = vector.multi_reduction <add>, %72, %cst_43 [1] : vector<16x256xf32> to vector<16xf32>
    %76 = vector.shape_cast %75 : vector<16xf32> to vector<16x1xf32>
    %cst_44 = arith.constant 0.00534759369 : f32
    %77 = vector.broadcast %cst_44 : f32 to vector<16x1xf32>
    %78 = arith.mulf %76, %77 : vector<16x1xf32>
    %79 = vector.broadcast %78 : vector<16x1xf32> to vector<16x256xf32>
    %80 = arith.subf %72, %79 : vector<16x256xf32>
    %cst_45 = arith.constant 0.000000e+00 : f32
    %81 = vector.shape_cast %6 : vector<1x256xi1> to vector<1x256xi1>
    %82 = vector.broadcast %81 : vector<1x256xi1> to vector<16x256xi1>
    %83 = vector.broadcast %cst_45 : f32 to vector<16x256xf32>
    %84 = arith.select %82, %80, %83 : vector<16x256xi1>, vector<16x256xf32>
    %85 = arith.mulf %84, %84 : vector<16x256xf32>
    %cst_46 = arith.constant dense<0.000000e+00> : vector<16xf32>
    %86 = vector.multi_reduction <add>, %85, %cst_46 [1] : vector<16x256xf32> to vector<16xf32>
    %87 = vector.shape_cast %86 : vector<16xf32> to vector<16x1xf32>
    %cst_47 = arith.constant 0.00534759369 : f32
    %88 = vector.broadcast %cst_47 : f32 to vector<16x1xf32>
    %89 = arith.mulf %87, %88 : vector<16x1xf32>
    %cst_48 = arith.constant 9.99999974E-6 : f32
    %90 = vector.broadcast %cst_48 : f32 to vector<16x1xf32>
    %91 = arith.addf %89, %90 : vector<16x1xf32>
    %92 = math.rsqrt %91 : vector<16x1xf32>
    %93 = vector.broadcast %92 : vector<16x1xf32> to vector<16x256xf32>
    %94 = arith.mulf %84, %93 : vector<16x256xf32>
    %95 = vector.broadcast %73 : vector<1x256xf32> to vector<16x256xf32>
    %96 = arith.mulf %94, %95 : vector<16x256xf32>
    %97 = vector.broadcast %74 : vector<1x256xf32> to vector<16x256xf32>
    %98 = arith.addf %96, %97 : vector<16x256xf32>
    %99 = vector.shape_cast %98 : vector<16x256xf32> to vector<8x2x256xf32>
    %c0_49 = arith.constant 0 : index
    %c0_50 = arith.constant 0 : index
    %c0_51 = arith.constant 0 : index
    %100 = vector.load %arg15[%c0_49, %c0_50, %c0_51] : memref<8x2x256xf32, #tpu.memory_space<vmem>>, vector<8x2x256xf32>
    tpu.vector_store %arg15[%c0_49, %c0_50, %c0_51], %99 {strides = array<i32>} : memref<8x2x256xf32, #tpu.memory_space<vmem>>, vector<8x2x256xf32>,
    %cst_52 = arith.constant 0.000000e+00 : f32
    %101 = vector.broadcast %cst_52 : f32 to vector<16x112xf32>
    %102 = tpu.concatenate %26, %101 in 1 : vector<16x16xf32>, vector<16x112xf32> -> vector<16x128xf32>
    %c0_53 = arith.constant 0 : index
    %c0_54 = arith.constant 0 : index
    %103 = vector.load %arg16[%c0_53, %c0_54] : memref<16x128xf32, #tpu.memory_space<vmem>>, vector<16x128xf32>
    tpu.vector_store %arg16[%c0_53, %c0_54], %102 {strides = array<i32>} : memref<16x128xf32, #tpu.memory_space<vmem>>, vector<16x128xf32>,
    return
  }
  func.func @transform_0(%arg0: i32) -> (i32, i32, i32) {
    %c0_i32 = arith.constant 0 : i32
    %c0_i32_0 = arith.constant 0 : i32
    %c0_i32_1 = arith.constant 0 : i32
    return %c0_i32, %arg0, %c0_i32_0 : i32, i32, i32
  }
  func.func @transform_1(%arg0: i32) -> (i32, i32) {
    %c0_i32 = arith.constant 0 : i32
    %c0_i32_0 = arith.constant 0 : i32
    %c0_i32_1 = arith.constant 0 : i32
    return %c0_i32, %c0_i32_0 : i32, i32
  }
  func.func @transform_2(%arg0: i32) -> (i32, i32) {
    %c0_i32 = arith.constant 0 : i32
    %c0_i32_0 = arith.constant 0 : i32
    %c0_i32_1 = arith.constant 0 : i32
    return %c0_i32, %c0_i32_0 : i32, i32
  }
  func.func @transform_3(%arg0: i32) -> (i32, i32) {
    %c0_i32 = arith.constant 0 : i32
    %c0_i32_0 = arith.constant 0 : i32
    %c0_i32_1 = arith.constant 0 : i32
    return %c0_i32, %c0_i32_0 : i32, i32
  }
  func.func @transform_4(%arg0: i32) -> (i32, i32) {
    %c0_i32 = arith.constant 0 : i32
    %c0_i32_0 = arith.constant 0 : i32
    %c0_i32_1 = arith.constant 0 : i32
    return %c0_i32, %c0_i32_0 : i32, i32
  }
  func.func @transform_5(%arg0: i32) -> (i32, i32) {
    %c0_i32 = arith.constant 0 : i32
    %c0_i32_0 = arith.constant 0 : i32
    %c0_i32_1 = arith.constant 0 : i32
    return %c0_i32, %c0_i32_0 : i32, i32
  }
  func.func @transform_6(%arg0: i32) -> (i32, i32) {
    %c0_i32 = arith.constant 0 : i32
    %c0_i32_0 = arith.constant 0 : i32
    %c0_i32_1 = arith.constant 0 : i32
    return %c0_i32, %c0_i32_0 : i32, i32
  }
  func.func @transform_7(%arg0: i32) -> (i32, i32) {
    %c0_i32 = arith.constant 0 : i32
    %c0_i32_0 = arith.constant 0 : i32
    %c0_i32_1 = arith.constant 0 : i32
    return %c0_i32, %c0_i32_0 : i32, i32
  }
  func.func @transform_8(%arg0: i32) -> (i32, i32) {
    %c0_i32 = arith.constant 0 : i32
    %c0_i32_0 = arith.constant 0 : i32
    %c0_i32_1 = arith.constant 0 : i32
    return %c0_i32, %c0_i32_0 : i32, i32
  }
  func.func @transform_9(%arg0: i32) -> (i32, i32) {
    %c0_i32 = arith.constant 0 : i32
    %c0_i32_0 = arith.constant 0 : i32
    %c0_i32_1 = arith.constant 0 : i32
    return %c0_i32, %c0_i32_0 : i32, i32
  }
  func.func @transform_10(%arg0: i32) -> (i32, i32) {
    %c0_i32 = arith.constant 0 : i32
    %c0_i32_0 = arith.constant 0 : i32
    %c0_i32_1 = arith.constant 0 : i32
    return %c0_i32, %c0_i32_0 : i32, i32
  }
  func.func @transform_11(%arg0: i32) -> (i32, i32) {
    %c0_i32 = arith.constant 0 : i32
    %c0_i32_0 = arith.constant 0 : i32
    %c0_i32_1 = arith.constant 0 : i32
    return %c0_i32, %c0_i32_0 : i32, i32
  }
  func.func @transform_12(%arg0: i32) -> (i32, i32) {
    %c0_i32 = arith.constant 0 : i32
    %c0_i32_0 = arith.constant 0 : i32
    %c0_i32_1 = arith.constant 0 : i32
    return %c0_i32, %c0_i32_0 : i32, i32
  }
  func.func @transform_13(%arg0: i32) -> (i32, i32) {
    %c0_i32 = arith.constant 0 : i32
    %c0_i32_0 = arith.constant 0 : i32
    %c0_i32_1 = arith.constant 0 : i32
    return %c0_i32, %c0_i32_0 : i32, i32
  }
  func.func @transform_14(%arg0: i32) -> (i32, i32, i32) {
    %c0_i32 = arith.constant 0 : i32
    %c0_i32_0 = arith.constant 0 : i32
    %c0_i32_1 = arith.constant 0 : i32
    return %c0_i32, %arg0, %c0_i32_0 : i32, i32, i32
  }
  func.func @transform_15(%arg0: i32) -> (i32, i32) {
    %c0_i32 = arith.constant 0 : i32
    %c0_i32_0 = arith.constant 0 : i32
    return %arg0, %c0_i32 : i32, i32
  }
}

module attributes {stable_mosaic.version = 11 : i64} {
  func.func @encoder_layer_kernel(%arg0: i32, %arg1: memref<8x2x187xf32, #tpu.memory_space<vmem>>, %arg2: memref<16x16xf32, #tpu.memory_space<vmem>>, %arg3: memref<256x768xf32, #tpu.memory_space<vmem>>, %arg4: memref<1x768xf32, #tpu.memory_space<vmem>>, %arg5: memref<256x256xf32, #tpu.memory_space<vmem>>, %arg6: memref<1x256xf32, #tpu.memory_space<vmem>>, %arg7: memref<1x256xf32, #tpu.memory_space<vmem>>, %arg8: memref<1x256xf32, #tpu.memory_space<vmem>>, %arg9: memref<256x512xf32, #tpu.memory_space<vmem>>, %arg10: memref<1x512xf32, #tpu.memory_space<vmem>>, %arg11: memref<512x256xf32, #tpu.memory_space<vmem>>, %arg12: memref<1x256xf32, #tpu.memory_space<vmem>>, %arg13: memref<1x256xf32, #tpu.memory_space<vmem>>, %arg14: memref<1x256xf32, #tpu.memory_space<vmem>>, %arg15: memref<8x2x256xf32, #tpu.memory_space<vmem>>, %arg16: memref<16x128xf32, #tpu.memory_space<vmem>>) attributes {dimension_semantics = [#tpu.dimension_semantics<parallel>], iteration_bounds = array<i64: 1>, scalar_prefetch = 0 : i64, scratch_operands = 0 : i64, tpu.core_type = #tpu.core_type<tc>, window_params = [{transform_indices = @transform_0, window_bounds = array<i64: 8, 2, 187>}, {pipeline_mode = #tpu.pipeline_mode<synchronous>, transform_indices = @transform_1, window_bounds = array<i64: 16, 16>}, {pipeline_mode = #tpu.pipeline_mode<synchronous>, transform_indices = @transform_2, window_bounds = array<i64: 256, 768>}, {pipeline_mode = #tpu.pipeline_mode<synchronous>, transform_indices = @transform_3, window_bounds = array<i64: 1, 768>}, {pipeline_mode = #tpu.pipeline_mode<synchronous>, transform_indices = @transform_4, window_bounds = array<i64: 256, 256>}, {pipeline_mode = #tpu.pipeline_mode<synchronous>, transform_indices = @transform_5, window_bounds = array<i64: 1, 256>}, {pipeline_mode = #tpu.pipeline_mode<synchronous>, transform_indices = @transform_6, window_bounds = array<i64: 1, 256>}, {pipeline_mode = #tpu.pipeline_mode<synchronous>, transform_indices = @transform_7, window_bounds = array<i64: 1, 256>}, {pipeline_mode = #tpu.pipeline_mode<synchronous>, transform_indices = @transform_8, window_bounds = array<i64: 256, 512>}, {pipeline_mode = #tpu.pipeline_mode<synchronous>, transform_indices = @transform_9, window_bounds = array<i64: 1, 512>}, {pipeline_mode = #tpu.pipeline_mode<synchronous>, transform_indices = @transform_10, window_bounds = array<i64: 512, 256>}, {pipeline_mode = #tpu.pipeline_mode<synchronous>, transform_indices = @transform_11, window_bounds = array<i64: 1, 256>}, {pipeline_mode = #tpu.pipeline_mode<synchronous>, transform_indices = @transform_12, window_bounds = array<i64: 1, 256>}, {pipeline_mode = #tpu.pipeline_mode<synchronous>, transform_indices = @transform_13, window_bounds = array<i64: 1, 256>}, {transform_indices = @transform_14, window_bounds = array<i64: 8, 2, 256>}, {transform_indices = @transform_15, window_bounds = array<i64: 16, 128>}]} {
    %c0 = arith.constant 0 : index
    %c0_0 = arith.constant 0 : index
    %c0_1 = arith.constant 0 : index
    %0 = vector.load %arg1[%c0, %c0_0, %c0_1] : memref<8x2x187xf32, #tpu.memory_space<vmem>>, vector<8x2x187xf32>
    %1 = vector.shape_cast %0 : vector<8x2x187xf32> to vector<16x187xf32>
    %cst = arith.constant 0.000000e+00 : f32
    %2 = vector.broadcast %cst : f32 to vector<16x69xf32>
    %3 = tpu.concatenate %1, %2 in 1 : vector<16x187xf32>, vector<16x69xf32> -> vector<16x256xf32>
    %4 = tpu.iota {dimensions = array<i32: 1>} : vector<1x256xi32>
    %c187_i32 = arith.constant 187 : i32
    %5 = vector.broadcast %c187_i32 : i32 to vector<1x256xi32>
    %6 = arith.cmpi slt, %4, %5 : vector<1x256xi32>
    %c0_2 = arith.constant 0 : index
    %c0_3 = arith.constant 0 : index
    %7 = vector.load %arg3[%c0_2, %c0_3] : memref<256x768xf32, #tpu.memory_space<vmem>>, vector<256x768xf32>
    %cst_4 = arith.constant dense<0.000000e+00> : vector<16x768xf32>
    %8 = tpu.matmul %3, %7, %cst_4 {dimension_numbers = #tpu.dot_dimension_numbers<[1], [0], [0], [1], [0, 0, 1, 1], [], []>} : vector<16x256xf32>, vector<256x768xf32>, vector<16x768xf32> -> vector<16x768xf32>
    %c0_5 = arith.constant 0 : index
    %c0_6 = arith.constant 0 : index
    %9 = vector.load %arg4[%c0_5, %c0_6] : memref<1x768xf32, #tpu.memory_space<vmem>>, vector<1x768xf32>
    %10 = vector.broadcast %9 : vector<1x768xf32> to vector<16x768xf32>
    %11 = arith.addf %8, %10 : vector<16x768xf32>
    %12 = vector.extract_strided_slice %11 {offsets = [0, 0], sizes = [16, 256], strides = [1, 1]} : vector<16x768xf32> to vector<16x256xf32>
    %13 = vector.extract_strided_slice %11 {offsets = [0, 256], sizes = [16, 256], strides = [1, 1]} : vector<16x768xf32> to vector<16x256xf32>
    %14 = vector.extract_strided_slice %11 {offsets = [0, 512], sizes = [16, 256], strides = [1, 1]} : vector<16x768xf32> to vector<16x256xf32>
    "tpu.trace_start"() <{level = 10 : i32, message = "qd,kd->qk"}> : () -> ()
    %cst_7 = arith.constant dense<0.000000e+00> : vector<16x16xf32>
    %15 = tpu.matmul %12, %13, %cst_7 {dimension_numbers = #tpu.dot_dimension_numbers<[1], [1], [0], [0], [0, 0, 1, 0], [], []>} : vector<16x256xf32>, vector<16x256xf32>, vector<16x16xf32> -> vector<16x16xf32>
    "tpu.trace_stop"() : () -> ()
    %c0_8 = arith.constant 0 : index
    %c0_9 = arith.constant 0 : index
    %16 = vector.load %arg2[%c0_8, %c0_9] : memref<16x16xf32, #tpu.memory_space<vmem>>, vector<16x16xf32>
    %17 = arith.addf %15, %16 : vector<16x16xf32>
    %cst_10 = arith.constant dense<0xFF800000> : vector<16xf32>
    %18 = vector.multi_reduction <maximumf>, %17, %cst_10 [1] : vector<16x16xf32> to vector<16xf32>
    %19 = vector.shape_cast %18 : vector<16xf32> to vector<16x1xf32>
    %20 = vector.broadcast %19 : vector<16x1xf32> to vector<16x16xf32>
    %21 = arith.subf %17, %20 : vector<16x16xf32>
    %22 = math.exp %21 : vector<16x16xf32>
    %cst_11 = arith.constant dense<0.000000e+00> : vector<16xf32>
    %23 = vector.multi_reduction <add>, %22, %cst_11 [1] : vector<16x16xf32> to vector<16xf32>
    %24 = vector.shape_cast %23 : vector<16xf32> to vector<16x1xf32>
    %25 = vector.broadcast %24 : vector<16x1xf32> to vector<16x16xf32>
    %26 = arith.divf %22, %25 : vector<16x16xf32>
    %cst_12 = arith.constant dense<0.000000e+00> : vector<16x256xf32>
    %27 = tpu.matmul %26, %14, %cst_12 {dimension_numbers = #tpu.dot_dimension_numbers<[1], [0], [0], [1], [0, 0, 1, 1], [], []>} : vector<16x16xf32>, vector<16x256xf32>, vector<16x256xf32> -> vector<16x256xf32>
    %c0_13 = arith.constant 0 : index
    %c0_14 = arith.constant 0 : index
    %28 = vector.load %arg5[%c0_13, %c0_14] : memref<256x256xf32, #tpu.memory_space<vmem>>, vector<256x256xf32>
    %cst_15 = arith.constant dense<0.000000e+00> : vector<16x256xf32>
    %29 = tpu.matmul %27, %28, %cst_15 {dimension_numbers = #tpu.dot_dimension_numbers<[1], [0], [0], [1], [0, 0, 1, 1], [], []>} : vector<16x256xf32>, vector<256x256xf32>, vector<16x256xf32> -> vector<16x256xf32>
    %c0_16 = arith.constant 0 : index
    %c0_17 = arith.constant 0 : index
    %30 = vector.load %arg6[%c0_16, %c0_17] : memref<1x256xf32, #tpu.memory_space<vmem>>, vector<1x256xf32>
    %31 = vector.broadcast %30 : vector<1x256xf32> to vector<16x256xf32>
    %32 = arith.addf %29, %31 : vector<16x256xf32>
    %33 = arith.addf %3, %32 : vector<16x256xf32>
    %c0_18 = arith.constant 0 : index
    %c0_19 = arith.constant 0 : index
    %34 = vector.load %arg7[%c0_18, %c0_19] : memref<1x256xf32, #tpu.memory_space<vmem>>, vector<1x256xf32>
    %c0_20 = arith.constant 0 : index
    %c0_21 = arith.constant 0 : index
    %35 = vector.load %arg8[%c0_20, %c0_21] : memref<1x256xf32, #tpu.memory_space<vmem>>, vector<1x256xf32>
    %cst_22 = arith.constant dense<0.000000e+00> : vector<16xf32>
    %36 = vector.multi_reduction <add>, %33, %cst_22 [1] : vector<16x256xf32> to vector<16xf32>
    %37 = vector.shape_cast %36 : vector<16xf32> to vector<16x1xf32>
    %cst_23 = arith.constant 0.00534759369 : f32
    %38 = vector.broadcast %cst_23 : f32 to vector<16x1xf32>
    %39 = arith.mulf %37, %38 : vector<16x1xf32>
    %40 = vector.broadcast %39 : vector<16x1xf32> to vector<16x256xf32>
    %41 = arith.subf %33, %40 : vector<16x256xf32>
    %cst_24 = arith.constant 0.000000e+00 : f32
    %42 = vector.shape_cast %6 : vector<1x256xi1> to vector<1x256xi1>
    %43 = vector.broadcast %42 : vector<1x256xi1> to vector<16x256xi1>
    %44 = vector.broadcast %cst_24 : f32 to vector<16x256xf32>
    %45 = arith.select %43, %41, %44 : vector<16x256xi1>, vector<16x256xf32>
    %46 = arith.mulf %45, %45 : vector<16x256xf32>
    %cst_25 = arith.constant dense<0.000000e+00> : vector<16xf32>
    %47 = vector.multi_reduction <add>, %46, %cst_25 [1] : vector<16x256xf32> to vector<16xf32>
    %48 = vector.shape_cast %47 : vector<16xf32> to vector<16x1xf32>
    %cst_26 = arith.constant 0.00534759369 : f32
    %49 = vector.broadcast %cst_26 : f32 to vector<16x1xf32>
    %50 = arith.mulf %48, %49 : vector<16x1xf32>
    %cst_27 = arith.constant 9.99999974E-6 : f32
    %51 = vector.broadcast %cst_27 : f32 to vector<16x1xf32>
    %52 = arith.addf %50, %51 : vector<16x1xf32>
    %53 = math.rsqrt %52 : vector<16x1xf32>
    %54 = vector.broadcast %53 : vector<16x1xf32> to vector<16x256xf32>
    %55 = arith.mulf %45, %54 : vector<16x256xf32>
    %56 = vector.broadcast %34 : vector<1x256xf32> to vector<16x256xf32>
    %57 = arith.mulf %55, %56 : vector<16x256xf32>
    %58 = vector.broadcast %35 : vector<1x256xf32> to vector<16x256xf32>
    %59 = arith.addf %57, %58 : vector<16x256xf32>
    %c0_28 = arith.constant 0 : index
    %c0_29 = arith.constant 0 : index
    %60 = vector.load %arg9[%c0_28, %c0_29] : memref<256x512xf32, #tpu.memory_space<vmem>>, vector<256x512xf32>
    %cst_30 = arith.constant dense<0.000000e+00> : vector<16x512xf32>
    %61 = tpu.matmul %59, %60, %cst_30 {dimension_numbers = #tpu.dot_dimension_numbers<[1], [0], [0], [1], [0, 0, 1, 1], [], []>} : vector<16x256xf32>, vector<256x512xf32>, vector<16x512xf32> -> vector<16x512xf32>
    %c0_31 = arith.constant 0 : index
    %c0_32 = arith.constant 0 : index
    %62 = vector.load %arg10[%c0_31, %c0_32] : memref<1x512xf32, #tpu.memory_space<vmem>>, vector<1x512xf32>
    %63 = vector.broadcast %62 : vector<1x512xf32> to vector<16x512xf32>
    %64 = arith.addf %61, %63 : vector<16x512xf32>
    %cst_33 = arith.constant 0.000000e+00 : f32
    %65 = vector.broadcast %cst_33 : f32 to vector<16x512xf32>
    %66 = arith.maximumf %64, %65 : vector<16x512xf32>
    %c0_34 = arith.constant 0 : index
    %c0_35 = arith.constant 0 : index
    %67 = vector.load %arg11[%c0_34, %c0_35] : memref<512x256xf32, #tpu.memory_space<vmem>>, vector<512x256xf32>
    %cst_36 = arith.constant dense<0.000000e+00> : vector<16x256xf32>
    %68 = tpu.matmul %66, %67, %cst_36 {dimension_numbers = #tpu.dot_dimension_numbers<[1], [0], [0], [1], [0, 0, 1, 1], [], []>} : vector<16x512xf32>, vector<512x256xf32>, vector<16x256xf32> -> vector<16x256xf32>
    %c0_37 = arith.constant 0 : index
    %c0_38 = arith.constant 0 : index
    %69 = vector.load %arg12[%c0_37, %c0_38] : memref<1x256xf32, #tpu.memory_space<vmem>>, vector<1x256xf32>
    %70 = vector.broadcast %69 : vector<1x256xf32> to vector<16x256xf32>
    %71 = arith.addf %68, %70 : vector<16x256xf32>
    %72 = arith.addf %59, %71 : vector<16x256xf32>
    %c0_39 = arith.constant 0 : index
    %c0_40 = arith.constant 0 : index
    %73 = vector.load %arg13[%c0_39, %c0_40] : memref<1x256xf32, #tpu.memory_space<vmem>>, vector<1x256xf32>
    %c0_41 = arith.constant 0 : index
    %c0_42 = arith.constant 0 : index
    %74 = vector.load %arg14[%c0_41, %c0_42] : memref<1x256xf32, #tpu.memory_space<vmem>>, vector<1x256xf32>
    %cst_43 = arith.constant dense<0.000000e+00> : vector<16xf32>
    %75 = vector.multi_reduction <add>, %72, %cst_43 [1] : vector<16x256xf32> to vector<16xf32>
    %76 = vector.shape_cast %75 : vector<16xf32> to vector<16x1xf32>
    %cst_44 = arith.constant 0.00534759369 : f32
    %77 = vector.broadcast %cst_44 : f32 to vector<16x1xf32>
    %78 = arith.mulf %76, %77 : vector<16x1xf32>
    %79 = vector.broadcast %78 : vector<16x1xf32> to vector<16x256xf32>
    %80 = arith.subf %72, %79 : vector<16x256xf32>
    %cst_45 = arith.constant 0.000000e+00 : f32
    %81 = vector.shape_cast %6 : vector<1x256xi1> to vector<1x256xi1>
    %82 = vector.broadcast %81 : vector<1x256xi1> to vector<16x256xi1>
    %83 = vector.broadcast %cst_45 : f32 to vector<16x256xf32>
    %84 = arith.select %82, %80, %83 : vector<16x256xi1>, vector<16x256xf32>
    %85 = arith.mulf %84, %84 : vector<16x256xf32>
    %cst_46 = arith.constant dense<0.000000e+00> : vector<16xf32>
    %86 = vector.multi_reduction <add>, %85, %cst_46 [1] : vector<16x256xf32> to vector<16xf32>
    %87 = vector.shape_cast %86 : vector<16xf32> to vector<16x1xf32>
    %cst_47 = arith.constant 0.00534759369 : f32
    %88 = vector.broadcast %cst_47 : f32 to vector<16x1xf32>
    %89 = arith.mulf %87, %88 : vector<16x1xf32>
    %cst_48 = arith.constant 9.99999974E-6 : f32
    %90 = vector.broadcast %cst_48 : f32 to vector<16x1xf32>
    %91 = arith.addf %89, %90 : vector<16x1xf32>
    %92 = math.rsqrt %91 : vector<16x1xf32>
    %93 = vector.broadcast %92 : vector<16x1xf32> to vector<16x256xf32>
    %94 = arith.mulf %84, %93 : vector<16x256xf32>
    %95 = vector.broadcast %73 : vector<1x256xf32> to vector<16x256xf32>
    %96 = arith.mulf %94, %95 : vector<16x256xf32>
    %97 = vector.broadcast %74 : vector<1x256xf32> to vector<16x256xf32>
    %98 = arith.addf %96, %97 : vector<16x256xf32>
    %99 = vector.shape_cast %98 : vector<16x256xf32> to vector<8x2x256xf32>
    %c0_49 = arith.constant 0 : index
    %c0_50 = arith.constant 0 : index
    %c0_51 = arith.constant 0 : index
    %100 = vector.load %arg15[%c0_49, %c0_50, %c0_51] : memref<8x2x256xf32, #tpu.memory_space<vmem>>, vector<8x2x256xf32>
    tpu.vector_store %arg15[%c0_49, %c0_50, %c0_51], %99 {strides = array<i32>} : memref<8x2x256xf32, #tpu.memory_space<vmem>>, vector<8x2x256xf32>,
    %cst_52 = arith.constant 0.000000e+00 : f32
    %101 = vector.broadcast %cst_52 : f32 to vector<16x112xf32>
    %102 = tpu.concatenate %26, %101 in 1 : vector<16x16xf32>, vector<16x112xf32> -> vector<16x128xf32>
    %c0_53 = arith.constant 0 : index
    %c0_54 = arith.constant 0 : index
    %103 = vector.load %arg16[%c0_53, %c0_54] : memref<16x128xf32, #tpu.memory_space<vmem>>, vector<16x128xf32>
    tpu.vector_store %arg16[%c0_53, %c0_54], %102 {strides = array<i32>} : memref<16x128xf32, #tpu.memory_space<vmem>>, vector<16x128xf32>,
    return
  }
  func.func @transform_0(%arg0: i32) -> (i32, i32, i32) {
    %c0_i32 = arith.constant 0 : i32
    %c0_i32_0 = arith.constant 0 : i32
    %c0_i32_1 = arith.constant 0 : i32
    return %c0_i32, %arg0, %c0_i32_0 : i32, i32, i32
  }
  func.func @transform_1(%arg0: i32) -> (i32, i32) {
    %c0_i32 = arith.constant 0 : i32
    %c0_i32_0 = arith.constant 0 : i32
    %c0_i32_1 = arith.constant 0 : i32
    return %c0_i32, %c0_i32_0 : i32, i32
  }
  func.func @transform_2(%arg0: i32) -> (i32, i32) {
    %c0_i32 = arith.constant 0 : i32
    %c0_i32_0 = arith.constant 0 : i32
    %c0_i32_1 = arith.constant 0 : i32
    return %c0_i32, %c0_i32_0 : i32, i32
  }
  func.func @transform_3(%arg0: i32) -> (i32, i32) {
    %c0_i32 = arith.constant 0 : i32
    %c0_i32_0 = arith.constant 0 : i32
    %c0_i32_1 = arith.constant 0 : i32
    return %c0_i32, %c0_i32_0 : i32, i32
  }
  func.func @transform_4(%arg0: i32) -> (i32, i32) {
    %c0_i32 = arith.constant 0 : i32
    %c0_i32_0 = arith.constant 0 : i32
    %c0_i32_1 = arith.constant 0 : i32
    return %c0_i32, %c0_i32_0 : i32, i32
  }
  func.func @transform_5(%arg0: i32) -> (i32, i32) {
    %c0_i32 = arith.constant 0 : i32
    %c0_i32_0 = arith.constant 0 : i32
    %c0_i32_1 = arith.constant 0 : i32
    return %c0_i32, %c0_i32_0 : i32, i32
  }
  func.func @transform_6(%arg0: i32) -> (i32, i32) {
    %c0_i32 = arith.constant 0 : i32
    %c0_i32_0 = arith.constant 0 : i32
    %c0_i32_1 = arith.constant 0 : i32
    return %c0_i32, %c0_i32_0 : i32, i32
  }
  func.func @transform_7(%arg0: i32) -> (i32, i32) {
    %c0_i32 = arith.constant 0 : i32
    %c0_i32_0 = arith.constant 0 : i32
    %c0_i32_1 = arith.constant 0 : i32
    return %c0_i32, %c0_i32_0 : i32, i32
  }
  func.func @transform_8(%arg0: i32) -> (i32, i32) {
    %c0_i32 = arith.constant 0 : i32
    %c0_i32_0 = arith.constant 0 : i32
    %c0_i32_1 = arith.constant 0 : i32
    return %c0_i32, %c0_i32_0 : i32, i32
  }
  func.func @transform_9(%arg0: i32) -> (i32, i32) {
    %c0_i32 = arith.constant 0 : i32
    %c0_i32_0 = arith.constant 0 : i32
    %c0_i32_1 = arith.constant 0 : i32
    return %c0_i32, %c0_i32_0 : i32, i32
  }
  func.func @transform_10(%arg0: i32) -> (i32, i32) {
    %c0_i32 = arith.constant 0 : i32
    %c0_i32_0 = arith.constant 0 : i32
    %c0_i32_1 = arith.constant 0 : i32
    return %c0_i32, %c0_i32_0 : i32, i32
  }
  func.func @transform_11(%arg0: i32) -> (i32, i32) {
    %c0_i32 = arith.constant 0 : i32
    %c0_i32_0 = arith.constant 0 : i32
    %c0_i32_1 = arith.constant 0 : i32
    return %c0_i32, %c0_i32_0 : i32, i32
  }
  func.func @transform_12(%arg0: i32) -> (i32, i32) {
    %c0_i32 = arith.constant 0 : i32
    %c0_i32_0 = arith.constant 0 : i32
    %c0_i32_1 = arith.constant 0 : i32
    return %c0_i32, %c0_i32_0 : i32, i32
  }
  func.func @transform_13(%arg0: i32) -> (i32, i32) {
    %c0_i32 = arith.constant 0 : i32
    %c0_i32_0 = arith.constant 0 : i32
    %c0_i32_1 = arith.constant 0 : i32
    return %c0_i32, %c0_i32_0 : i32, i32
  }
  func.func @transform_14(%arg0: i32) -> (i32, i32, i32) {
    %c0_i32 = arith.constant 0 : i32
    %c0_i32_0 = arith.constant 0 : i32
    %c0_i32_1 = arith.constant 0 : i32
    return %c0_i32, %arg0, %c0_i32_0 : i32, i32, i32
  }
  func.func @transform_15(%arg0: i32) -> (i32, i32) {
    %c0_i32 = arith.constant 0 : i32
    %c0_i32_0 = arith.constant 0 : i32
    return %arg0, %c0_i32 : i32, i32
  }
}

</mosaic_0001>

<llo_original>
// kernel: tpu_custom_call.1
$region0: #{tpu_custom_call.1}
  #allocation0 [shape = 'u32[]', space=smem, size = 0x4, offset = 0x4, fixed_abs, tag = 'smem constant byte address 0x4 - core index']
  #allocation1 [shape = 'u32[144,128]{1,0:T(1,128)}', space=vmem, size = 0x12000, scoped, tag = 'internal scratch']
  %s0 = inlined_call_operand.hbm [shape: f32[8,2,187], index: 0, kind: input, shape index: {}]
  %s1 = inlined_call_operand.hbm [shape: f32[16,16], index: 1, kind: input, shape index: {}]
  %s2 = inlined_call_operand.hbm [shape: f32[256,768], index: 2, kind: input, shape index: {}]
  %s3 = inlined_call_operand.vmem [shape: f32[1,768], index: 3, kind: input, shape index: {}]
  %s4 = inlined_call_operand.hbm [shape: f32[256,256], index: 4, kind: input, shape index: {}]
  %s5 = inlined_call_operand.vmem [shape: f32[1,256], index: 5, kind: input, shape index: {}]
  %s6 = inlined_call_operand.vmem [shape: f32[1,256], index: 6, kind: input, shape index: {}]
  %s7 = inlined_call_operand.vmem [shape: f32[1,256], index: 7, kind: input, shape index: {}]
  %s8 = inlined_call_operand.hbm [shape: f32[256,512], index: 8, kind: input, shape index: {}]
  %s9 = inlined_call_operand.vmem [shape: f32[1,512], index: 9, kind: input, shape index: {}]
  %s10 = inlined_call_operand.hbm [shape: f32[512,256], index: 10, kind: input, shape index: {}]
  %s11 = inlined_call_operand.vmem [shape: f32[1,256], index: 11, kind: input, shape index: {}]
  %s12 = inlined_call_operand.vmem [shape: f32[1,256], index: 12, kind: input, shape index: {}]
  %s13 = inlined_call_operand.vmem [shape: f32[1,256], index: 13, kind: input, shape index: {}]
  %s14 = inlined_call_operand.hbm [shape: f32[8,2,256], index: 14, kind: output, shape index: {0}]
  %s15 = inlined_call_operand.hbm [shape: f32[16,128], index: 15, kind: output, shape index: {1}]
  %16 = xla_tuple %s14, %s15
  %s17 = sld [smem:[#allocation0]]
  $region98: #{tpu_custom_call.1} parent=0
    _
  %s19 = ssub.s32 1, %s17
  %s20 = scalar_select 0, %s19, %s17
  $region1: #{tpu_custom_call.1} parent=0
    #allocation2 [shape = 'u8[16384]{0}', space=vmem, size = 0x4000, scoped, tag = 'input window, operand 0, single buffered']
    #allocation3 [shape = 's32[1]{0}', space=sflag, size = 0x4, scoped, tag = 'scoped memory for tpu_custom_call.1']
    #allocation4 [shape = 's32[1]{0}', space=sflag, size = 0x4, scoped, tag = 'scoped memory for tpu_custom_call.1']
    #allocation5 [shape = 'u8[8192]{0}', space=vmem, size = 0x2000, scoped, tag = 'input window, operand 1, single buffered']
    #allocation6 [shape = 's32[1]{0}', space=sflag, size = 0x4, scoped, tag = 'scoped memory for tpu_custom_call.1']
    #allocation7 [shape = 'u8[786432]{0}', space=vmem, size = 0xc0000, scoped, tag = 'input window, operand 2, single buffered']
    #allocation8 [shape = 'u8[262144]{0}', space=vmem, size = 0x40000, scoped, tag = 'input window, operand 4, single buffered']
    #allocation9 [shape = 's32[1]{0}', space=sflag, size = 0x4, scoped, tag = 'scoped memory for tpu_custom_call.1']
    #allocation10 [shape = 'u8[524288]{0}', space=vmem, size = 0x80000, scoped, tag = 'input window, operand 8, single buffered']
    #allocation11 [shape = 'u8[524288]{0}', space=vmem, size = 0x80000, scoped, tag = 'input window, operand 10, single buffered']
    #allocation12 [shape = 's32[1]{0}', space=sflag, size = 0x4, scoped, tag = 'scoped memory for tpu_custom_call.1']
    #allocation13 [shape = 'u8[16384]{0}', space=vmem, size = 0x4000, scoped, tag = 'output window, operand 0, single buffered']
    #allocation14 [shape = 'u8[8192]{0}', space=vmem, size = 0x2000, scoped, tag = 'output window, operand 1, single buffered']
    #allocation15 [shape = 's32[1]{0}', space=sflag, size = 0x4, scoped, tag = 'scoped memory for tpu_custom_call.1']
    %21 = vsyncpa [#allocation3], 0
    %22 = vsyncpa [#allocation6], 0
    %23 = vsyncpa [#allocation9], 0
    %24 = vsyncpa [#allocation12], 0
    %25 = vsyncpa [#allocation4], 0
    %26 = vsyncpa [#allocation15], 0
    // Predicated region
    $region2: #{tpu_custom_call.1} parent=1 // pred_check
      _
    $region3: #{tpu_custom_call.1} parent=1 // pred_check_branch
      %28 = sbr.rel (0) target = $region5
    $region4: #{tpu_custom_call.1} parent=1 // pred_region
      %s30 = ssub.s32 512, 512
      %31 = vsyncadd [#allocation3], %s30
      %s32 = sshll.u32 [#allocation2], 4
      %s33 = int_to_ptr.vmem [resolvable:$true] %s32
      %38 = dma.hbm_to_vmem [thread:$0]  %s0, 512, %s33, [#allocation3], 64, 64, 4
    $region5: #{tpu_custom_call.1} parent=1 // pred_fallthru
      _
    // Predicated region
    $region6: #{tpu_custom_call.1} parent=1 // pred_check
      _
    $region7: #{tpu_custom_call.1} parent=1 // pred_check_branch
      %40 = sbr.rel (0) target = $region9
    $region8: #{tpu_custom_call.1} parent=1 // pred_region
      %s42 = ssub.s32 256, 256
      %43 = vsyncadd [#allocation6], %s42
      %s44 = sshll.u32 [#allocation5], 4
      %s45 = int_to_ptr.vmem [resolvable:$true] %s44
      %50 = dma.hbm_to_vmem [thread:$0]  %s1, 256, %s45, [#allocation6], 128, 128, 8
    $region9: #{tpu_custom_call.1} parent=1 // pred_fallthru
      _
    // Predicated region
    $region10: #{tpu_custom_call.1} parent=1 // pred_check
      _
    $region11: #{tpu_custom_call.1} parent=1 // pred_check_branch
      %52 = sbr.rel (0) target = $region13
    $region12: #{tpu_custom_call.1} parent=1 // pred_region
      %s54 = ssub.s32 24576, 24576
      %55 = vsyncadd [#allocation6], %s54
      %s56 = sshll.u32 [#allocation7], 4
      %s57 = int_to_ptr.vmem [resolvable:$true] %s56
      %62 = dma.hbm_to_vmem [thread:$0]  %s2, 24576, %s57, [#allocation6], 768, 768, 48
    $region13: #{tpu_custom_call.1} parent=1 // pred_fallthru
      _
    // Predicated region
    $region14: #{tpu_custom_call.1} parent=1 // pred_check
      _
    $region15: #{tpu_custom_call.1} parent=1 // pred_check_branch
      %64 = sbr.rel (0) target = $region17
    $region16: #{tpu_custom_call.1} parent=1 // pred_region
      _
    $region17: #{tpu_custom_call.1} parent=1 // pred_fallthru
      _
    // Predicated region
    $region18: #{tpu_custom_call.1} parent=1 // pred_check
      _
    $region19: #{tpu_custom_call.1} parent=1 // pred_check_branch
      %66 = sbr.rel (0) target = $region21
    $region20: #{tpu_custom_call.1} parent=1 // pred_region
      %s68 = ssub.s32 8192, 8192
      %69 = vsyncadd [#allocation9], %s68
      %s70 = sshll.u32 [#allocation8], 4
      %s71 = int_to_ptr.vmem [resolvable:$true] %s70
      %76 = dma.hbm_to_vmem [thread:$0]  %s4, 8192, %s71, [#allocation9], 256, 256, 16
    $region21: #{tpu_custom_call.1} parent=1 // pred_fallthru
      _
    // Predicated region
    $region22: #{tpu_custom_call.1} parent=1 // pred_check
      _
    $region23: #{tpu_custom_call.1} parent=1 // pred_check_branch
      %78 = sbr.rel (0) target = $region25
    $region24: #{tpu_custom_call.1} parent=1 // pred_region
      _
    $region25: #{tpu_custom_call.1} parent=1 // pred_fallthru
      _
    // Predicated region
    $region26: #{tpu_custom_call.1} parent=1 // pred_check
      _
    $region27: #{tpu_custom_call.1} parent=1 // pred_check_branch
      %80 = sbr.rel (0) target = $region29
    $region28: #{tpu_custom_call.1} parent=1 // pred_region
      _
    $region29: #{tpu_custom_call.1} parent=1 // pred_fallthru
      _
    // Predicated region
    $region30: #{tpu_custom_call.1} parent=1 // pred_check
      _
    $region31: #{tpu_custom_call.1} parent=1 // pred_check_branch
      %82 = sbr.rel (0) target = $region33
    $region32: #{tpu_custom_call.1} parent=1 // pred_region
      _
    $region33: #{tpu_custom_call.1} parent=1 // pred_fallthru
      _
    // Predicated region
    $region34: #{tpu_custom_call.1} parent=1 // pred_check
      _
    $region35: #{tpu_custom_call.1} parent=1 // pred_check_branch
      %84 = sbr.rel (0) target = $region37
    $region36: #{tpu_custom_call.1} parent=1 // pred_region
      %s86 = ssub.s32 16384, 16384
      %87 = vsyncadd [#allocation9], %s86
      %s88 = sshll.u32 [#allocation10], 4
      %s89 = int_to_ptr.vmem [resolvable:$true] %s88
      %94 = dma.hbm_to_vmem [thread:$0]  %s8, 16384, %s89, [#allocation9], 512, 512, 32
    $region37: #{tpu_custom_call.1} parent=1 // pred_fallthru
      _
    // Predicated region
    $region38: #{tpu_custom_call.1} parent=1 // pred_check
      _
    $region39: #{tpu_custom_call.1} parent=1 // pred_check_branch
      %96 = sbr.rel (0) target = $region41
    $region40: #{tpu_custom_call.1} parent=1 // pred_region
      _
    $region41: #{tpu_custom_call.1} parent=1 // pred_fallthru
      _
    // Predicated region
    $region42: #{tpu_custom_call.1} parent=1 // pred_check
      _
    $region43: #{tpu_custom_call.1} parent=1 // pred_check_branch
      %98 = sbr.rel (0) target = $region45
    $region44: #{tpu_custom_call.1} parent=1 // pred_region
      %s100 = ssub.s32 16384, 16384
      %101 = vsyncadd [#allocation12], %s100
      %s102 = sshll.u32 [#allocation11], 4
      %s103 = int_to_ptr.vmem [resolvable:$true] %s102
      %108 = dma.hbm_to_vmem [thread:$0]  %s10, 16384, %s103, [#allocation12], 256, 256, 16
    $region45: #{tpu_custom_call.1} parent=1 // pred_fallthru
      _
    // Predicated region
    $region46: #{tpu_custom_call.1} parent=1 // pred_check
      _
    $region47: #{tpu_custom_call.1} parent=1 // pred_check_branch
      %110 = sbr.rel (0) target = $region49
    $region48: #{tpu_custom_call.1} parent=1 // pred_region
      _
    $region49: #{tpu_custom_call.1} parent=1 // pred_fallthru
      _
    // Predicated region
    $region50: #{tpu_custom_call.1} parent=1 // pred_check
      _
    $region51: #{tpu_custom_call.1} parent=1 // pred_check_branch
      %112 = sbr.rel (0) target = $region53
    $region52: #{tpu_custom_call.1} parent=1 // pred_region
      _
    $region53: #{tpu_custom_call.1} parent=1 // pred_fallthru
      _
    // Predicated region
    $region54: #{tpu_custom_call.1} parent=1 // pred_check
      _
    $region55: #{tpu_custom_call.1} parent=1 // pred_check_branch
      %114 = sbr.rel (0) target = $region57
    $region56: #{tpu_custom_call.1} parent=1 // pred_region
      _
    $region57: #{tpu_custom_call.1} parent=1 // pred_fallthru
      _
    // Predicated region
    $region58: #{tpu_custom_call.1} parent=1 // pred_check
      _
    $region59: #{tpu_custom_call.1} parent=1 // pred_check_branch
      %116 = sbr.rel (0) target = $region61
    $region60: #{tpu_custom_call.1} parent=1 // pred_region
      %117 = dma.done [#allocation3], 512
    $region61: #{tpu_custom_call.1} parent=1 // pred_fallthru
      _
    // Predicated region
    $region62: #{tpu_custom_call.1} parent=1 // pred_check
      _
    $region63: #{tpu_custom_call.1} parent=1 // pred_check_branch
      %119 = sbr.rel (0) target = $region65
    $region64: #{tpu_custom_call.1} parent=1 // pred_region
      %120 = dma.done [#allocation6], 256
    $region65: #{tpu_custom_call.1} parent=1 // pred_fallthru
      _
    // Predicated region
    $region66: #{tpu_custom_call.1} parent=1 // pred_check
      _
    $region67: #{tpu_custom_call.1} parent=1 // pred_check_branch
      %122 = sbr.rel (0) target = $region69
    $region68: #{tpu_custom_call.1} parent=1 // pred_region
      %123 = dma.done [#allocation6], 24576
    $region69: #{tpu_custom_call.1} parent=1 // pred_fallthru
      _
    // Predicated region
    $region70: #{tpu_custom_call.1} parent=1 // pred_check
      _
    $region71: #{tpu_custom_call.1} parent=1 // pred_check_branch
      %125 = sbr.rel (0) target = $region73
    $region72: #{tpu_custom_call.1} parent=1 // pred_region
      %126 = dma.done [#allocation9], 8192
    $region73: #{tpu_custom_call.1} parent=1 // pred_fallthru
      _
    // Predicated region
    $region74: #{tpu_custom_call.1} parent=1 // pred_check
      _
    $region75: #{tpu_custom_call.1} parent=1 // pred_check_branch
      %128 = sbr.rel (0) target = $region77
    $region76: #{tpu_custom_call.1} parent=1 // pred_region
      %129 = dma.done [#allocation9], 16384
    $region77: #{tpu_custom_call.1} parent=1 // pred_fallthru
      _
    // Predicated region
    $region78: #{tpu_custom_call.1} parent=1 // pred_check
      _
    $region79: #{tpu_custom_call.1} parent=1 // pred_check_branch
      %131 = sbr.rel (0) target = $region81
    $region80: #{tpu_custom_call.1} parent=1 // pred_region
      %132 = dma.done [#allocation12], 16384
    $region81: #{tpu_custom_call.1} parent=1 // pred_fallthru
      _
    %v133 = vld [vmem:[#allocation2] sm:$0xf]
    %v134 = vld [vmem:[#allocation2 + $0x4] sm:$0xf]
    %v135 = vld [vmem:[#allocation2 + $0x8] sm:$0xf]
    %v136 = vld [vmem:[#allocation2 + $0xc] sm:$0xf]
    %v137 = vld [vmem:[#allocation2 + $0x10] sm:$0xf]
    %v138 = vld [vmem:[#allocation2 + $0x14] sm:$0xf]
    %v139 = vld [vmem:[#allocation2 + $0x18] sm:$0xf]
    %v140 = vld [vmem:[#allocation2 + $0x1c] sm:$0xf]
    %v149 = vcombine.low %v133, %v134
    %v150 = vcombine.low %v135, %v136
    %v152 = vunpack.c.l.s4 1983009808
    %v153 = vunpack.c.0.s8 %v152
    %v154 = vlaneseq
    %v155 = vshrl.u32 %v154, 7
    %v156 = vsub.s32 %v153, %v155
    %v157 = vrot.slane %v149, %v156
    %v159 = vunpack.c.l.s4 1983009808
    %v160 = vunpack.c.0.s8 %v159
    %v161 = vlaneseq
    %v162 = vshrl.u32 %v161, 7
    %v163 = vsub.s32 %v160, %v162
    %v164 = vrot.slane %v150, %v163
    %v165 = vcombine.low %v157, %v164
    %v166 = vcombine.high %v157, %v164
    %v167 = vcombine.low %v137, %v138
    %v168 = vcombine.low %v139, %v140
    %v170 = vunpack.c.l.s4 1983009808
    %v171 = vunpack.c.0.s8 %v170
    %v172 = vlaneseq
    %v173 = vshrl.u32 %v172, 7
    %v174 = vsub.s32 %v171, %v173
    %v175 = vrot.slane %v167, %v174
    %v177 = vunpack.c.l.s4 1983009808
    %v178 = vunpack.c.0.s8 %v177
    %v179 = vlaneseq
    %v180 = vshrl.u32 %v179, 7
    %v181 = vsub.s32 %v178, %v180
    %v182 = vrot.slane %v168, %v181
    %v183 = vcombine.low %v175, %v182
    %v184 = vcombine.high %v175, %v182
    %vm189 = vcmask 482304
    %v190 = vsel %vm189, %v166, 0.0
    %v191 = vsel %vm189, %v184, 0.0
    %v192 = vlaneseq
    %v193 = vand.u32 %v192, 127
    %v194 = vadd.s32 %v193, 128
    %vm195 = vcmp.lt.s32.totalorder %v193, 187
    %vm196 = vcmp.lt.s32.totalorder %v194, 187
    %v197 = vld [vmem:[#allocation7] sm:$0xff]
    %v198 = vld [vmem:[#allocation7 + $0x8] sm:$0xff]
    %v199 = vld [vmem:[#allocation7 + $0x10] sm:$0xff]
    %v200 = vld [vmem:[#allocation7 + $0x18] sm:$0xff]
    %v201 = vld [vmem:[#allocation7 + $0x20] sm:$0xff]
    %v202 = vld [vmem:[#allocation7 + $0x28] sm:$0xff]
    %v203 = vld [vmem:[#allocation7 + $0x30] sm:$0xff]
    %v204 = vld [vmem:[#allocation7 + $0x38] sm:$0xff]
    %v205 = vld [vmem:[#allocation7 + $0x40] sm:$0xff]
    %v206 = vld [vmem:[#allocation7 + $0x48] sm:$0xff]
    %v207 = vld [vmem:[#allocation7 + $0x50] sm:$0xff]
    %v208 = vld [vmem:[#allocation7 + $0x58] sm:$0xff]
    %v209 = vld [vmem:[#allocation7 + $0x60] sm:$0xff]
    %v210 = vld [vmem:[#allocation7 + $0x68] sm:$0xff]
    %v211 = vld [vmem:[#allocation7 + $0x70] sm:$0xff]
    %v212 = vld [vmem:[#allocation7 + $0x78] sm:$0xff]
    %v213 = vld [vmem:[#allocation7 + $0x80] sm:$0xff]
    %v214 = vld [vmem:[#allocation7 + $0x88] sm:$0xff]
    %v215 = vld [vmem:[#allocation7 + $0x90] sm:$0xff]
    %v216 = vld [vmem:[#allocation7 + $0x98] sm:$0xff]
    %v217 = vld [vmem:[#allocation7 + $0xa0] sm:$0xff]
    %v218 = vld [vmem:[#allocation7 + $0xa8] sm:$0xff]
    %v219 = vld [vmem:[#allocation7 + $0xb0] sm:$0xff]
    %v220 = vld [vmem:[#allocation7 + $0xb8] sm:$0xff]
    %v221 = vld [vmem:[#allocation7 + $0xc0] sm:$0xff]
    %v222 = vld [vmem:[#allocation7 + $0xc8] sm:$0xff]
    %v223 = vld [vmem:[#allocation7 + $0xd0] sm:$0xff]
    %v224 = vld [vmem:[#allocation7 + $0xd8] sm:$0xff]
    %v225 = vld [vmem:[#allocation7 + $0xe0] sm:$0xff]
    %v226 = vld [vmem:[#allocation7 + $0xe8] sm:$0xff]
    %v227 = vld [vmem:[#allocation7 + $0xf0] sm:$0xff]
    %v228 = vld [vmem:[#allocation7 + $0xf8] sm:$0xff]
    %v229 = vld [vmem:[#allocation7 + $0x100] sm:$0xff]
    %v230 = vld [vmem:[#allocation7 + $0x108] sm:$0xff]
    %v231 = vld [vmem:[#allocation7 + $0x110] sm:$0xff]
    %v232 = vld [vmem:[#allocation7 + $0x118] sm:$0xff]
    %v233 = vld [vmem:[#allocation7 + $0x120] sm:$0xff]
    %v234 = vld [vmem:[#allocation7 + $0x128] sm:$0xff]
    %v235 = vld [vmem:[#allocation7 + $0x130] sm:$0xff]
    %v236 = vld [vmem:[#allocation7 + $0x138] sm:$0xff]
    %v237 = vld [vmem:[#allocation7 + $0x140] sm:$0xff]
    %v238 = vld [vmem:[#allocation7 + $0x148] sm:$0xff]
    %v239 = vld [vmem:[#allocation7 + $0x150] sm:$0xff]
    %v240 = vld [vmem:[#allocation7 + $0x158] sm:$0xff]
    %v241 = vld [vmem:[#allocation7 + $0x160] sm:$0xff]
    %v242 = vld [vmem:[#allocation7 + $0x168] sm:$0xff]
    %v243 = vld [vmem:[#allocation7 + $0x170] sm:$0xff]
    %v244 = vld [vmem:[#allocation7 + $0x178] sm:$0xff]
    %v245 = vld [vmem:[#allocation7 + $0x180] sm:$0xff]
    %v246 = vld [vmem:[#allocation7 + $0x188] sm:$0xff]
    %v247 = vld [vmem:[#allocation7 + $0x190] sm:$0xff]
    %v248 = vld [vmem:[#allocation7 + $0x198] sm:$0xff]
    %v249 = vld [vmem:[#allocation7 + $0x1a0] sm:$0xff]
    %v250 = vld [vmem:[#allocation7 + $0x1a8] sm:$0xff]
    %v251 = vld [vmem:[#allocation7 + $0x1b0] sm:$0xff]
    %v252 = vld [vmem:[#allocation7 + $0x1b8] sm:$0xff]
    %v253 = vld [vmem:[#allocation7 + $0x1c0] sm:$0xff]
    %v254 = vld [vmem:[#allocation7 + $0x1c8] sm:$0xff]
    %v255 = vld [vmem:[#allocation7 + $0x1d0] sm:$0xff]
    %v256 = vld [vmem:[#allocation7 + $0x1d8] sm:$0xff]
    %v257 = vld [vmem:[#allocation7 + $0x1e0] sm:$0xff]
    %v258 = vld [vmem:[#allocation7 + $0x1e8] sm:$0xff]
    %v259 = vld [vmem:[#allocation7 + $0x1f0] sm:$0xff]
    %v260 = vld [vmem:[#allocation7 + $0x1f8] sm:$0xff]
    %v261 = vld [vmem:[#allocation7 + $0x200] sm:$0xff]
    %v262 = vld [vmem:[#allocation7 + $0x208] sm:$0xff]
    %v263 = vld [vmem:[#allocation7 + $0x210] sm:$0xff]
    %v264 = vld [vmem:[#allocation7 + $0x218] sm:$0xff]
    %v265 = vld [vmem:[#allocation7 + $0x220] sm:$0xff]
    %v266 = vld [vmem:[#allocation7 + $0x228] sm:$0xff]
    %v267 = vld [vmem:[#allocation7 + $0x230] sm:$0xff]
    %v268 = vld [vmem:[#allocation7 + $0x238] sm:$0xff]
    %v269 = vld [vmem:[#allocation7 + $0x240] sm:$0xff]
    %v270 = vld [vmem:[#allocation7 + $0x248] sm:$0xff]
    %v271 = vld [vmem:[#allocation7 + $0x250] sm:$0xff]
    %v272 = vld [vmem:[#allocation7 + $0x258] sm:$0xff]
    %v273 = vld [vmem:[#allocation7 + $0x260] sm:$0xff]
    %v274 = vld [vmem:[#allocation7 + $0x268] sm:$0xff]
    %v275 = vld [vmem:[#allocation7 + $0x270] sm:$0xff]
    %v276 = vld [vmem:[#allocation7 + $0x278] sm:$0xff]
    %v277 = vld [vmem:[#allocation7 + $0x280] sm:$0xff]
    %v278 = vld [vmem:[#allocation7 + $0x288] sm:$0xff]
    %v279 = vld [vmem:[#allocation7 + $0x290] sm:$0xff]
    %v280 = vld [vmem:[#allocation7 + $0x298] sm:$0xff]
    %v281 = vld [vmem:[#allocation7 + $0x2a0] sm:$0xff]
    %v282 = vld [vmem:[#allocation7 + $0x2a8] sm:$0xff]
    %v283 = vld [vmem:[#allocation7 + $0x2b0] sm:$0xff]
    %v284 = vld [vmem:[#allocation7 + $0x2b8] sm:$0xff]
    %v285 = vld [vmem:[#allocation7 + $0x2c0] sm:$0xff]
    %v286 = vld [vmem:[#allocation7 + $0x2c8] sm:$0xff]
    %v287 = vld [vmem:[#allocation7 + $0x2d0] sm:$0xff]
    %v288 = vld [vmem:[#allocation7 + $0x2d8] sm:$0xff]
    %v289 = vld [vmem:[#allocation7 + $0x2e0] sm:$0xff]
    %v290 = vld [vmem:[#allocation7 + $0x2e8] sm:$0xff]
    %v291 = vld [vmem:[#allocation7 + $0x2f0] sm:$0xff]
    %v292 = vld [vmem:[#allocation7 + $0x2f8] sm:$0xff]
    %v293 = vld [vmem:[#allocation7 + $0x300] sm:$0xff]
    %v294 = vld [vmem:[#allocation7 + $0x308] sm:$0xff]
    %v295 = vld [vmem:[#allocation7 + $0x310] sm:$0xff]
    %v296 = vld [vmem:[#allocation7 + $0x318] sm:$0xff]
    %v297 = vld [vmem:[#allocation7 + $0x320] sm:$0xff]
    %v298 = vld [vmem:[#allocation7 + $0x328] sm:$0xff]
    %v299 = vld [vmem:[#allocation7 + $0x330] sm:$0xff]
    %v300 = vld [vmem:[#allocation7 + $0x338] sm:$0xff]
    %v301 = vld [vmem:[#allocation7 + $0x340] sm:$0xff]
    %v302 = vld [vmem:[#allocation7 + $0x348] sm:$0xff]
    %v303 = vld [vmem:[#allocation7 + $0x350] sm:$0xff]
    %v304 = vld [vmem:[#allocation7 + $0x358] sm:$0xff]
    %v305 = vld [vmem:[#allocation7 + $0x360] sm:$0xff]
    %v306 = vld [vmem:[#allocation7 + $0x368] sm:$0xff]
    %v307 = vld [vmem:[#allocation7 + $0x370] sm:$0xff]
    %v308 = vld [vmem:[#allocation7 + $0x378] sm:$0xff]
    %v309 = vld [vmem:[#allocation7 + $0x380] sm:$0xff]
    %v310 = vld [vmem:[#allocation7 + $0x388] sm:$0xff]
    %v311 = vld [vmem:[#allocation7 + $0x390] sm:$0xff]
    %v312 = vld [vmem:[#allocation7 + $0x398] sm:$0xff]
    %v313 = vld [vmem:[#allocation7 + $0x3a0] sm:$0xff]
    %v314 = vld [vmem:[#allocation7 + $0x3a8] sm:$0xff]
    %v315 = vld [vmem:[#allocation7 + $0x3b0] sm:$0xff]
    %v316 = vld [vmem:[#allocation7 + $0x3b8] sm:$0xff]
    %v317 = vld [vmem:[#allocation7 + $0x3c0] sm:$0xff]
    %v318 = vld [vmem:[#allocation7 + $0x3c8] sm:$0xff]
    %v319 = vld [vmem:[#allocation7 + $0x3d0] sm:$0xff]
    %v320 = vld [vmem:[#allocation7 + $0x3d8] sm:$0xff]
    %v321 = vld [vmem:[#allocation7 + $0x3e0] sm:$0xff]
    %v322 = vld [vmem:[#allocation7 + $0x3e8] sm:$0xff]
    %v323 = vld [vmem:[#allocation7 + $0x3f0] sm:$0xff]
    %v324 = vld [vmem:[#allocation7 + $0x3f8] sm:$0xff]
    %v325 = vld [vmem:[#allocation7 + $0x400] sm:$0xff]
    %v326 = vld [vmem:[#allocation7 + $0x408] sm:$0xff]
    %v327 = vld [vmem:[#allocation7 + $0x410] sm:$0xff]
    %v328 = vld [vmem:[#allocation7 + $0x418] sm:$0xff]
    %v329 = vld [vmem:[#allocation7 + $0x420] sm:$0xff]
    %v330 = vld [vmem:[#allocation7 + $0x428] sm:$0xff]
    %v331 = vld [vmem:[#allocation7 + $0x430] sm:$0xff]
    %v332 = vld [vmem:[#allocation7 + $0x438] sm:$0xff]
    %v333 = vld [vmem:[#allocation7 + $0x440] sm:$0xff]
    %v334 = vld [vmem:[#allocation7 + $0x448] sm:$0xff]
    %v335 = vld [vmem:[#allocation7 + $0x450] sm:$0xff]
    %v336 = vld [vmem:[#allocation7 + $0x458] sm:$0xff]
    %v337 = vld [vmem:[#allocation7 + $0x460] sm:$0xff]
    %v338 = vld [vmem:[#allocation7 + $0x468] sm:$0xff]
    %v339 = vld [vmem:[#allocation7 + $0x470] sm:$0xff]
    %v340 = vld [vmem:[#allocation7 + $0x478] sm:$0xff]
    %v341 = vld [vmem:[#allocation7 + $0x480] sm:$0xff]
    %v342 = vld [vmem:[#allocation7 + $0x488] sm:$0xff]
    %v343 = vld [vmem:[#allocation7 + $0x490] sm:$0xff]
    %v344 = vld [vmem:[#allocation7 + $0x498] sm:$0xff]
    %v345 = vld [vmem:[#allocation7 + $0x4a0] sm:$0xff]
    %v346 = vld [vmem:[#allocation7 + $0x4a8] sm:$0xff]
    %v347 = vld [vmem:[#allocation7 + $0x4b0] sm:$0xff]
    %v348 = vld [vmem:[#allocation7 + $0x4b8] sm:$0xff]
    %v349 = vld [vmem:[#allocation7 + $0x4c0] sm:$0xff]
    %v350 = vld [vmem:[#allocation7 + $0x4c8] sm:$0xff]
    %v351 = vld [vmem:[#allocation7 + $0x4d0] sm:$0xff]
    %v352 = vld [vmem:[#allocation7 + $0x4d8] sm:$0xff]
    %v353 = vld [vmem:[#allocation7 + $0x4e0] sm:$0xff]
    %v354 = vld [vmem:[#allocation7 + $0x4e8] sm:$0xff]
    %v355 = vld [vmem:[#allocation7 + $0x4f0] sm:$0xff]
    %v356 = vld [vmem:[#allocation7 + $0x4f8] sm:$0xff]
    %v357 = vld [vmem:[#allocation7 + $0x500] sm:$0xff]
    %v358 = vld [vmem:[#allocation7 + $0x508] sm:$0xff]
    %v359 = vld [vmem:[#allocation7 + $0x510] sm:$0xff]
    %v360 = vld [vmem:[#allocation7 + $0x518] sm:$0xff]
    %v361 = vld [vmem:[#allocation7 + $0x520] sm:$0xff]
    %v362 = vld [vmem:[#allocation7 + $0x528] sm:$0xff]
    %v363 = vld [vmem:[#allocation7 + $0x530] sm:$0xff]
    %v364 = vld [vmem:[#allocation7 + $0x538] sm:$0xff]
    %v365 = vld [vmem:[#allocation7 + $0x540] sm:$0xff]
    %v366 = vld [vmem:[#allocation7 + $0x548] sm:$0xff]
    %v367 = vld [vmem:[#allocation7 + $0x550] sm:$0xff]
    %v368 = vld [vmem:[#allocation7 + $0x558] sm:$0xff]
    %v369 = vld [vmem:[#allocation7 + $0x560] sm:$0xff]
    %v370 = vld [vmem:[#allocation7 + $0x568] sm:$0xff]
    %v371 = vld [vmem:[#allocation7 + $0x570] sm:$0xff]
    %v372 = vld [vmem:[#allocation7 + $0x578] sm:$0xff]
    %v373 = vld [vmem:[#allocation7 + $0x580] sm:$0xff]
    %v374 = vld [vmem:[#allocation7 + $0x588] sm:$0xff]
    %v375 = vld [vmem:[#allocation7 + $0x590] sm:$0xff]
    %v376 = vld [vmem:[#allocation7 + $0x598] sm:$0xff]
    %v377 = vld [vmem:[#allocation7 + $0x5a0] sm:$0xff]
    %v378 = vld [vmem:[#allocation7 + $0x5a8] sm:$0xff]
    %v379 = vld [vmem:[#allocation7 + $0x5b0] sm:$0xff]
    %v380 = vld [vmem:[#allocation7 + $0x5b8] sm:$0xff]
    %v381 = vld [vmem:[#allocation7 + $0x5c0] sm:$0xff]
    %v382 = vld [vmem:[#allocation7 + $0x5c8] sm:$0xff]
    %v383 = vld [vmem:[#allocation7 + $0x5d0] sm:$0xff]
    %v384 = vld [vmem:[#allocation7 + $0x5d8] sm:$0xff]
    %v385 = vld [vmem:[#allocation7 + $0x5e0] sm:$0xff]
    %v386 = vld [vmem:[#allocation7 + $0x5e8] sm:$0xff]
    %v387 = vld [vmem:[#allocation7 + $0x5f0] sm:$0xff]
    %v388 = vld [vmem:[#allocation7 + $0x5f8] sm:$0xff]
    %v389 = vld [vmem:[%s3] sm:$0x3f]
    %v391 = vlaneseq
    %v392 = vshrl.u32 %v391, 7
    %v393 = vsub.s32 0, %v392
    %v394 = vrot.slane %v389, %v393
    %v395 = vlaneseq
    %v396 = vshrl.u32 %v395, 7
    %v397 = vsub.s32 1, %v396
    %v398 = vrot.slane %v389, %v397
    %v399 = vlaneseq
    %v400 = vshrl.u32 %v399, 7
    %v401 = vsub.s32 2, %v400
    %v402 = vrot.slane %v389, %v401
    %v403 = vlaneseq
    %v404 = vshrl.u32 %v403, 7
    %v405 = vsub.s32 3, %v404
    %v406 = vrot.slane %v389, %v405
    %v407 = vlaneseq
    %v408 = vshrl.u32 %v407, 7
    %v409 = vsub.s32 4, %v408
    %v410 = vrot.slane %v389, %v409
    %v411 = vlaneseq
    %v412 = vshrl.u32 %v411, 7
    %v413 = vsub.s32 5, %v412
    %v414 = vrot.slane %v389, %v413
    %421 = vmatprep.subr.mxu0 %v198
    %422 = vmatpush1.msra.mxu0 %v197
    %423 = vmatprep.subr.mxu0 %v204
    %424 = vmatpush1.msra.mxu0 %v203
    %425 = vmatprep.subr.mxu0 %v210
    %426 = vmatpush1.msra.mxu0 %v209
    %427 = vmatprep.subr.mxu0 %v216
    %428 = vmatpush1.msra.mxu0 %v215
    %429 = vmatprep.subr.mxu0 %v222
    %430 = vmatpush1.msra.mxu0 %v221
    %431 = vmatprep.subr.mxu0 %v228
    %432 = vmatpush1.msra.mxu0 %v227
    %433 = vmatprep.subr.mxu0 %v234
    %434 = vmatpush1.msra.mxu0 %v233
    %435 = vmatprep.subr.mxu0 %v240
    %436 = vmatpush1.msra.mxu0 %v239
    %437 = vmatprep.subr.mxu0 %v246
    %438 = vmatpush1.msra.mxu0 %v245
    %439 = vmatprep.subr.mxu0 %v252
    %440 = vmatpush1.msra.mxu0 %v251
    %441 = vmatprep.subr.mxu0 %v258
    %442 = vmatpush1.msra.mxu0 %v257
    %443 = vmatprep.subr.mxu0 %v264
    %444 = vmatpush1.msra.mxu0 %v263
    %445 = vmatprep.subr.mxu0 %v270
    %446 = vmatpush1.msra.mxu0 %v269
    %447 = vmatprep.subr.mxu0 %v276
    %448 = vmatpush1.msra.mxu0 %v275
    %449 = vmatprep.subr.mxu0 %v282
    %450 = vmatpush1.msra.mxu0 %v281
    %451 = vmatprep.subr.mxu0 %v288
    %452 = vmatpush1.msra.mxu0 %v287
    %453 = vmatprep.subr.mxu0 %v294
    %454 = vmatpush1.msra.mxu0 %v293
    %455 = vmatprep.subr.mxu0 %v300
    %456 = vmatpush1.msra.mxu0 %v299
    %457 = vmatprep.subr.mxu0 %v306
    %458 = vmatpush1.msra.mxu0 %v305
    %459 = vmatprep.subr.mxu0 %v312
    %460 = vmatpush1.msra.mxu0 %v311
    %461 = vmatprep.subr.mxu0 %v318
    %462 = vmatpush1.msra.mxu0 %v317
    %463 = vmatprep.subr.mxu0 %v324
    %464 = vmatpush1.msra.mxu0 %v323
    %465 = vmatprep.subr.mxu0 %v330
    %466 = vmatpush1.msra.mxu0 %v329
    %467 = vmatprep.subr.mxu0 %v336
    %468 = vmatpush1.msra.mxu0 %v335
    %469 = vmatprep.subr.mxu0 %v342
    %470 = vmatpush1.msra.mxu0 %v341
    %471 = vmatprep.subr.mxu0 %v348
    %472 = vmatpush1.msra.mxu0 %v347
    %473 = vmatprep.subr.mxu0 %v354
    %474 = vmatpush1.msra.mxu0 %v353
    %475 = vmatprep.subr.mxu0 %v360
    %476 = vmatpush1.msra.mxu0 %v359
    %477 = vmatprep.subr.mxu0 %v366
    %478 = vmatpush1.msra.mxu0 %v365
    %479 = vmatprep.subr.mxu0 %v372
    %480 = vmatpush1.msra.mxu0 %v371
    %481 = vmatprep.subr.mxu0 %v378
    %482 = vmatpush1.msra.mxu0 %v377
    %483 = vmatprep.subr.mxu0 %v384
    %484 = vmatpush1.msra.mxu0 %v383
    %485 = vmatprep.mubr.f32.mxu0 %v190
    %486 = vmatmul.mubr.f32.gmra.mrb[0].mxu0 %v165
    %v487 = vpop.f32.mrb[0].mxu0
    %v488 = vadd.f32 %v394, %v487
    %v489 = vpop.f32.mrb[0].mxu0
    %v490 = vadd.f32 %v398, %v489
    %491 = vmatprep.mubr.f32.mxu0 %v191
    %492 = vmatmul.mubr.f32.gmra.mrb[0].mxu0 %v183
    %v493 = vpop.f32.mrb[0].mxu0
    %v494 = vadd.f32 %v394, %v493
    %v495 = vpop.f32.mrb[0].mxu0
    %v496 = vadd.f32 %v398, %v495
    %497 = vdwg.mxu0
    %498 = vmatprep.subr.mxu0 %v200
    %499 = vmatpush1.msra.mxu0 %v199
    %500 = vmatprep.subr.mxu0 %v206
    %501 = vmatpush1.msra.mxu0 %v205
    %502 = vmatprep.subr.mxu0 %v212
    %503 = vmatpush1.msra.mxu0 %v211
    %504 = vmatprep.subr.mxu0 %v218
    %505 = vmatpush1.msra.mxu0 %v217
    %506 = vmatprep.subr.mxu0 %v224
    %507 = vmatpush1.msra.mxu0 %v223
    %508 = vmatprep.subr.mxu0 %v230
    %509 = vmatpush1.msra.mxu0 %v229
    %510 = vmatprep.subr.mxu0 %v236
    %511 = vmatpush1.msra.mxu0 %v235
    %512 = vmatprep.subr.mxu0 %v242
    %513 = vmatpush1.msra.mxu0 %v241
    %514 = vmatprep.subr.mxu0 %v248
    %515 = vmatpush1.msra.mxu0 %v247
    %516 = vmatprep.subr.mxu0 %v254
    %517 = vmatpush1.msra.mxu0 %v253
    %518 = vmatprep.subr.mxu0 %v260
    %519 = vmatpush1.msra.mxu0 %v259
    %520 = vmatprep.subr.mxu0 %v266
    %521 = vmatpush1.msra.mxu0 %v265
    %522 = vmatprep.subr.mxu0 %v272
    %523 = vmatpush1.msra.mxu0 %v271
    %524 = vmatprep.subr.mxu0 %v278
    %525 = vmatpush1.msra.mxu0 %v277
    %526 = vmatprep.subr.mxu0 %v284
    %527 = vmatpush1.msra.mxu0 %v283
    %528 = vmatprep.subr.mxu0 %v290
    %529 = vmatpush1.msra.mxu0 %v289
    %530 = vmatprep.subr.mxu0 %v296
    %531 = vmatpush1.msra.mxu0 %v295
    %532 = vmatprep.subr.mxu0 %v302
    %533 = vmatpush1.msra.mxu0 %v301
    %534 = vmatprep.subr.mxu0 %v308
    %535 = vmatpush1.msra.mxu0 %v307
    %536 = vmatprep.subr.mxu0 %v314
    %537 = vmatpush1.msra.mxu0 %v313
    %538 = vmatprep.subr.mxu0 %v320
    %539 = vmatpush1.msra.mxu0 %v319
    %540 = vmatprep.subr.mxu0 %v326
    %541 = vmatpush1.msra.mxu0 %v325
    %542 = vmatprep.subr.mxu0 %v332
    %543 = vmatpush1.msra.mxu0 %v331
    %544 = vmatprep.subr.mxu0 %v338
    %545 = vmatpush1.msra.mxu0 %v337
    %546 = vmatprep.subr.mxu0 %v344
    %547 = vmatpush1.msra.mxu0 %v343
    %548 = vmatprep.subr.mxu0 %v350
    %549 = vmatpush1.msra.mxu0 %v349
    %550 = vmatprep.subr.mxu0 %v356
    %551 = vmatpush1.msra.mxu0 %v355
    %552 = vmatprep.subr.mxu0 %v362
    %553 = vmatpush1.msra.mxu0 %v361
    %554 = vmatprep.subr.mxu0 %v368
    %555 = vmatpush1.msra.mxu0 %v367
    %556 = vmatprep.subr.mxu0 %v374
    %557 = vmatpush1.msra.mxu0 %v373
    %558 = vmatprep.subr.mxu0 %v380
    %559 = vmatpush1.msra.mxu0 %v379
    %560 = vmatprep.subr.mxu0 %v386
    %561 = vmatpush1.msra.mxu0 %v385
    %562 = vmatprep.mubr.f32.mxu0 %v190
    %563 = vmatmul.mubr.f32.gmra.mrb[0].mxu0 %v165
    %v564 = vpop.f32.mrb[0].mxu0
    %v565 = vadd.f32 %v402, %v564
    %v566 = vpop.f32.mrb[0].mxu0
    %v567 = vadd.f32 %v406, %v566
    %568 = vmatprep.mubr.f32.mxu0 %v191
    %569 = vmatmul.mubr.f32.gmra.mrb[0].mxu0 %v183
    %v570 = vpop.f32.mrb[0].mxu0
    %v571 = vadd.f32 %v402, %v570
    %v572 = vpop.f32.mrb[0].mxu0
    %v573 = vadd.f32 %v406, %v572
    %574 = vdwg.mxu0
    %575 = vmatprep.subr.mxu0 %v202
    %576 = vmatpush1.msra.mxu0 %v201
    %577 = vmatprep.subr.mxu0 %v208
    %578 = vmatpush1.msra.mxu0 %v207
    %579 = vmatprep.subr.mxu0 %v214
    %580 = vmatpush1.msra.mxu0 %v213
    %581 = vmatprep.subr.mxu0 %v220
    %582 = vmatpush1.msra.mxu0 %v219
    %583 = vmatprep.subr.mxu0 %v226
    %584 = vmatpush1.msra.mxu0 %v225
    %585 = vmatprep.subr.mxu0 %v232
    %586 = vmatpush1.msra.mxu0 %v231
    %587 = vmatprep.subr.mxu0 %v238
    %588 = vmatpush1.msra.mxu0 %v237
    %589 = vmatprep.subr.mxu0 %v244
    %590 = vmatpush1.msra.mxu0 %v243
    %591 = vmatprep.subr.mxu0 %v250
    %592 = vmatpush1.msra.mxu0 %v249
    %593 = vmatprep.subr.mxu0 %v256
    %594 = vmatpush1.msra.mxu0 %v255
    %595 = vmatprep.subr.mxu0 %v262
    %596 = vmatpush1.msra.mxu0 %v261
    %597 = vmatprep.subr.mxu0 %v268
    %598 = vmatpush1.msra.mxu0 %v267
    %599 = vmatprep.subr.mxu0 %v274
    %600 = vmatpush1.msra.mxu0 %v273
    %601 = vmatprep.subr.mxu0 %v280
    %602 = vmatpush1.msra.mxu0 %v279
    %603 = vmatprep.subr.mxu0 %v286
    %604 = vmatpush1.msra.mxu0 %v285
    %605 = vmatprep.subr.mxu0 %v292
    %606 = vmatpush1.msra.mxu0 %v291
    %607 = vmatprep.subr.mxu0 %v298
    %608 = vmatpush1.msra.mxu0 %v297
    %609 = vmatprep.subr.mxu0 %v304
    %610 = vmatpush1.msra.mxu0 %v303
    %611 = vmatprep.subr.mxu0 %v310
    %612 = vmatpush1.msra.mxu0 %v309
    %613 = vmatprep.subr.mxu0 %v316
    %614 = vmatpush1.msra.mxu0 %v315
    %615 = vmatprep.subr.mxu0 %v322
    %616 = vmatpush1.msra.mxu0 %v321
    %617 = vmatprep.subr.mxu0 %v328
    %618 = vmatpush1.msra.mxu0 %v327
    %619 = vmatprep.subr.mxu0 %v334
    %620 = vmatpush1.msra.mxu0 %v333
    %621 = vmatprep.subr.mxu0 %v340
    %622 = vmatpush1.msra.mxu0 %v339
    %623 = vmatprep.subr.mxu0 %v346
    %624 = vmatpush1.msra.mxu0 %v345
    %625 = vmatprep.subr.mxu0 %v352
    %626 = vmatpush1.msra.mxu0 %v351
    %627 = vmatprep.subr.mxu0 %v358
    %628 = vmatpush1.msra.mxu0 %v357
    %629 = vmatprep.subr.mxu0 %v364
    %630 = vmatpush1.msra.mxu0 %v363
    %631 = vmatprep.subr.mxu0 %v370
    %632 = vmatpush1.msra.mxu0 %v369
    %633 = vmatprep.subr.mxu0 %v376
    %634 = vmatpush1.msra.mxu0 %v375
    %635 = vmatprep.subr.mxu0 %v382
    %636 = vmatpush1.msra.mxu0 %v381
    %637 = vmatprep.subr.mxu0 %v388
    %638 = vmatpush1.msra.mxu0 %v387
    %639 = vmatprep.mubr.f32.mxu0 %v190
    %640 = vmatmul.mubr.f32.gmra.mrb[0].mxu0 %v165
    %v641 = vpop.f32.mrb[0].mxu0
    %v642 = vadd.f32 %v410, %v641
    %v643 = vpop.f32.mrb[0].mxu0
    %v644 = vadd.f32 %v414, %v643
    %645 = vmatprep.mubr.f32.mxu0 %v191
    %646 = vmatmul.mubr.f32.gmra.mrb[0].mxu0 %v183
    %v647 = vpop.f32.mrb[0].mxu0
    %v648 = vadd.f32 %v410, %v647
    %v649 = vpop.f32.mrb[0].mxu0
    %v650 = vadd.f32 %v414, %v649
    %651 = vdwg.mxu0
    %v652 = vld [vmem:[#allocation5] sm:$0xff]
    %v653 = vld [vmem:[#allocation5 + $0x8] sm:$0xff]
    %654 = vmatprep.subr.mxu0 %v567
    %655 = vmatpush1.xpose.msra.mxu0 %v565
    %656 = vmatprep.subr.mxu0 %v573
    %657 = vmatpush1.xpose.msra.mxu0 %v571
    %658 = vmatprep.subr.mxu0 0.0
    %659 = vmatpush1.xpose.msra.mxu0 0.0
    %660 = vmatprep.subr.mxu0 0.0
    %661 = vmatpush1.xpose.msra.mxu0 0.0
    %662 = vmatprep.subr.mxu0 0.0
    %663 = vmatpush1.xpose.msra.mxu0 0.0
    %664 = vmatprep.subr.mxu0 0.0
    %665 = vmatpush1.xpose.msra.mxu0 0.0
    %666 = vmatprep.subr.mxu0 0.0
    %667 = vmatpush1.xpose.msra.mxu0 0.0
    %668 = vmatprep.subr.mxu0 0.0
    %669 = vmatpush1.xpose.msra.mxu0 0.0
    %670 = vmatprep.subr.mxu0 0.0
    %671 = vmatpush1.xpose.msra.mxu0 0.0
    %672 = vmatprep.subr.mxu0 0.0
    %673 = vmatpush1.xpose.msra.mxu0 0.0
    %674 = vmatprep.subr.mxu0 0.0
    %675 = vmatpush1.xpose.msra.mxu0 0.0
    %676 = vmatprep.subr.mxu0 0.0
    %677 = vmatpush1.xpose.msra.mxu0 0.0
    %678 = vmatprep.subr.mxu0 0.0
    %679 = vmatpush1.xpose.msra.mxu0 0.0
    %680 = vmatprep.subr.mxu0 0.0
    %681 = vmatpush1.xpose.msra.mxu0 0.0
    %682 = vmatprep.subr.mxu0 0.0
    %683 = vmatpush1.xpose.msra.mxu0 0.0
    %684 = vmatprep.subr.mxu0 0.0
    %685 = vmatpush1.xpose.msra.mxu0 0.0
    %686 = vmatprep.subr.mxu0 0.0
    %687 = vmatpush1.xpose.msra.mxu0 0.0
    %688 = vmatprep.subr.mxu0 0.0
    %689 = vmatpush1.xpose.msra.mxu0 0.0
    %690 = vmatprep.subr.mxu0 0.0
    %691 = vmatpush1.xpose.msra.mxu0 0.0
    %692 = vmatprep.subr.mxu0 0.0
    %693 = vmatpush1.xpose.msra.mxu0 0.0
    %694 = vmatprep.subr.mxu0 0.0
    %695 = vmatpush1.xpose.msra.mxu0 0.0
    %696 = vmatprep.subr.mxu0 0.0
    %697 = vmatpush1.xpose.msra.mxu0 0.0
    %698 = vmatprep.subr.mxu0 0.0
    %699 = vmatpush1.xpose.msra.mxu0 0.0
    %700 = vmatprep.subr.mxu0 0.0
    %701 = vmatpush1.xpose.msra.mxu0 0.0
    %702 = vmatprep.subr.mxu0 0.0
    %703 = vmatpush1.xpose.msra.mxu0 0.0
    %704 = vmatprep.subr.mxu0 0.0
    %705 = vmatpush1.xpose.msra.mxu0 0.0
    %706 = vmatprep.subr.mxu0 0.0
    %707 = vmatpush1.xpose.msra.mxu0 0.0
    %708 = vmatprep.subr.mxu0 0.0
    %709 = vmatpush1.xpose.msra.mxu0 0.0
    %710 = vmatprep.subr.mxu0 0.0
    %711 = vmatpush1.xpose.msra.mxu0 0.0
    %712 = vmatprep.subr.mxu0 0.0
    %713 = vmatpush1.xpose.msra.mxu0 0.0
    %714 = vmatprep.subr.mxu0 0.0
    %715 = vmatpush1.xpose.msra.mxu0 0.0
    %716 = vmatprep.subr.mxu0 0.0
    %717 = vmatpush1.xpose.msra.mxu0 0.0
    %718 = vmatprep.mubr.f32.mxu0 %v490
    %719 = vmatmul.mubr.f32.gmra.mrb[0].mxu0 %v488
    %v720 = vpop.f32.mrb[0].mxu0
    %v721 = vadd.f32 %v652, %v720
    %v722 = vpop.f32.mrb[0].mxu0
    %723 = vmatprep.mubr.f32.mxu0 %v496
    %724 = vmatmul.mubr.f32.gmra.mrb[0].mxu0 %v494
    %v725 = vpop.f32.mrb[0].mxu0
    %v726 = vadd.f32 %v653, %v725
    %v727 = vpop.f32.mrb[0].mxu0
    %728 = vdwg.mxu0
    %vm729 = vcmask 130048
    %v730 = vsel %vm729, %v721, -inf
    %731 = vmax.xlane.f32.xlu0 %v730
    %v732 = vpop.xlane.xlu0 %731
    %v733 = vsel %vm729, %v726, -inf
    %734 = vmax.xlane.f32.xlu0 %v733
    %v735 = vpop.xlane.xlu0 %734
    %v736 = vsub.f32 %v721, %v732
    %v737 = vsub.f32 %v726, %v735
    %v738 = vmul.f32 %v736, 1.442695
    %v739 = vpow.pop %v738
    %v740 = vmul.f32 %v737, 1.442695
    %v741 = vpow.pop %v740
    %v742 = vsel %vm729, %v739, 0.0
    %743 = vadd.xlane.f32.xlu0 %v742
    %v744 = vpop.xlane.xlu0 %743
    %v745 = vsel %vm729, %v741, 0.0
    %746 = vadd.xlane.f32.xlu0 %v745
    %v747 = vpop.xlane.xlu0 %746
    %v748 = vrcp.pop %v744
    %v749 = vmul.f32 %v739, %v748
    %v750 = vrcp.pop %v747
    %v751 = vmul.f32 %v741, %v750
    %v753 = vsel %vm729, %v749, 0
    %v756 = vsel %vm729, %v751, 0
    %758 = vmatprep.subr.mxu0 %v644
    %759 = vmatpush1.msra.mxu0 %v642
    %760 = vmatprep.subr.mxu0 %v650
    %761 = vmatpush1.msra.mxu0 %v648
    %762 = vmatprep.subr.mxu0 0.0
    %763 = vmatpush1.msra.mxu0 0.0
    %764 = vmatprep.subr.mxu0 0.0
    %765 = vmatpush1.msra.mxu0 0.0
    %766 = vmatprep.subr.mxu0 0.0
    %767 = vmatpush1.msra.mxu0 0.0
    %768 = vmatprep.subr.mxu0 0.0
    %769 = vmatpush1.msra.mxu0 0.0
    %770 = vmatprep.subr.mxu0 0.0
    %771 = vmatpush1.msra.mxu0 0.0
    %772 = vmatprep.subr.mxu0 0.0
    %773 = vmatpush1.msra.mxu0 0.0
    %774 = vmatprep.subr.mxu0 0.0
    %775 = vmatpush1.msra.mxu0 0.0
    %776 = vmatprep.subr.mxu0 0.0
    %777 = vmatpush1.msra.mxu0 0.0
    %778 = vmatprep.subr.mxu0 0.0
    %779 = vmatpush1.msra.mxu0 0.0
    %780 = vmatprep.subr.mxu0 0.0
    %781 = vmatpush1.msra.mxu0 0.0
    %782 = vmatprep.subr.mxu0 0.0
    %783 = vmatpush1.msra.mxu0 0.0
    %784 = vmatprep.subr.mxu0 0.0
    %785 = vmatpush1.msra.mxu0 0.0
    %786 = vmatprep.subr.mxu0 0.0
    %787 = vmatpush1.msra.mxu0 0.0
    %788 = vmatprep.subr.mxu0 0.0
    %789 = vmatpush1.msra.mxu0 0.0
    %790 = vmatprep.subr.mxu0 0.0
    %791 = vmatpush1.msra.mxu0 0.0
    %792 = vmatprep.subr.mxu0 0.0
    %793 = vmatpush1.msra.mxu0 0.0
    %794 = vmatprep.subr.mxu0 0.0
    %795 = vmatpush1.msra.mxu0 0.0
    %796 = vmatprep.subr.mxu0 0.0
    %797 = vmatpush1.msra.mxu0 0.0
    %798 = vmatprep.subr.mxu0 0.0
    %799 = vmatpush1.msra.mxu0 0.0
    %800 = vmatprep.subr.mxu0 0.0
    %801 = vmatpush1.msra.mxu0 0.0
    %802 = vmatprep.subr.mxu0 0.0
    %803 = vmatpush1.msra.mxu0 0.0
    %804 = vmatprep.subr.mxu0 0.0
    %805 = vmatpush1.msra.mxu0 0.0
    %806 = vmatprep.subr.mxu0 0.0
    %807 = vmatpush1.msra.mxu0 0.0
    %808 = vmatprep.subr.mxu0 0.0
    %809 = vmatpush1.msra.mxu0 0.0
    %810 = vmatprep.subr.mxu0 0.0
    %811 = vmatpush1.msra.mxu0 0.0
    %812 = vmatprep.subr.mxu0 0.0
    %813 = vmatpush1.msra.mxu0 0.0
    %814 = vmatprep.subr.mxu0 0.0
    %815 = vmatpush1.msra.mxu0 0.0
    %816 = vmatprep.subr.mxu0 0.0
    %817 = vmatpush1.msra.mxu0 0.0
    %818 = vmatprep.subr.mxu0 0.0
    %819 = vmatpush1.msra.mxu0 0.0
    %820 = vmatprep.subr.mxu0 0.0
    %821 = vmatpush1.msra.mxu0 0.0
    %822 = vmatprep.mubr.f32.mxu0 0.0
    %823 = vmatmul.mubr.f32.gmra.mrb[0].mxu0 %v753
    %v824 = vpop.f32.mrb[0].mxu0
    %v825 = vadd.f32 0.0, %v824
    %v826 = vpop.f32.mrb[0].mxu0
    %v827 = vadd.f32 0.0, %v826
    %828 = vmatprep.mubr.f32.mxu0 0.0
    %829 = vmatmul.mubr.f32.gmra.mrb[0].mxu0 %v756
    %v830 = vpop.f32.mrb[0].mxu0
    %v831 = vadd.f32 0.0, %v830
    %v832 = vpop.f32.mrb[0].mxu0
    %v833 = vadd.f32 0.0, %v832
    %834 = vdwg.mxu0
    %v835 = vld [vmem:[#allocation8] sm:$0xff]
    %v836 = vld [vmem:[#allocation8 + $0x8] sm:$0xff]
    %v837 = vld [vmem:[#allocation8 + $0x10] sm:$0xff]
    %v838 = vld [vmem:[#allocation8 + $0x18] sm:$0xff]
    %v839 = vld [vmem:[#allocation8 + $0x20] sm:$0xff]
    %v840 = vld [vmem:[#allocation8 + $0x28] sm:$0xff]
    %v841 = vld [vmem:[#allocation8 + $0x30] sm:$0xff]
    %v842 = vld [vmem:[#allocation8 + $0x38] sm:$0xff]
    %v843 = vld [vmem:[#allocation8 + $0x40] sm:$0xff]
    %v844 = vld [vmem:[#allocation8 + $0x48] sm:$0xff]
    %v845 = vld [vmem:[#allocation8 + $0x50] sm:$0xff]
    %v846 = vld [vmem:[#allocation8 + $0x58] sm:$0xff]
    %v847 = vld [vmem:[#allocation8 + $0x60] sm:$0xff]
    %v848 = vld [vmem:[#allocation8 + $0x68] sm:$0xff]
    %v849 = vld [vmem:[#allocation8 + $0x70] sm:$0xff]
    %v850 = vld [vmem:[#allocation8 + $0x78] sm:$0xff]
    %v851 = vld [vmem:[#allocation8 + $0x80] sm:$0xff]
    %v852 = vld [vmem:[#allocation8 + $0x88] sm:$0xff]
    %v853 = vld [vmem:[#allocation8 + $0x90] sm:$0xff]
    %v854 = vld [vmem:[#allocation8 + $0x98] sm:$0xff]
    %v855 = vld [vmem:[#allocation8 + $0xa0] sm:$0xff]
    %v856 = vld [vmem:[#allocation8 + $0xa8] sm:$0xff]
    %v857 = vld [vmem:[#allocation8 + $0xb0] sm:$0xff]
    %v858 = vld [vmem:[#allocation8 + $0xb8] sm:$0xff]
    %v859 = vld [vmem:[#allocation8 + $0xc0] sm:$0xff]
    %v860 = vld [vmem:[#allocation8 + $0xc8] sm:$0xff]
    %v861 = vld [vmem:[#allocation8 + $0xd0] sm:$0xff]
    %v862 = vld [vmem:[#allocation8 + $0xd8] sm:$0xff]
    %v863 = vld [vmem:[#allocation8 + $0xe0] sm:$0xff]
    %v864 = vld [vmem:[#allocation8 + $0xe8] sm:$0xff]
    %v865 = vld [vmem:[#allocation8 + $0xf0] sm:$0xff]
    %v866 = vld [vmem:[#allocation8 + $0xf8] sm:$0xff]
    %v867 = vld [vmem:[#allocation8 + $0x100] sm:$0xff]
    %v868 = vld [vmem:[#allocation8 + $0x108] sm:$0xff]
    %v869 = vld [vmem:[#allocation8 + $0x110] sm:$0xff]
    %v870 = vld [vmem:[#allocation8 + $0x118] sm:$0xff]
    %v871 = vld [vmem:[#allocation8 + $0x120] sm:$0xff]
    %v872 = vld [vmem:[#allocation8 + $0x128] sm:$0xff]
    %v873 = vld [vmem:[#allocation8 + $0x130] sm:$0xff]
    %v874 = vld [vmem:[#allocation8 + $0x138] sm:$0xff]
    %v875 = vld [vmem:[#allocation8 + $0x140] sm:$0xff]
    %v876 = vld [vmem:[#allocation8 + $0x148] sm:$0xff]
    %v877 = vld [vmem:[#allocation8 + $0x150] sm:$0xff]
    %v878 = vld [vmem:[#allocation8 + $0x158] sm:$0xff]
    %v879 = vld [vmem:[#allocation8 + $0x160] sm:$0xff]
    %v880 = vld [vmem:[#allocation8 + $0x168] sm:$0xff]
    %v881 = vld [vmem:[#allocation8 + $0x170] sm:$0xff]
    %v882 = vld [vmem:[#allocation8 + $0x178] sm:$0xff]
    %v883 = vld [vmem:[#allocation8 + $0x180] sm:$0xff]
    %v884 = vld [vmem:[#allocation8 + $0x188] sm:$0xff]
    %v885 = vld [vmem:[#allocation8 + $0x190] sm:$0xff]
    %v886 = vld [vmem:[#allocation8 + $0x198] sm:$0xff]
    %v887 = vld [vmem:[#allocation8 + $0x1a0] sm:$0xff]
    %v888 = vld [vmem:[#allocation8 + $0x1a8] sm:$0xff]
    %v889 = vld [vmem:[#allocation8 + $0x1b0] sm:$0xff]
    %v890 = vld [vmem:[#allocation8 + $0x1b8] sm:$0xff]
    %v891 = vld [vmem:[#allocation8 + $0x1c0] sm:$0xff]
    %v892 = vld [vmem:[#allocation8 + $0x1c8] sm:$0xff]
    %v893 = vld [vmem:[#allocation8 + $0x1d0] sm:$0xff]
    %v894 = vld [vmem:[#allocation8 + $0x1d8] sm:$0xff]
    %v895 = vld [vmem:[#allocation8 + $0x1e0] sm:$0xff]
    %v896 = vld [vmem:[#allocation8 + $0x1e8] sm:$0xff]
    %v897 = vld [vmem:[#allocation8 + $0x1f0] sm:$0xff]
    %v898 = vld [vmem:[#allocation8 + $0x1f8] sm:$0xff]
    %v899 = vld [vmem:[%s5] sm:$0x3]
    %v901 = vlaneseq
    %v902 = vshrl.u32 %v901, 7
    %v903 = vsub.s32 0, %v902
    %v904 = vrot.slane %v899, %v903
    %v905 = vlaneseq
    %v906 = vshrl.u32 %v905, 7
    %v907 = vsub.s32 1, %v906
    %v908 = vrot.slane %v899, %v907
    %911 = vmatprep.subr.mxu0 %v836
    %912 = vmatpush1.msra.mxu0 %v835
    %913 = vmatprep.subr.mxu0 %v838
    %914 = vmatpush1.msra.mxu0 %v837
    %915 = vmatprep.subr.mxu0 %v840
    %916 = vmatpush1.msra.mxu0 %v839
    %917 = vmatprep.subr.mxu0 %v842
    %918 = vmatpush1.msra.mxu0 %v841
    %919 = vmatprep.subr.mxu0 %v844
    %920 = vmatpush1.msra.mxu0 %v843
    %921 = vmatprep.subr.mxu0 %v846
    %922 = vmatpush1.msra.mxu0 %v845
    %923 = vmatprep.subr.mxu0 %v848
    %924 = vmatpush1.msra.mxu0 %v847
    %925 = vmatprep.subr.mxu0 %v850
    %926 = vmatpush1.msra.mxu0 %v849
    %927 = vmatprep.subr.mxu0 %v852
    %928 = vmatpush1.msra.mxu0 %v851
    %929 = vmatprep.subr.mxu0 %v854
    %930 = vmatpush1.msra.mxu0 %v853
    %931 = vmatprep.subr.mxu0 %v856
    %932 = vmatpush1.msra.mxu0 %v855
    %933 = vmatprep.subr.mxu0 %v858
    %934 = vmatpush1.msra.mxu0 %v857
    %935 = vmatprep.subr.mxu0 %v860
    %936 = vmatpush1.msra.mxu0 %v859
    %937 = vmatprep.subr.mxu0 %v862
    %938 = vmatpush1.msra.mxu0 %v861
    %939 = vmatprep.subr.mxu0 %v864
    %940 = vmatpush1.msra.mxu0 %v863
    %941 = vmatprep.subr.mxu0 %v866
    %942 = vmatpush1.msra.mxu0 %v865
    %943 = vmatprep.subr.mxu0 %v868
    %944 = vmatpush1.msra.mxu0 %v867
    %945 = vmatprep.subr.mxu0 %v870
    %946 = vmatpush1.msra.mxu0 %v869
    %947 = vmatprep.subr.mxu0 %v872
    %948 = vmatpush1.msra.mxu0 %v871
    %949 = vmatprep.subr.mxu0 %v874
    %950 = vmatpush1.msra.mxu0 %v873
    %951 = vmatprep.subr.mxu0 %v876
    %952 = vmatpush1.msra.mxu0 %v875
    %953 = vmatprep.subr.mxu0 %v878
    %954 = vmatpush1.msra.mxu0 %v877
    %955 = vmatprep.subr.mxu0 %v880
    %956 = vmatpush1.msra.mxu0 %v879
    %957 = vmatprep.subr.mxu0 %v882
    %958 = vmatpush1.msra.mxu0 %v881
    %959 = vmatprep.subr.mxu0 %v884
    %960 = vmatpush1.msra.mxu0 %v883
    %961 = vmatprep.subr.mxu0 %v886
    %962 = vmatpush1.msra.mxu0 %v885
    %963 = vmatprep.subr.mxu0 %v888
    %964 = vmatpush1.msra.mxu0 %v887
    %965 = vmatprep.subr.mxu0 %v890
    %966 = vmatpush1.msra.mxu0 %v889
    %967 = vmatprep.subr.mxu0 %v892
    %968 = vmatpush1.msra.mxu0 %v891
    %969 = vmatprep.subr.mxu0 %v894
    %970 = vmatpush1.msra.mxu0 %v893
    %971 = vmatprep.subr.mxu0 %v896
    %972 = vmatpush1.msra.mxu0 %v895
    %973 = vmatprep.subr.mxu0 %v898
    %974 = vmatpush1.msra.mxu0 %v897
    %975 = vmatprep.mubr.f32.mxu0 %v827
    %976 = vmatmul.mubr.f32.gmra.mrb[0].mxu0 %v825
    %v977 = vpop.f32.mrb[0].mxu0
    %v978 = vadd.f32 %v904, %v977
    %v979 = vpop.f32.mrb[0].mxu0
    %v980 = vadd.f32 %v908, %v979
    %981 = vmatprep.mubr.f32.mxu0 %v833
    %982 = vmatmul.mubr.f32.gmra.mrb[0].mxu0 %v831
    %v983 = vpop.f32.mrb[0].mxu0
    %v984 = vadd.f32 %v904, %v983
    %v985 = vpop.f32.mrb[0].mxu0
    %v986 = vadd.f32 %v908, %v985
    %987 = vdwg.mxu0
    %v988 = vadd.f32 %v165, %v978
    %v989 = vadd.f32 %v190, %v980
    %v990 = vadd.f32 %v183, %v984
    %v991 = vadd.f32 %v191, %v986
    %v992 = vld [vmem:[%s6] sm:$0x3]
    %v993 = vld [vmem:[%s7] sm:$0x3]
    %v994 = vadd.f32 %v988, %v989
    %995 = vadd.xlane.f32.xlu0 %v994
    %v996 = vpop.xlane.xlu0 %995
    %v997 = vadd.f32 %v990, %v991
    %998 = vadd.xlane.f32.xlu0 %v997
    %v999 = vpop.xlane.xlu0 %998
    %v1000 = vmul.f32 %v996, 0.0053475937
    %v1001 = vmul.f32 %v999, 0.0053475937
    %v1002 = vsub.f32 %v988, %v1000
    %v1003 = vsub.f32 %v989, %v1000
    %v1004 = vsub.f32 %v990, %v1001
    %v1005 = vsub.f32 %v991, %v1001
    %v1006 = vsel %vm195, 1, 0
    %v1007 = vsel %vm196, 1, 0
    %vm1008 = vcmp.eq.s32.totalorder %v1006, 1
    %vm1009 = vcmp.eq.s32.totalorder %v1007, 1
    %v1010 = vsel %vm1008, %v1002, 0.0
    %v1011 = vsel %vm1009, %v1003, 0.0
    %v1012 = vsel %vm1008, %v1004, 0.0
    %v1013 = vsel %vm1009, %v1005, 0.0
    %v1014 = vmul.f32 %v1010, %v1010
    %v1015 = vmul.f32 %v1011, %v1011
    %v1016 = vmul.f32 %v1012, %v1012
    %v1017 = vmul.f32 %v1013, %v1013
    %v1018 = vadd.f32 %v1014, %v1015
    %1019 = vadd.xlane.f32.xlu0 %v1018
    %v1020 = vpop.xlane.xlu0 %1019
    %v1021 = vadd.f32 %v1016, %v1017
    %1022 = vadd.xlane.f32.xlu0 %v1021
    %v1023 = vpop.xlane.xlu0 %1022
    %v1024 = vmul.f32 %v1020, 0.0053475937
    %v1025 = vmul.f32 %v1023, 0.0053475937
    %v1026 = vadd.f32 %v1024, 1e-05
    %v1027 = vadd.f32 %v1025, 1e-05
    %v1028 = vrsqrt.pop %v1026
    %v1029 = vrsqrt.pop %v1027
    %v1030 = vmul.f32 %v1010, %v1028
    %v1031 = vmul.f32 %v1011, %v1028
    %v1032 = vmul.f32 %v1012, %v1029
    %v1033 = vmul.f32 %v1013, %v1029
    %v1035 = vlaneseq
    %v1036 = vshrl.u32 %v1035, 7
    %v1037 = vsub.s32 0, %v1036
    %v1038 = vrot.slane %v992, %v1037
    %v1039 = vlaneseq
    %v1040 = vshrl.u32 %v1039, 7
    %v1041 = vsub.s32 1, %v1040
    %v1042 = vrot.slane %v992, %v1041
    %v1045 = vmul.f32 %v1030, %v1038
    %v1046 = vmul.f32 %v1031, %v1042
    %v1047 = vmul.f32 %v1032, %v1038
    %v1048 = vmul.f32 %v1033, %v1042
    %v1050 = vlaneseq
    %v1051 = vshrl.u32 %v1050, 7
    %v1052 = vsub.s32 0, %v1051
    %v1053 = vrot.slane %v993, %v1052
    %v1054 = vlaneseq
    %v1055 = vshrl.u32 %v1054, 7
    %v1056 = vsub.s32 1, %v1055
    %v1057 = vrot.slane %v993, %v1056
    %v1060 = vadd.f32 %v1045, %v1053
    %v1061 = vadd.f32 %v1046, %v1057
    %v1062 = vadd.f32 %v1047, %v1053
    %v1063 = vadd.f32 %v1048, %v1057
    %v1064 = vld [vmem:[#allocation10] sm:$0xff]
    %v1065 = vld [vmem:[#allocation10 + $0x8] sm:$0xff]
    %v1066 = vld [vmem:[#allocation10 + $0x10] sm:$0xff]
    %v1067 = vld [vmem:[#allocation10 + $0x18] sm:$0xff]
    %v1068 = vld [vmem:[#allocation10 + $0x20] sm:$0xff]
    %v1069 = vld [vmem:[#allocation10 + $0x28] sm:$0xff]
    %v1070 = vld [vmem:[#allocation10 + $0x30] sm:$0xff]
    %v1071 = vld [vmem:[#allocation10 + $0x38] sm:$0xff]
    %v1072 = vld [vmem:[#allocation10 + $0x40] sm:$0xff]
    %v1073 = vld [vmem:[#allocation10 + $0x48] sm:$0xff]
    %v1074 = vld [vmem:[#allocation10 + $0x50] sm:$0xff]
    %v1075 = vld [vmem:[#allocation10 + $0x58] sm:$0xff]
    %v1076 = vld [vmem:[#allocation10 + $0x60] sm:$0xff]
    %v1077 = vld [vmem:[#allocation10 + $0x68] sm:$0xff]
    %v1078 = vld [vmem:[#allocation10 + $0x70] sm:$0xff]
    %v1079 = vld [vmem:[#allocation10 + $0x78] sm:$0xff]
    %v1080 = vld [vmem:[#allocation10 + $0x80] sm:$0xff]
    %v1081 = vld [vmem:[#allocation10 + $0x88] sm:$0xff]
    %v1082 = vld [vmem:[#allocation10 + $0x90] sm:$0xff]
    %v1083 = vld [vmem:[#allocation10 + $0x98] sm:$0xff]
    %v1084 = vld [vmem:[#allocation10 + $0xa0] sm:$0xff]
    %v1085 = vld [vmem:[#allocation10 + $0xa8] sm:$0xff]
    %v1086 = vld [vmem:[#allocation10 + $0xb0] sm:$0xff]
    %v1087 = vld [vmem:[#allocation10 + $0xb8] sm:$0xff]
    %v1088 = vld [vmem:[#allocation10 + $0xc0] sm:$0xff]
    %v1089 = vld [vmem:[#allocation10 + $0xc8] sm:$0xff]
    %v1090 = vld [vmem:[#allocation10 + $0xd0] sm:$0xff]
    %v1091 = vld [vmem:[#allocation10 + $0xd8] sm:$0xff]
    %v1092 = vld [vmem:[#allocation10 + $0xe0] sm:$0xff]
    %v1093 = vld [vmem:[#allocation10 + $0xe8] sm:$0xff]
    %v1094 = vld [vmem:[#allocation10 + $0xf0] sm:$0xff]
    %v1095 = vld [vmem:[#allocation10 + $0xf8] sm:$0xff]
    %v1096 = vld [vmem:[#allocation10 + $0x100] sm:$0xff]
    %v1097 = vld [vmem:[#allocation10 + $0x108] sm:$0xff]
    %v1098 = vld [vmem:[#allocation10 + $0x110] sm:$0xff]
    %v1099 = vld [vmem:[#allocation10 + $0x118] sm:$0xff]
    %v1100 = vld [vmem:[#allocation10 + $0x120] sm:$0xff]
    %v1101 = vld [vmem:[#allocation10 + $0x128] sm:$0xff]
    %v1102 = vld [vmem:[#allocation10 + $0x130] sm:$0xff]
    %v1103 = vld [vmem:[#allocation10 + $0x138] sm:$0xff]
    %v1104 = vld [vmem:[#allocation10 + $0x140] sm:$0xff]
    %v1105 = vld [vmem:[#allocation10 + $0x148] sm:$0xff]
    %v1106 = vld [vmem:[#allocation10 + $0x150] sm:$0xff]
    %v1107 = vld [vmem:[#allocation10 + $0x158] sm:$0xff]
    %v1108 = vld [vmem:[#allocation10 + $0x160] sm:$0xff]
    %v1109 = vld [vmem:[#allocation10 + $0x168] sm:$0xff]
    %v1110 = vld [vmem:[#allocation10 + $0x170] sm:$0xff]
    %v1111 = vld [vmem:[#allocation10 + $0x178] sm:$0xff]
    %v1112 = vld [vmem:[#allocation10 + $0x180] sm:$0xff]
    %v1113 = vld [vmem:[#allocation10 + $0x188] sm:$0xff]
    %v1114 = vld [vmem:[#allocation10 + $0x190] sm:$0xff]
    %v1115 = vld [vmem:[#allocation10 + $0x198] sm:$0xff]
    %v1116 = vld [vmem:[#allocation10 + $0x1a0] sm:$0xff]
    %v1117 = vld [vmem:[#allocation10 + $0x1a8] sm:$0xff]
    %v1118 = vld [vmem:[#allocation10 + $0x1b0] sm:$0xff]
    %v1119 = vld [vmem:[#allocation10 + $0x1b8] sm:$0xff]
    %v1120 = vld [vmem:[#allocation10 + $0x1c0] sm:$0xff]
    %v1121 = vld [vmem:[#allocation10 + $0x1c8] sm:$0xff]
    %v1122 = vld [vmem:[#allocation10 + $0x1d0] sm:$0xff]
    %v1123 = vld [vmem:[#allocation10 + $0x1d8] sm:$0xff]
    %v1124 = vld [vmem:[#allocation10 + $0x1e0] sm:$0xff]
    %v1125 = vld [vmem:[#allocation10 + $0x1e8] sm:$0xff]
    %v1126 = vld [vmem:[#allocation10 + $0x1f0] sm:$0xff]
    %v1127 = vld [vmem:[#allocation10 + $0x1f8] sm:$0xff]
    %v1128 = vld [vmem:[#allocation10 + $0x200] sm:$0xff]
    %v1129 = vld [vmem:[#allocation10 + $0x208] sm:$0xff]
    %v1130 = vld [vmem:[#allocation10 + $0x210] sm:$0xff]
    %v1131 = vld [vmem:[#allocation10 + $0x218] sm:$0xff]
    %v1132 = vld [vmem:[#allocation10 + $0x220] sm:$0xff]
    %v1133 = vld [vmem:[#allocation10 + $0x228] sm:$0xff]
    %v1134 = vld [vmem:[#allocation10 + $0x230] sm:$0xff]
    %v1135 = vld [vmem:[#allocation10 + $0x238] sm:$0xff]
    %v1136 = vld [vmem:[#allocation10 + $0x240] sm:$0xff]
    %v1137 = vld [vmem:[#allocation10 + $0x248] sm:$0xff]
    %v1138 = vld [vmem:[#allocation10 + $0x250] sm:$0xff]
    %v1139 = vld [vmem:[#allocation10 + $0x258] sm:$0xff]
    %v1140 = vld [vmem:[#allocation10 + $0x260] sm:$0xff]
    %v1141 = vld [vmem:[#allocation10 + $0x268] sm:$0xff]
    %v1142 = vld [vmem:[#allocation10 + $0x270] sm:$0xff]
    %v1143 = vld [vmem:[#allocation10 + $0x278] sm:$0xff]
    %v1144 = vld [vmem:[#allocation10 + $0x280] sm:$0xff]
    %v1145 = vld [vmem:[#allocation10 + $0x288] sm:$0xff]
    %v1146 = vld [vmem:[#allocation10 + $0x290] sm:$0xff]
    %v1147 = vld [vmem:[#allocation10 + $0x298] sm:$0xff]
    %v1148 = vld [vmem:[#allocation10 + $0x2a0] sm:$0xff]
    %v1149 = vld [vmem:[#allocation10 + $0x2a8] sm:$0xff]
    %v1150 = vld [vmem:[#allocation10 + $0x2b0] sm:$0xff]
    %v1151 = vld [vmem:[#allocation10 + $0x2b8] sm:$0xff]
    %v1152 = vld [vmem:[#allocation10 + $0x2c0] sm:$0xff]
    %v1153 = vld [vmem:[#allocation10 + $0x2c8] sm:$0xff]
    %v1154 = vld [vmem:[#allocation10 + $0x2d0] sm:$0xff]
    %v1155 = vld [vmem:[#allocation10 + $0x2d8] sm:$0xff]
    %v1156 = vld [vmem:[#allocation10 + $0x2e0] sm:$0xff]
    %v1157 = vld [vmem:[#allocation10 + $0x2e8] sm:$0xff]
    %v1158 = vld [vmem:[#allocation10 + $0x2f0] sm:$0xff]
    %v1159 = vld [vmem:[#allocation10 + $0x2f8] sm:$0xff]
    %v1160 = vld [vmem:[#allocation10 + $0x300] sm:$0xff]
    %v1161 = vld [vmem:[#allocation10 + $0x308] sm:$0xff]
    %v1162 = vld [vmem:[#allocation10 + $0x310] sm:$0xff]
    %v1163 = vld [vmem:[#allocation10 + $0x318] sm:$0xff]
    %v1164 = vld [vmem:[#allocation10 + $0x320] sm:$0xff]
    %v1165 = vld [vmem:[#allocation10 + $0x328] sm:$0xff]
    %v1166 = vld [vmem:[#allocation10 + $0x330] sm:$0xff]
    %v1167 = vld [vmem:[#allocation10 + $0x338] sm:$0xff]
    %v1168 = vld [vmem:[#allocation10 + $0x340] sm:$0xff]
    %v1169 = vld [vmem:[#allocation10 + $0x348] sm:$0xff]
    %v1170 = vld [vmem:[#allocation10 + $0x350] sm:$0xff]
    %v1171 = vld [vmem:[#allocation10 + $0x358] sm:$0xff]
    %v1172 = vld [vmem:[#allocation10 + $0x360] sm:$0xff]
    %v1173 = vld [vmem:[#allocation10 + $0x368] sm:$0xff]
    %v1174 = vld [vmem:[#allocation10 + $0x370] sm:$0xff]
    %v1175 = vld [vmem:[#allocation10 + $0x378] sm:$0xff]
    %v1176 = vld [vmem:[#allocation10 + $0x380] sm:$0xff]
    %v1177 = vld [vmem:[#allocation10 + $0x388] sm:$0xff]
    %v1178 = vld [vmem:[#allocation10 + $0x390] sm:$0xff]
    %v1179 = vld [vmem:[#allocation10 + $0x398] sm:$0xff]
    %v1180 = vld [vmem:[#allocation10 + $0x3a0] sm:$0xff]
    %v1181 = vld [vmem:[#allocation10 + $0x3a8] sm:$0xff]
    %v1182 = vld [vmem:[#allocation10 + $0x3b0] sm:$0xff]
    %v1183 = vld [vmem:[#allocation10 + $0x3b8] sm:$0xff]
    %v1184 = vld [vmem:[#allocation10 + $0x3c0] sm:$0xff]
    %v1185 = vld [vmem:[#allocation10 + $0x3c8] sm:$0xff]
    %v1186 = vld [vmem:[#allocation10 + $0x3d0] sm:$0xff]
    %v1187 = vld [vmem:[#allocation10 + $0x3d8] sm:$0xff]
    %v1188 = vld [vmem:[#allocation10 + $0x3e0] sm:$0xff]
    %v1189 = vld [vmem:[#allocation10 + $0x3e8] sm:$0xff]
    %v1190 = vld [vmem:[#allocation10 + $0x3f0] sm:$0xff]
    %v1191 = vld [vmem:[#allocation10 + $0x3f8] sm:$0xff]
    %v1192 = vld [vmem:[%s9] sm:$0xf]
    %v1194 = vlaneseq
    %v1195 = vshrl.u32 %v1194, 7
    %v1196 = vsub.s32 0, %v1195
    %v1197 = vrot.slane %v1192, %v1196
    %v1198 = vlaneseq
    %v1199 = vshrl.u32 %v1198, 7
    %v1200 = vsub.s32 1, %v1199
    %v1201 = vrot.slane %v1192, %v1200
    %v1202 = vlaneseq
    %v1203 = vshrl.u32 %v1202, 7
    %v1204 = vsub.s32 2, %v1203
    %v1205 = vrot.slane %v1192, %v1204
    %v1206 = vlaneseq
    %v1207 = vshrl.u32 %v1206, 7
    %v1208 = vsub.s32 3, %v1207
    %v1209 = vrot.slane %v1192, %v1208
    %1214 = vmatprep.subr.mxu0 %v1065
    %1215 = vmatpush1.msra.mxu0 %v1064
    %1216 = vmatprep.subr.mxu0 %v1069
    %1217 = vmatpush1.msra.mxu0 %v1068
    %1218 = vmatprep.subr.mxu0 %v1073
    %1219 = vmatpush1.msra.mxu0 %v1072
    %1220 = vmatprep.subr.mxu0 %v1077
    %1221 = vmatpush1.msra.mxu0 %v1076
    %1222 = vmatprep.subr.mxu0 %v1081
    %1223 = vmatpush1.msra.mxu0 %v1080
    %1224 = vmatprep.subr.mxu0 %v1085
    %1225 = vmatpush1.msra.mxu0 %v1084
    %1226 = vmatprep.subr.mxu0 %v1089
    %1227 = vmatpush1.msra.mxu0 %v1088
    %1228 = vmatprep.subr.mxu0 %v1093
    %1229 = vmatpush1.msra.mxu0 %v1092
    %1230 = vmatprep.subr.mxu0 %v1097
    %1231 = vmatpush1.msra.mxu0 %v1096
    %1232 = vmatprep.subr.mxu0 %v1101
    %1233 = vmatpush1.msra.mxu0 %v1100
    %1234 = vmatprep.subr.mxu0 %v1105
    %1235 = vmatpush1.msra.mxu0 %v1104
    %1236 = vmatprep.subr.mxu0 %v1109
    %1237 = vmatpush1.msra.mxu0 %v1108
    %1238 = vmatprep.subr.mxu0 %v1113
    %1239 = vmatpush1.msra.mxu0 %v1112
    %1240 = vmatprep.subr.mxu0 %v1117
    %1241 = vmatpush1.msra.mxu0 %v1116
    %1242 = vmatprep.subr.mxu0 %v1121
    %1243 = vmatpush1.msra.mxu0 %v1120
    %1244 = vmatprep.subr.mxu0 %v1125
    %1245 = vmatpush1.msra.mxu0 %v1124
    %1246 = vmatprep.subr.mxu0 %v1129
    %1247 = vmatpush1.msra.mxu0 %v1128
    %1248 = vmatprep.subr.mxu0 %v1133
    %1249 = vmatpush1.msra.mxu0 %v1132
    %1250 = vmatprep.subr.mxu0 %v1137
    %1251 = vmatpush1.msra.mxu0 %v1136
    %1252 = vmatprep.subr.mxu0 %v1141
    %1253 = vmatpush1.msra.mxu0 %v1140
    %1254 = vmatprep.subr.mxu0 %v1145
    %1255 = vmatpush1.msra.mxu0 %v1144
    %1256 = vmatprep.subr.mxu0 %v1149
    %1257 = vmatpush1.msra.mxu0 %v1148
    %1258 = vmatprep.subr.mxu0 %v1153
    %1259 = vmatpush1.msra.mxu0 %v1152
    %1260 = vmatprep.subr.mxu0 %v1157
    %1261 = vmatpush1.msra.mxu0 %v1156
    %1262 = vmatprep.subr.mxu0 %v1161
    %1263 = vmatpush1.msra.mxu0 %v1160
    %1264 = vmatprep.subr.mxu0 %v1165
    %1265 = vmatpush1.msra.mxu0 %v1164
    %1266 = vmatprep.subr.mxu0 %v1169
    %1267 = vmatpush1.msra.mxu0 %v1168
    %1268 = vmatprep.subr.mxu0 %v1173
    %1269 = vmatpush1.msra.mxu0 %v1172
    %1270 = vmatprep.subr.mxu0 %v1177
    %1271 = vmatpush1.msra.mxu0 %v1176
    %1272 = vmatprep.subr.mxu0 %v1181
    %1273 = vmatpush1.msra.mxu0 %v1180
    %1274 = vmatprep.subr.mxu0 %v1185
    %1275 = vmatpush1.msra.mxu0 %v1184
    %1276 = vmatprep.subr.mxu0 %v1189
    %1277 = vmatpush1.msra.mxu0 %v1188
    %1278 = vmatprep.mubr.f32.mxu0 %v1061
    %1279 = vmatmul.mubr.f32.gmra.mrb[0].mxu0 %v1060
    %v1280 = vpop.f32.mrb[0].mxu0
    %v1281 = vadd.f32 %v1197, %v1280
    %v1282 = vpop.f32.mrb[0].mxu0
    %v1283 = vadd.f32 %v1201, %v1282
    %1284 = vmatprep.mubr.f32.mxu0 %v1063
    %1285 = vmatmul.mubr.f32.gmra.mrb[0].mxu0 %v1062
    %v1286 = vpop.f32.mrb[0].mxu0
    %v1287 = vadd.f32 %v1197, %v1286
    %v1288 = vpop.f32.mrb[0].mxu0
    %v1289 = vadd.f32 %v1201, %v1288
    %1290 = vdwg.mxu0
    %1291 = vmatprep.subr.mxu0 %v1067
    %1292 = vmatpush1.msra.mxu0 %v1066
    %1293 = vmatprep.subr.mxu0 %v1071
    %1294 = vmatpush1.msra.mxu0 %v1070
    %1295 = vmatprep.subr.mxu0 %v1075
    %1296 = vmatpush1.msra.mxu0 %v1074
    %1297 = vmatprep.subr.mxu0 %v1079
    %1298 = vmatpush1.msra.mxu0 %v1078
    %1299 = vmatprep.subr.mxu0 %v1083
    %1300 = vmatpush1.msra.mxu0 %v1082
    %1301 = vmatprep.subr.mxu0 %v1087
    %1302 = vmatpush1.msra.mxu0 %v1086
    %1303 = vmatprep.subr.mxu0 %v1091
    %1304 = vmatpush1.msra.mxu0 %v1090
    %1305 = vmatprep.subr.mxu0 %v1095
    %1306 = vmatpush1.msra.mxu0 %v1094
    %1307 = vmatprep.subr.mxu0 %v1099
    %1308 = vmatpush1.msra.mxu0 %v1098
    %1309 = vmatprep.subr.mxu0 %v1103
    %1310 = vmatpush1.msra.mxu0 %v1102
    %1311 = vmatprep.subr.mxu0 %v1107
    %1312 = vmatpush1.msra.mxu0 %v1106
    %1313 = vmatprep.subr.mxu0 %v1111
    %1314 = vmatpush1.msra.mxu0 %v1110
    %1315 = vmatprep.subr.mxu0 %v1115
    %1316 = vmatpush1.msra.mxu0 %v1114
    %1317 = vmatprep.subr.mxu0 %v1119
    %1318 = vmatpush1.msra.mxu0 %v1118
    %1319 = vmatprep.subr.mxu0 %v1123
    %1320 = vmatpush1.msra.mxu0 %v1122
    %1321 = vmatprep.subr.mxu0 %v1127
    %1322 = vmatpush1.msra.mxu0 %v1126
    %1323 = vmatprep.subr.mxu0 %v1131
    %1324 = vmatpush1.msra.mxu0 %v1130
    %1325 = vmatprep.subr.mxu0 %v1135
    %1326 = vmatpush1.msra.mxu0 %v1134
    %1327 = vmatprep.subr.mxu0 %v1139
    %1328 = vmatpush1.msra.mxu0 %v1138
    %1329 = vmatprep.subr.mxu0 %v1143
    %1330 = vmatpush1.msra.mxu0 %v1142
    %1331 = vmatprep.subr.mxu0 %v1147
    %1332 = vmatpush1.msra.mxu0 %v1146
    %1333 = vmatprep.subr.mxu0 %v1151
    %1334 = vmatpush1.msra.mxu0 %v1150
    %1335 = vmatprep.subr.mxu0 %v1155
    %1336 = vmatpush1.msra.mxu0 %v1154
    %1337 = vmatprep.subr.mxu0 %v1159
    %1338 = vmatpush1.msra.mxu0 %v1158
    %1339 = vmatprep.subr.mxu0 %v1163
    %1340 = vmatpush1.msra.mxu0 %v1162
    %1341 = vmatprep.subr.mxu0 %v1167
    %1342 = vmatpush1.msra.mxu0 %v1166
    %1343 = vmatprep.subr.mxu0 %v1171
    %1344 = vmatpush1.msra.mxu0 %v1170
    %1345 = vmatprep.subr.mxu0 %v1175
    %1346 = vmatpush1.msra.mxu0 %v1174
    %1347 = vmatprep.subr.mxu0 %v1179
    %1348 = vmatpush1.msra.mxu0 %v1178
    %1349 = vmatprep.subr.mxu0 %v1183
    %1350 = vmatpush1.msra.mxu0 %v1182
    %1351 = vmatprep.subr.mxu0 %v1187
    %1352 = vmatpush1.msra.mxu0 %v1186
    %1353 = vmatprep.subr.mxu0 %v1191
    %1354 = vmatpush1.msra.mxu0 %v1190
    %1355 = vmatprep.mubr.f32.mxu0 %v1061
    %1356 = vmatmul.mubr.f32.gmra.mrb[0].mxu0 %v1060
    %v1357 = vpop.f32.mrb[0].mxu0
    %v1358 = vadd.f32 %v1205, %v1357
    %v1359 = vpop.f32.mrb[0].mxu0
    %v1360 = vadd.f32 %v1209, %v1359
    %1361 = vmatprep.mubr.f32.mxu0 %v1063
    %1362 = vmatmul.mubr.f32.gmra.mrb[0].mxu0 %v1062
    %v1363 = vpop.f32.mrb[0].mxu0
    %v1364 = vadd.f32 %v1205, %v1363
    %v1365 = vpop.f32.mrb[0].mxu0
    %v1366 = vadd.f32 %v1209, %v1365
    %1367 = vdwg.mxu0
    %v1368 = vmax.f32 %v1281, 0.0
    %v1369 = vmax.f32 %v1283, 0.0
    %v1370 = vmax.f32 %v1358, 0.0
    %v1371 = vmax.f32 %v1360, 0.0
    %v1372 = vmax.f32 %v1287, 0.0
    %v1373 = vmax.f32 %v1289, 0.0
    %v1374 = vmax.f32 %v1364, 0.0
    %v1375 = vmax.f32 %v1366, 0.0
    %v1376 = vld [vmem:[#allocation11] sm:$0xff]
    %v1377 = vld [vmem:[#allocation11 + $0x8] sm:$0xff]
    %v1378 = vld [vmem:[#allocation11 + $0x10] sm:$0xff]
    %v1379 = vld [vmem:[#allocation11 + $0x18] sm:$0xff]
    %v1380 = vld [vmem:[#allocation11 + $0x20] sm:$0xff]
    %v1381 = vld [vmem:[#allocation11 + $0x28] sm:$0xff]
    %v1382 = vld [vmem:[#allocation11 + $0x30] sm:$0xff]
    %v1383 = vld [vmem:[#allocation11 + $0x38] sm:$0xff]
    %v1384 = vld [vmem:[#allocation11 + $0x40] sm:$0xff]
    %v1385 = vld [vmem:[#allocation11 + $0x48] sm:$0xff]
    %v1386 = vld [vmem:[#allocation11 + $0x50] sm:$0xff]
    %v1387 = vld [vmem:[#allocation11 + $0x58] sm:$0xff]
    %v1388 = vld [vmem:[#allocation11 + $0x60] sm:$0xff]
    %v1389 = vld [vmem:[#allocation11 + $0x68] sm:$0xff]
    %v1390 = vld [vmem:[#allocation11 + $0x70] sm:$0xff]
    %v1391 = vld [vmem:[#allocation11 + $0x78] sm:$0xff]
    %v1392 = vld [vmem:[#allocation11 + $0x80] sm:$0xff]
    %v1393 = vld [vmem:[#allocation11 + $0x88] sm:$0xff]
    %v1394 = vld [vmem:[#allocation11 + $0x90] sm:$0xff]
    %v1395 = vld [vmem:[#allocation11 + $0x98] sm:$0xff]
    %v1396 = vld [vmem:[#allocation11 + $0xa0] sm:$0xff]
    %v1397 = vld [vmem:[#allocation11 + $0xa8] sm:$0xff]
    %v1398 = vld [vmem:[#allocation11 + $0xb0] sm:$0xff]
    %v1399 = vld [vmem:[#allocation11 + $0xb8] sm:$0xff]
    %v1400 = vld [vmem:[#allocation11 + $0xc0] sm:$0xff]
    %v1401 = vld [vmem:[#allocation11 + $0xc8] sm:$0xff]
    %v1402 = vld [vmem:[#allocation11 + $0xd0] sm:$0xff]
    %v1403 = vld [vmem:[#allocation11 + $0xd8] sm:$0xff]
    %v1404 = vld [vmem:[#allocation11 + $0xe0] sm:$0xff]
    %v1405 = vld [vmem:[#allocation11 + $0xe8] sm:$0xff]
    %v1406 = vld [vmem:[#allocation11 + $0xf0] sm:$0xff]
    %v1407 = vld [vmem:[#allocation11 + $0xf8] sm:$0xff]
    %v1408 = vld [vmem:[#allocation11 + $0x100] sm:$0xff]
    %v1409 = vld [vmem:[#allocation11 + $0x108] sm:$0xff]
    %v1410 = vld [vmem:[#allocation11 + $0x110] sm:$0xff]
    %v1411 = vld [vmem:[#allocation11 + $0x118] sm:$0xff]
    %v1412 = vld [vmem:[#allocation11 + $0x120] sm:$0xff]
    %v1413 = vld [vmem:[#allocation11 + $0x128] sm:$0xff]
    %v1414 = vld [vmem:[#allocation11 + $0x130] sm:$0xff]
    %v1415 = vld [vmem:[#allocation11 + $0x138] sm:$0xff]
    %v1416 = vld [vmem:[#allocation11 + $0x140] sm:$0xff]
    %v1417 = vld [vmem:[#allocation11 + $0x148] sm:$0xff]
    %v1418 = vld [vmem:[#allocation11 + $0x150] sm:$0xff]
    %v1419 = vld [vmem:[#allocation11 + $0x158] sm:$0xff]
    %v1420 = vld [vmem:[#allocation11 + $0x160] sm:$0xff]
    %v1421 = vld [vmem:[#allocation11 + $0x168] sm:$0xff]
    %v1422 = vld [vmem:[#allocation11 + $0x170] sm:$0xff]
    %v1423 = vld [vmem:[#allocation11 + $0x178] sm:$0xff]
    %v1424 = vld [vmem:[#allocation11 + $0x180] sm:$0xff]
    %v1425 = vld [vmem:[#allocation11 + $0x188] sm:$0xff]
    %v1426 = vld [vmem:[#allocation11 + $0x190] sm:$0xff]
    %v1427 = vld [vmem:[#allocation11 + $0x198] sm:$0xff]
    %v1428 = vld [vmem:[#allocation11 + $0x1a0] sm:$0xff]
    %v1429 = vld [vmem:[#allocation11 + $0x1a8] sm:$0xff]
    %v1430 = vld [vmem:[#allocation11 + $0x1b0] sm:$0xff]
    %v1431 = vld [vmem:[#allocation11 + $0x1b8] sm:$0xff]
    %v1432 = vld [vmem:[#allocation11 + $0x1c0] sm:$0xff]
    %v1433 = vld [vmem:[#allocation11 + $0x1c8] sm:$0xff]
    %v1434 = vld [vmem:[#allocation11 + $0x1d0] sm:$0xff]
    %v1435 = vld [vmem:[#allocation11 + $0x1d8] sm:$0xff]
    %v1436 = vld [vmem:[#allocation11 + $0x1e0] sm:$0xff]
    %v1437 = vld [vmem:[#allocation11 + $0x1e8] sm:$0xff]
    %v1438 = vld [vmem:[#allocation11 + $0x1f0] sm:$0xff]
    %v1439 = vld [vmem:[#allocation11 + $0x1f8] sm:$0xff]
    %v1440 = vld [vmem:[#allocation11 + $0x200] sm:$0xff]
    %v1441 = vld [vmem:[#allocation11 + $0x208] sm:$0xff]
    %v1442 = vld [vmem:[#allocation11 + $0x210] sm:$0xff]
    %v1443 = vld [vmem:[#allocation11 + $0x218] sm:$0xff]
    %v1444 = vld [vmem:[#allocation11 + $0x220] sm:$0xff]
    %v1445 = vld [vmem:[#allocation11 + $0x228] sm:$0xff]
    %v1446 = vld [vmem:[#allocation11 + $0x230] sm:$0xff]
    %v1447 = vld [vmem:[#allocation11 + $0x238] sm:$0xff]
    %v1448 = vld [vmem:[#allocation11 + $0x240] sm:$0xff]
    %v1449 = vld [vmem:[#allocation11 + $0x248] sm:$0xff]
    %v1450 = vld [vmem:[#allocation11 + $0x250] sm:$0xff]
    %v1451 = vld [vmem:[#allocation11 + $0x258] sm:$0xff]
    %v1452 = vld [vmem:[#allocation11 + $0x260] sm:$0xff]
    %v1453 = vld [vmem:[#allocation11 + $0x268] sm:$0xff]
    %v1454 = vld [vmem:[#allocation11 + $0x270] sm:$0xff]
    %v1455 = vld [vmem:[#allocation11 + $0x278] sm:$0xff]
    %v1456 = vld [vmem:[#allocation11 + $0x280] sm:$0xff]
    %v1457 = vld [vmem:[#allocation11 + $0x288] sm:$0xff]
    %v1458 = vld [vmem:[#allocation11 + $0x290] sm:$0xff]
    %v1459 = vld [vmem:[#allocation11 + $0x298] sm:$0xff]
    %v1460 = vld [vmem:[#allocation11 + $0x2a0] sm:$0xff]
    %v1461 = vld [vmem:[#allocation11 + $0x2a8] sm:$0xff]
    %v1462 = vld [vmem:[#allocation11 + $0x2b0] sm:$0xff]
    %v1463 = vld [vmem:[#allocation11 + $0x2b8] sm:$0xff]
    %v1464 = vld [vmem:[#allocation11 + $0x2c0] sm:$0xff]
    %v1465 = vld [vmem:[#allocation11 + $0x2c8] sm:$0xff]
    %v1466 = vld [vmem:[#allocation11 + $0x2d0] sm:$0xff]
    %v1467 = vld [vmem:[#allocation11 + $0x2d8] sm:$0xff]
    %v1468 = vld [vmem:[#allocation11 + $0x2e0] sm:$0xff]
    %v1469 = vld [vmem:[#allocation11 + $0x2e8] sm:$0xff]
    %v1470 = vld [vmem:[#allocation11 + $0x2f0] sm:$0xff]
    %v1471 = vld [vmem:[#allocation11 + $0x2f8] sm:$0xff]
    %v1472 = vld [vmem:[#allocation11 + $0x300] sm:$0xff]
    %v1473 = vld [vmem:[#allocation11 + $0x308] sm:$0xff]
    %v1474 = vld [vmem:[#allocation11 + $0x310] sm:$0xff]
    %v1475 = vld [vmem:[#allocation11 + $0x318] sm:$0xff]
    %v1476 = vld [vmem:[#allocation11 + $0x320] sm:$0xff]
    %v1477 = vld [vmem:[#allocation11 + $0x328] sm:$0xff]
    %v1478 = vld [vmem:[#allocation11 + $0x330] sm:$0xff]
    %v1479 = vld [vmem:[#allocation11 + $0x338] sm:$0xff]
    %v1480 = vld [vmem:[#allocation11 + $0x340] sm:$0xff]
    %v1481 = vld [vmem:[#allocation11 + $0x348] sm:$0xff]
    %v1482 = vld [vmem:[#allocation11 + $0x350] sm:$0xff]
    %v1483 = vld [vmem:[#allocation11 + $0x358] sm:$0xff]
    %v1484 = vld [vmem:[#allocation11 + $0x360] sm:$0xff]
    %v1485 = vld [vmem:[#allocation11 + $0x368] sm:$0xff]
    %v1486 = vld [vmem:[#allocation11 + $0x370] sm:$0xff]
    %v1487 = vld [vmem:[#allocation11 + $0x378] sm:$0xff]
    %v1488 = vld [vmem:[#allocation11 + $0x380] sm:$0xff]
    %v1489 = vld [vmem:[#allocation11 + $0x388] sm:$0xff]
    %v1490 = vld [vmem:[#allocation11 + $0x390] sm:$0xff]
    %v1491 = vld [vmem:[#allocation11 + $0x398] sm:$0xff]
    %v1492 = vld [vmem:[#allocation11 + $0x3a0] sm:$0xff]
    %v1493 = vld [vmem:[#allocation11 + $0x3a8] sm:$0xff]
    %v1494 = vld [vmem:[#allocation11 + $0x3b0] sm:$0xff]
    %v1495 = vld [vmem:[#allocation11 + $0x3b8] sm:$0xff]
    %v1496 = vld [vmem:[#allocation11 + $0x3c0] sm:$0xff]
    %v1497 = vld [vmem:[#allocation11 + $0x3c8] sm:$0xff]
    %v1498 = vld [vmem:[#allocation11 + $0x3d0] sm:$0xff]
    %v1499 = vld [vmem:[#allocation11 + $0x3d8] sm:$0xff]
    %v1500 = vld [vmem:[#allocation11 + $0x3e0] sm:$0xff]
    %v1501 = vld [vmem:[#allocation11 + $0x3e8] sm:$0xff]
    %v1502 = vld [vmem:[#allocation11 + $0x3f0] sm:$0xff]
    %v1503 = vld [vmem:[#allocation11 + $0x3f8] sm:$0xff]
    %v1504 = vld [vmem:[%s11] sm:$0x3]
    %v1506 = vlaneseq
    %v1507 = vshrl.u32 %v1506, 7
    %v1508 = vsub.s32 0, %v1507
    %v1509 = vrot.slane %v1504, %v1508
    %v1510 = vlaneseq
    %v1511 = vshrl.u32 %v1510, 7
    %v1512 = vsub.s32 1, %v1511
    %v1513 = vrot.slane %v1504, %v1512
    %1516 = vmatprep.subr.mxu0 %v1377
    %1517 = vmatpush1.msra.mxu0 %v1376
    %1518 = vmatprep.subr.mxu0 %v1379
    %1519 = vmatpush1.msra.mxu0 %v1378
    %1520 = vmatprep.subr.mxu0 %v1381
    %1521 = vmatpush1.msra.mxu0 %v1380
    %1522 = vmatprep.subr.mxu0 %v1383
    %1523 = vmatpush1.msra.mxu0 %v1382
    %1524 = vmatprep.subr.mxu0 %v1385
    %1525 = vmatpush1.msra.mxu0 %v1384
    %1526 = vmatprep.subr.mxu0 %v1387
    %1527 = vmatpush1.msra.mxu0 %v1386
    %1528 = vmatprep.subr.mxu0 %v1389
    %1529 = vmatpush1.msra.mxu0 %v1388
    %1530 = vmatprep.subr.mxu0 %v1391
    %1531 = vmatpush1.msra.mxu0 %v1390
    %1532 = vmatprep.subr.mxu0 %v1393
    %1533 = vmatpush1.msra.mxu0 %v1392
    %1534 = vmatprep.subr.mxu0 %v1395
    %1535 = vmatpush1.msra.mxu0 %v1394
    %1536 = vmatprep.subr.mxu0 %v1397
    %1537 = vmatpush1.msra.mxu0 %v1396
    %1538 = vmatprep.subr.mxu0 %v1399
    %1539 = vmatpush1.msra.mxu0 %v1398
    %1540 = vmatprep.subr.mxu0 %v1401
    %1541 = vmatpush1.msra.mxu0 %v1400
    %1542 = vmatprep.subr.mxu0 %v1403
    %1543 = vmatpush1.msra.mxu0 %v1402
    %1544 = vmatprep.subr.mxu0 %v1405
    %1545 = vmatpush1.msra.mxu0 %v1404
    %1546 = vmatprep.subr.mxu0 %v1407
    %1547 = vmatpush1.msra.mxu0 %v1406
    %1548 = vmatprep.subr.mxu0 %v1409
    %1549 = vmatpush1.msra.mxu0 %v1408
    %1550 = vmatprep.subr.mxu0 %v1411
    %1551 = vmatpush1.msra.mxu0 %v1410
    %1552 = vmatprep.subr.mxu0 %v1413
    %1553 = vmatpush1.msra.mxu0 %v1412
    %1554 = vmatprep.subr.mxu0 %v1415
    %1555 = vmatpush1.msra.mxu0 %v1414
    %1556 = vmatprep.subr.mxu0 %v1417
    %1557 = vmatpush1.msra.mxu0 %v1416
    %1558 = vmatprep.subr.mxu0 %v1419
    %1559 = vmatpush1.msra.mxu0 %v1418
    %1560 = vmatprep.subr.mxu0 %v1421
    %1561 = vmatpush1.msra.mxu0 %v1420
    %1562 = vmatprep.subr.mxu0 %v1423
    %1563 = vmatpush1.msra.mxu0 %v1422
    %1564 = vmatprep.subr.mxu0 %v1425
    %1565 = vmatpush1.msra.mxu0 %v1424
    %1566 = vmatprep.subr.mxu0 %v1427
    %1567 = vmatpush1.msra.mxu0 %v1426
    %1568 = vmatprep.subr.mxu0 %v1429
    %1569 = vmatpush1.msra.mxu0 %v1428
    %1570 = vmatprep.subr.mxu0 %v1431
    %1571 = vmatpush1.msra.mxu0 %v1430
    %1572 = vmatprep.subr.mxu0 %v1433
    %1573 = vmatpush1.msra.mxu0 %v1432
    %1574 = vmatprep.subr.mxu0 %v1435
    %1575 = vmatpush1.msra.mxu0 %v1434
    %1576 = vmatprep.subr.mxu0 %v1437
    %1577 = vmatpush1.msra.mxu0 %v1436
    %1578 = vmatprep.subr.mxu0 %v1439
    %1579 = vmatpush1.msra.mxu0 %v1438
    %1580 = vmatprep.mubr.f32.mxu0 %v1369
    %1581 = vmatmul.mubr.f32.gmra.mrb[0].mxu0 %v1368
    %v1582 = vpop.f32.mrb[0].mxu0
    %v1583 = vadd.f32 %v1509, %v1582
    %v1584 = vpop.f32.mrb[0].mxu0
    %v1585 = vadd.f32 %v1513, %v1584
    %1586 = vmatprep.mubr.f32.mxu0 %v1373
    %1587 = vmatmul.mubr.f32.gmra.mrb[0].mxu0 %v1372
    %v1588 = vpop.f32.mrb[0].mxu0
    %v1589 = vadd.f32 %v1509, %v1588
    %v1590 = vpop.f32.mrb[0].mxu0
    %v1591 = vadd.f32 %v1513, %v1590
    %1592 = vdwg.mxu0
    %1593 = vmatprep.subr.mxu0 %v1441
    %1594 = vmatpush1.msra.mxu0 %v1440
    %1595 = vmatprep.subr.mxu0 %v1443
    %1596 = vmatpush1.msra.mxu0 %v1442
    %1597 = vmatprep.subr.mxu0 %v1445
    %1598 = vmatpush1.msra.mxu0 %v1444
    %1599 = vmatprep.subr.mxu0 %v1447
    %1600 = vmatpush1.msra.mxu0 %v1446
    %1601 = vmatprep.subr.mxu0 %v1449
    %1602 = vmatpush1.msra.mxu0 %v1448
    %1603 = vmatprep.subr.mxu0 %v1451
    %1604 = vmatpush1.msra.mxu0 %v1450
    %1605 = vmatprep.subr.mxu0 %v1453
    %1606 = vmatpush1.msra.mxu0 %v1452
    %1607 = vmatprep.subr.mxu0 %v1455
    %1608 = vmatpush1.msra.mxu0 %v1454
    %1609 = vmatprep.subr.mxu0 %v1457
    %1610 = vmatpush1.msra.mxu0 %v1456
    %1611 = vmatprep.subr.mxu0 %v1459
    %1612 = vmatpush1.msra.mxu0 %v1458
    %1613 = vmatprep.subr.mxu0 %v1461
    %1614 = vmatpush1.msra.mxu0 %v1460
    %1615 = vmatprep.subr.mxu0 %v1463
    %1616 = vmatpush1.msra.mxu0 %v1462
    %1617 = vmatprep.subr.mxu0 %v1465
    %1618 = vmatpush1.msra.mxu0 %v1464
    %1619 = vmatprep.subr.mxu0 %v1467
    %1620 = vmatpush1.msra.mxu0 %v1466
    %1621 = vmatprep.subr.mxu0 %v1469
    %1622 = vmatpush1.msra.mxu0 %v1468
    %1623 = vmatprep.subr.mxu0 %v1471
    %1624 = vmatpush1.msra.mxu0 %v1470
    %1625 = vmatprep.subr.mxu0 %v1473
    %1626 = vmatpush1.msra.mxu0 %v1472
    %1627 = vmatprep.subr.mxu0 %v1475
    %1628 = vmatpush1.msra.mxu0 %v1474
    %1629 = vmatprep.subr.mxu0 %v1477
    %1630 = vmatpush1.msra.mxu0 %v1476
    %1631 = vmatprep.subr.mxu0 %v1479
    %1632 = vmatpush1.msra.mxu0 %v1478
    %1633 = vmatprep.subr.mxu0 %v1481
    %1634 = vmatpush1.msra.mxu0 %v1480
    %1635 = vmatprep.subr.mxu0 %v1483
    %1636 = vmatpush1.msra.mxu0 %v1482
    %1637 = vmatprep.subr.mxu0 %v1485
    %1638 = vmatpush1.msra.mxu0 %v1484
    %1639 = vmatprep.subr.mxu0 %v1487
    %1640 = vmatpush1.msra.mxu0 %v1486
    %1641 = vmatprep.subr.mxu0 %v1489
    %1642 = vmatpush1.msra.mxu0 %v1488
    %1643 = vmatprep.subr.mxu0 %v1491
    %1644 = vmatpush1.msra.mxu0 %v1490
    %1645 = vmatprep.subr.mxu0 %v1493
    %1646 = vmatpush1.msra.mxu0 %v1492
    %1647 = vmatprep.subr.mxu0 %v1495
    %1648 = vmatpush1.msra.mxu0 %v1494
    %1649 = vmatprep.subr.mxu0 %v1497
    %1650 = vmatpush1.msra.mxu0 %v1496
    %1651 = vmatprep.subr.mxu0 %v1499
    %1652 = vmatpush1.msra.mxu0 %v1498
    %1653 = vmatprep.subr.mxu0 %v1501
    %1654 = vmatpush1.msra.mxu0 %v1500
    %1655 = vmatprep.subr.mxu0 %v1503
    %1656 = vmatpush1.msra.mxu0 %v1502
    %1657 = vmatprep.mubr.f32.mxu0 %v1371
    %1658 = vmatmul.mubr.f32.gmra.mrb[0].mxu0 %v1370
    %v1659 = vpop.f32.mrb[0].mxu0
    %v1660 = vadd.f32 %v1583, %v1659
    %v1661 = vpop.f32.mrb[0].mxu0
    %v1662 = vadd.f32 %v1585, %v1661
    %1663 = vmatprep.mubr.f32.mxu0 %v1375
    %1664 = vmatmul.mubr.f32.gmra.mrb[0].mxu0 %v1374
    %v1665 = vpop.f32.mrb[0].mxu0
    %v1666 = vadd.f32 %v1589, %v1665
    %v1667 = vpop.f32.mrb[0].mxu0
    %v1668 = vadd.f32 %v1591, %v1667
    %1669 = vdwg.mxu0
    %v1670 = vadd.f32 %v1060, %v1660
    %v1671 = vadd.f32 %v1061, %v1662
    %v1672 = vadd.f32 %v1062, %v1666
    %v1673 = vadd.f32 %v1063, %v1668
    %v1674 = vld [vmem:[%s12] sm:$0x3]
    %v1675 = vld [vmem:[%s13] sm:$0x3]
    %v1676 = vadd.f32 %v1670, %v1671
    %1677 = vadd.xlane.f32.xlu0 %v1676
    %v1678 = vpop.xlane.xlu0 %1677
    %v1679 = vadd.f32 %v1672, %v1673
    %1680 = vadd.xlane.f32.xlu0 %v1679
    %v1681 = vpop.xlane.xlu0 %1680
    %v1682 = vmul.f32 %v1678, 0.0053475937
    %v1683 = vmul.f32 %v1681, 0.0053475937
    %v1684 = vsub.f32 %v1670, %v1682
    %v1685 = vsub.f32 %v1671, %v1682
    %v1686 = vsub.f32 %v1672, %v1683
    %v1687 = vsub.f32 %v1673, %v1683
    %v1688 = vsel %vm1008, %v1684, 0.0
    %v1689 = vsel %vm1009, %v1685, 0.0
    %v1690 = vsel %vm1008, %v1686, 0.0
    %v1691 = vsel %vm1009, %v1687, 0.0
    %v1692 = vmul.f32 %v1688, %v1688
    %v1693 = vmul.f32 %v1689, %v1689
    %v1694 = vmul.f32 %v1690, %v1690
    %v1695 = vmul.f32 %v1691, %v1691
    %v1696 = vadd.f32 %v1692, %v1693
    %1697 = vadd.xlane.f32.xlu0 %v1696
    %v1698 = vpop.xlane.xlu0 %1697
    %v1699 = vadd.f32 %v1694, %v1695
    %1700 = vadd.xlane.f32.xlu0 %v1699
    %v1701 = vpop.xlane.xlu0 %1700
    %v1702 = vmul.f32 %v1698, 0.0053475937
    %v1703 = vmul.f32 %v1701, 0.0053475937
    %v1704 = vadd.f32 %v1702, 1e-05
    %v1705 = vadd.f32 %v1703, 1e-05
    %v1706 = vrsqrt.pop %v1704
    %v1707 = vrsqrt.pop %v1705
    %v1708 = vmul.f32 %v1688, %v1706
    %v1709 = vmul.f32 %v1689, %v1706
    %v1710 = vmul.f32 %v1690, %v1707
    %v1711 = vmul.f32 %v1691, %v1707
    %v1713 = vlaneseq
    %v1714 = vshrl.u32 %v1713, 7
    %v1715 = vsub.s32 0, %v1714
    %v1716 = vrot.slane %v1674, %v1715
    %v1717 = vlaneseq
    %v1718 = vshrl.u32 %v1717, 7
    %v1719 = vsub.s32 1, %v1718
    %v1720 = vrot.slane %v1674, %v1719
    %v1723 = vmul.f32 %v1708, %v1716
    %v1724 = vmul.f32 %v1709, %v1720
    %v1725 = vmul.f32 %v1710, %v1716
    %v1726 = vmul.f32 %v1711, %v1720
    %v1728 = vlaneseq
    %v1729 = vshrl.u32 %v1728, 7
    %v1730 = vsub.s32 0, %v1729
    %v1731 = vrot.slane %v1675, %v1730
    %v1732 = vlaneseq
    %v1733 = vshrl.u32 %v1732, 7
    %v1734 = vsub.s32 1, %v1733
    %v1735 = vrot.slane %v1675, %v1734
    %v1738 = vadd.f32 %v1723, %v1731
    %v1739 = vadd.f32 %v1724, %v1735
    %v1740 = vadd.f32 %v1725, %v1731
    %v1741 = vadd.f32 %v1726, %v1735
    %v1746 = vcombine.low %v1738, %v1739
    %v1747 = vcombine.high %v1738, %v1739
    %v1749 = vunpack.c.l.s4 1983009808
    %v1750 = vunpack.c.0.s8 %v1749
    %v1751 = vlaneseq
    %v1752 = vshrl.u32 %v1751, 7
    %v1753 = vsub.s32 %v1750, %v1752
    %v1754 = vrot.slane %v1746, %v1753
    %v1756 = vunpack.c.l.s4 1983009808
    %v1757 = vunpack.c.0.s8 %v1756
    %v1758 = vlaneseq
    %v1759 = vshrl.u32 %v1758, 7
    %v1760 = vsub.s32 %v1757, %v1759
    %v1761 = vrot.slane %v1747, %v1760
    %v1762 = vcombine.high %v1754, %v1754
    %v1763 = vcombine.high %v1761, %v1761
    %v1764 = vcombine.low %v1740, %v1741
    %v1765 = vcombine.high %v1740, %v1741
    %v1767 = vunpack.c.l.s4 1983009808
    %v1768 = vunpack.c.0.s8 %v1767
    %v1769 = vlaneseq
    %v1770 = vshrl.u32 %v1769, 7
    %v1771 = vsub.s32 %v1768, %v1770
    %v1772 = vrot.slane %v1764, %v1771
    %v1774 = vunpack.c.l.s4 1983009808
    %v1775 = vunpack.c.0.s8 %v1774
    %v1776 = vlaneseq
    %v1777 = vshrl.u32 %v1776, 7
    %v1778 = vsub.s32 %v1775, %v1777
    %v1779 = vrot.slane %v1765, %v1778
    %v1780 = vcombine.high %v1772, %v1772
    %v1781 = vcombine.high %v1779, %v1779
    %1790 = vst [vmem:[#allocation13] sm:$0xf] %v1754
    %1791 = vst [vmem:[#allocation13 + $0x4] sm:$0xf] %v1762
    %1792 = vst [vmem:[#allocation13 + $0x8] sm:$0xf] %v1761
    %1793 = vst [vmem:[#allocation13 + $0xc] sm:$0xf] %v1763
    %1794 = vst [vmem:[#allocation13 + $0x10] sm:$0xf] %v1772
    %1795 = vst [vmem:[#allocation13 + $0x14] sm:$0xf] %v1780
    %1796 = vst [vmem:[#allocation13 + $0x18] sm:$0xf] %v1779
    %1797 = vst [vmem:[#allocation13 + $0x1c] sm:$0xf] %v1781
    %v1798 = vsel %vm729, %v749, 0.0
    %v1799 = vsel %vm729, %v751, 0.0
    %1800 = vst [vmem:[#allocation14] sm:$0xff] %v1798
    %1801 = vst [vmem:[#allocation14 + $0x8] sm:$0xff] %v1799
    // Predicated region
    $region82: #{tpu_custom_call.1} parent=1 // pred_check
      _
    $region83: #{tpu_custom_call.1} parent=1 // pred_check_branch
      %1803 = sbr.rel (0) target = $region85
    $region84: #{tpu_custom_call.1} parent=1 // pred_region
      %s1805 = ssub.s32 512, 512
      %1806 = vsyncadd [#allocation4], %s1805
      %s1807 = sshll.u32 [#allocation13], 4
      %s1808 = int_to_ptr.vmem [resolvable:$true] %s1807
      %1813 = dma.vmem_to_hbm [thread:$0]  %s1808, 512, %s14, [#allocation4], 64, 64, 4
    $region85: #{tpu_custom_call.1} parent=1 // pred_fallthru
      _
    // Predicated region
    $region86: #{tpu_custom_call.1} parent=1 // pred_check
      _
    $region87: #{tpu_custom_call.1} parent=1 // pred_check_branch
      %1815 = sbr.rel (0) target = $region89
    $region88: #{tpu_custom_call.1} parent=1 // pred_region
      %s1817 = ssub.s32 256, 256
      %1818 = vsyncadd [#allocation15], %s1817
      %s1819 = sshll.u32 [#allocation14], 4
      %s1820 = int_to_ptr.vmem [resolvable:$true] %s1819
      %1825 = dma.vmem_to_hbm [thread:$0]  %s1820, 256, %s15, [#allocation15], 128, 128, 8
    $region89: #{tpu_custom_call.1} parent=1 // pred_fallthru
      _
    // Predicated region
    $region90: #{tpu_custom_call.1} parent=1 // pred_check
      _
    $region91: #{tpu_custom_call.1} parent=1 // pred_check_branch
      %1827 = sbr.rel (0) target = $region93
    $region92: #{tpu_custom_call.1} parent=1 // pred_region
      %1828 = dma.done [#allocation4], 512
    $region93: #{tpu_custom_call.1} parent=1 // pred_fallthru
      _
    // Predicated region
    $region94: #{tpu_custom_call.1} parent=1 // pred_check
      _
    $region95: #{tpu_custom_call.1} parent=1 // pred_check_branch
      %1830 = sbr.rel (0) target = $region97
    $region96: #{tpu_custom_call.1} parent=1 // pred_region
      %1831 = dma.done [#allocation15], 256
    $region97: #{tpu_custom_call.1} parent=1 // pred_fallthru
      _
    %1832 = vsyncpa [#allocation3], 1
    %1833 = vsyncpa [#allocation6], 1
    %1834 = vsyncpa [#allocation9], 1
    %1835 = vsyncpa [#allocation12], 1
    %1836 = vsyncpa [#allocation4], 1
    %1837 = vsyncpa [#allocation15], 1

// kernel: tpu_custom_call.1
$region0: #{tpu_custom_call.1}
  #allocation0 [shape = 'u32[]', space=smem, size = 0x4, offset = 0x4, fixed_abs, tag = 'smem constant byte address 0x4 - core index']
  #allocation1 [shape = 'u32[144,128]{1,0:T(1,128)}', space=vmem, size = 0x12000, scoped, tag = 'internal scratch']
  %s0 = inlined_call_operand.hbm [shape: f32[8,2,187], index: 0, kind: input, shape index: {}]
  %s1 = inlined_call_operand.hbm [shape: f32[16,16], index: 1, kind: input, shape index: {}]
  %s2 = inlined_call_operand.hbm [shape: f32[256,768], index: 2, kind: input, shape index: {}]
  %s3 = inlined_call_operand.vmem [shape: f32[1,768], index: 3, kind: input, shape index: {}]
  %s4 = inlined_call_operand.hbm [shape: f32[256,256], index: 4, kind: input, shape index: {}]
  %s5 = inlined_call_operand.vmem [shape: f32[1,256], index: 5, kind: input, shape index: {}]
  %s6 = inlined_call_operand.vmem [shape: f32[1,256], index: 6, kind: input, shape index: {}]
  %s7 = inlined_call_operand.vmem [shape: f32[1,256], index: 7, kind: input, shape index: {}]
  %s8 = inlined_call_operand.hbm [shape: f32[256,512], index: 8, kind: input, shape index: {}]
  %s9 = inlined_call_operand.vmem [shape: f32[1,512], index: 9, kind: input, shape index: {}]
  %s10 = inlined_call_operand.hbm [shape: f32[512,256], index: 10, kind: input, shape index: {}]
  %s11 = inlined_call_operand.vmem [shape: f32[1,256], index: 11, kind: input, shape index: {}]
  %s12 = inlined_call_operand.vmem [shape: f32[1,256], index: 12, kind: input, shape index: {}]
  %s13 = inlined_call_operand.vmem [shape: f32[1,256], index: 13, kind: input, shape index: {}]
  %s14 = inlined_call_operand.hbm [shape: f32[8,2,256], index: 14, kind: output, shape index: {0}]
  %s15 = inlined_call_operand.hbm [shape: f32[16,128], index: 15, kind: output, shape index: {1}]
  %16 = xla_tuple %s14, %s15
  %s17 = sld [smem:[#allocation0]]
  $region98: #{tpu_custom_call.1} parent=0
    _
  %s19 = ssub.s32 1, %s17
  %s20 = scalar_select 0, %s19, %s17
  $region1: #{tpu_custom_call.1} parent=0
    #allocation2 [shape = 'u8[16384]{0}', space=vmem, size = 0x4000, scoped, tag = 'input window, operand 0, single buffered']
    #allocation3 [shape = 's32[1]{0}', space=sflag, size = 0x4, scoped, tag = 'scoped memory for tpu_custom_call.1']
    #allocation4 [shape = 's32[1]{0}', space=sflag, size = 0x4, scoped, tag = 'scoped memory for tpu_custom_call.1']
    #allocation5 [shape = 'u8[8192]{0}', space=vmem, size = 0x2000, scoped, tag = 'input window, operand 1, single buffered']
    #allocation6 [shape = 's32[1]{0}', space=sflag, size = 0x4, scoped, tag = 'scoped memory for tpu_custom_call.1']
    #allocation7 [shape = 'u8[786432]{0}', space=vmem, size = 0xc0000, scoped, tag = 'input window, operand 2, single buffered']
    #allocation8 [shape = 'u8[262144]{0}', space=vmem, size = 0x40000, scoped, tag = 'input window, operand 4, single buffered']
    #allocation9 [shape = 's32[1]{0}', space=sflag, size = 0x4, scoped, tag = 'scoped memory for tpu_custom_call.1']
    #allocation10 [shape = 'u8[524288]{0}', space=vmem, size = 0x80000, scoped, tag = 'input window, operand 8, single buffered']
    #allocation11 [shape = 'u8[524288]{0}', space=vmem, size = 0x80000, scoped, tag = 'input window, operand 10, single buffered']
    #allocation12 [shape = 's32[1]{0}', space=sflag, size = 0x4, scoped, tag = 'scoped memory for tpu_custom_call.1']
    #allocation13 [shape = 'u8[16384]{0}', space=vmem, size = 0x4000, scoped, tag = 'output window, operand 0, single buffered']
    #allocation14 [shape = 'u8[8192]{0}', space=vmem, size = 0x2000, scoped, tag = 'output window, operand 1, single buffered']
    #allocation15 [shape = 's32[1]{0}', space=sflag, size = 0x4, scoped, tag = 'scoped memory for tpu_custom_call.1']
    %21 = vsyncpa [#allocation3], 0
    %22 = vsyncpa [#allocation6], 0
    %23 = vsyncpa [#allocation9], 0
    %24 = vsyncpa [#allocation12], 0
    %25 = vsyncpa [#allocation4], 0
    %26 = vsyncpa [#allocation15], 0
    // Predicated region
    $region2: #{tpu_custom_call.1} parent=1 // pred_check
      _
    $region3: #{tpu_custom_call.1} parent=1 // pred_check_branch
      %28 = sbr.rel (0) target = $region5
    $region4: #{tpu_custom_call.1} parent=1 // pred_region
      %s30 = ssub.s32 512, 512
      %31 = vsyncadd [#allocation3], %s30
      %s32 = sshll.u32 [#allocation2], 4
      %s33 = int_to_ptr.vmem [resolvable:$true] %s32
      %38 = dma.hbm_to_vmem [thread:$0]  %s0, 512, %s33, [#allocation3], 64, 64, 4
    $region5: #{tpu_custom_call.1} parent=1 // pred_fallthru
      _
    // Predicated region
    $region6: #{tpu_custom_call.1} parent=1 // pred_check
      _
    $region7: #{tpu_custom_call.1} parent=1 // pred_check_branch
      %40 = sbr.rel (0) target = $region9
    $region8: #{tpu_custom_call.1} parent=1 // pred_region
      %s42 = ssub.s32 256, 256
      %43 = vsyncadd [#allocation6], %s42
      %s44 = sshll.u32 [#allocation5], 4
      %s45 = int_to_ptr.vmem [resolvable:$true] %s44
      %50 = dma.hbm_to_vmem [thread:$0]  %s1, 256, %s45, [#allocation6], 128, 128, 8
    $region9: #{tpu_custom_call.1} parent=1 // pred_fallthru
      _
    // Predicated region
    $region10: #{tpu_custom_call.1} parent=1 // pred_check
      _
    $region11: #{tpu_custom_call.1} parent=1 // pred_check_branch
      %52 = sbr.rel (0) target = $region13
    $region12: #{tpu_custom_call.1} parent=1 // pred_region
      %s54 = ssub.s32 24576, 24576
      %55 = vsyncadd [#allocation6], %s54
      %s56 = sshll.u32 [#allocation7], 4
      %s57 = int_to_ptr.vmem [resolvable:$true] %s56
      %62 = dma.hbm_to_vmem [thread:$0]  %s2, 24576, %s57, [#allocation6], 768, 768, 48
    $region13: #{tpu_custom_call.1} parent=1 // pred_fallthru
      _
    // Predicated region
    $region14: #{tpu_custom_call.1} parent=1 // pred_check
      _
    $region15: #{tpu_custom_call.1} parent=1 // pred_check_branch
      %64 = sbr.rel (0) target = $region17
    $region16: #{tpu_custom_call.1} parent=1 // pred_region
      _
    $region17: #{tpu_custom_call.1} parent=1 // pred_fallthru
      _
    // Predicated region
    $region18: #{tpu_custom_call.1} parent=1 // pred_check
      _
    $region19: #{tpu_custom_call.1} parent=1 // pred_check_branch
      %66 = sbr.rel (0) target = $region21
    $region20: #{tpu_custom_call.1} parent=1 // pred_region
      %s68 = ssub.s32 8192, 8192
      %69 = vsyncadd [#allocation9], %s68
      %s70 = sshll.u32 [#allocation8], 4
      %s71 = int_to_ptr.vmem [resolvable:$true] %s70
      %76 = dma.hbm_to_vmem [thread:$0]  %s4, 8192, %s71, [#allocation9], 256, 256, 16
    $region21: #{tpu_custom_call.1} parent=1 // pred_fallthru
      _
    // Predicated region
    $region22: #{tpu_custom_call.1} parent=1 // pred_check
      _
    $region23: #{tpu_custom_call.1} parent=1 // pred_check_branch
      %78 = sbr.rel (0) target = $region25
    $region24: #{tpu_custom_call.1} parent=1 // pred_region
      _
    $region25: #{tpu_custom_call.1} parent=1 // pred_fallthru
      _
    // Predicated region
    $region26: #{tpu_custom_call.1} parent=1 // pred_check
      _
    $region27: #{tpu_custom_call.1} parent=1 // pred_check_branch
      %80 = sbr.rel (0) target = $region29
    $region28: #{tpu_custom_call.1} parent=1 // pred_region
      _
    $region29: #{tpu_custom_call.1} parent=1 // pred_fallthru
      _
    // Predicated region
    $region30: #{tpu_custom_call.1} parent=1 // pred_check
      _
    $region31: #{tpu_custom_call.1} parent=1 // pred_check_branch
      %82 = sbr.rel (0) target = $region33
    $region32: #{tpu_custom_call.1} parent=1 // pred_region
      _
    $region33: #{tpu_custom_call.1} parent=1 // pred_fallthru
      _
    // Predicated region
    $region34: #{tpu_custom_call.1} parent=1 // pred_check
      _
    $region35: #{tpu_custom_call.1} parent=1 // pred_check_branch
      %84 = sbr.rel (0) target = $region37
    $region36: #{tpu_custom_call.1} parent=1 // pred_region
      %s86 = ssub.s32 16384, 16384
      %87 = vsyncadd [#allocation9], %s86
      %s88 = sshll.u32 [#allocation10], 4
      %s89 = int_to_ptr.vmem [resolvable:$true] %s88
      %94 = dma.hbm_to_vmem [thread:$0]  %s8, 16384, %s89, [#allocation9], 512, 512, 32
    $region37: #{tpu_custom_call.1} parent=1 // pred_fallthru
      _
    // Predicated region
    $region38: #{tpu_custom_call.1} parent=1 // pred_check
      _
    $region39: #{tpu_custom_call.1} parent=1 // pred_check_branch
      %96 = sbr.rel (0) target = $region41
    $region40: #{tpu_custom_call.1} parent=1 // pred_region
      _
    $region41: #{tpu_custom_call.1} parent=1 // pred_fallthru
      _
    // Predicated region
    $region42: #{tpu_custom_call.1} parent=1 // pred_check
      _
    $region43: #{tpu_custom_call.1} parent=1 // pred_check_branch
      %98 = sbr.rel (0) target = $region45
    $region44: #{tpu_custom_call.1} parent=1 // pred_region
      %s100 = ssub.s32 16384, 16384
      %101 = vsyncadd [#allocation12], %s100
      %s102 = sshll.u32 [#allocation11], 4
      %s103 = int_to_ptr.vmem [resolvable:$true] %s102
      %108 = dma.hbm_to_vmem [thread:$0]  %s10, 16384, %s103, [#allocation12], 256, 256, 16
    $region45: #{tpu_custom_call.1} parent=1 // pred_fallthru
      _
    // Predicated region
    $region46: #{tpu_custom_call.1} parent=1 // pred_check
      _
    $region47: #{tpu_custom_call.1} parent=1 // pred_check_branch
      %110 = sbr.rel (0) target = $region49
    $region48: #{tpu_custom_call.1} parent=1 // pred_region
      _
    $region49: #{tpu_custom_call.1} parent=1 // pred_fallthru
      _
    // Predicated region
    $region50: #{tpu_custom_call.1} parent=1 // pred_check
      _
    $region51: #{tpu_custom_call.1} parent=1 // pred_check_branch
      %112 = sbr.rel (0) target = $region53
    $region52: #{tpu_custom_call.1} parent=1 // pred_region
      _
    $region53: #{tpu_custom_call.1} parent=1 // pred_fallthru
      _
    // Predicated region
    $region54: #{tpu_custom_call.1} parent=1 // pred_check
      _
    $region55: #{tpu_custom_call.1} parent=1 // pred_check_branch
      %114 = sbr.rel (0) target = $region57
    $region56: #{tpu_custom_call.1} parent=1 // pred_region
      _
    $region57: #{tpu_custom_call.1} parent=1 // pred_fallthru
      _
    // Predicated region
    $region58: #{tpu_custom_call.1} parent=1 // pred_check
      _
    $region59: #{tpu_custom_call.1} parent=1 // pred_check_branch
      %116 = sbr.rel (0) target = $region61
    $region60: #{tpu_custom_call.1} parent=1 // pred_region
      %117 = dma.done [#allocation3], 512
    $region61: #{tpu_custom_call.1} parent=1 // pred_fallthru
      _
    // Predicated region
    $region62: #{tpu_custom_call.1} parent=1 // pred_check
      _
    $region63: #{tpu_custom_call.1} parent=1 // pred_check_branch
      %119 = sbr.rel (0) target = $region65
    $region64: #{tpu_custom_call.1} parent=1 // pred_region
      %120 = dma.done [#allocation6], 256
    $region65: #{tpu_custom_call.1} parent=1 // pred_fallthru
      _
    // Predicated region
    $region66: #{tpu_custom_call.1} parent=1 // pred_check
      _
    $region67: #{tpu_custom_call.1} parent=1 // pred_check_branch
      %122 = sbr.rel (0) target = $region69
    $region68: #{tpu_custom_call.1} parent=1 // pred_region
      %123 = dma.done [#allocation6], 24576
    $region69: #{tpu_custom_call.1} parent=1 // pred_fallthru
      _
    // Predicated region
    $region70: #{tpu_custom_call.1} parent=1 // pred_check
      _
    $region71: #{tpu_custom_call.1} parent=1 // pred_check_branch
      %125 = sbr.rel (0) target = $region73
    $region72: #{tpu_custom_call.1} parent=1 // pred_region
      %126 = dma.done [#allocation9], 8192
    $region73: #{tpu_custom_call.1} parent=1 // pred_fallthru
      _
    // Predicated region
    $region74: #{tpu_custom_call.1} parent=1 // pred_check
      _
    $region75: #{tpu_custom_call.1} parent=1 // pred_check_branch
      %128 = sbr.rel (0) target = $region77
    $region76: #{tpu_custom_call.1} parent=1 // pred_region
      %129 = dma.done [#allocation9], 16384
    $region77: #{tpu_custom_call.1} parent=1 // pred_fallthru
      _
    // Predicated region
    $region78: #{tpu_custom_call.1} parent=1 // pred_check
      _
    $region79: #{tpu_custom_call.1} parent=1 // pred_check_branch
      %131 = sbr.rel (0) target = $region81
    $region80: #{tpu_custom_call.1} parent=1 // pred_region
      %132 = dma.done [#allocation12], 16384
    $region81: #{tpu_custom_call.1} parent=1 // pred_fallthru
      _
    %v133 = vld [vmem:[#allocation2] sm:$0xf]
    %v134 = vld [vmem:[#allocation2 + $0x4] sm:$0xf]
    %v135 = vld [vmem:[#allocation2 + $0x8] sm:$0xf]
    %v136 = vld [vmem:[#allocation2 + $0xc] sm:$0xf]
    %v137 = vld [vmem:[#allocation2 + $0x10] sm:$0xf]
    %v138 = vld [vmem:[#allocation2 + $0x14] sm:$0xf]
    %v139 = vld [vmem:[#allocation2 + $0x18] sm:$0xf]
    %v140 = vld [vmem:[#allocation2 + $0x1c] sm:$0xf]
    %v149 = vcombine.low %v133, %v134
    %v150 = vcombine.low %v135, %v136
    %v152 = vunpack.c.l.s4 1983009808
    %v153 = vunpack.c.0.s8 %v152
    %v154 = vlaneseq
    %v155 = vshrl.u32 %v154, 7
    %v156 = vsub.s32 %v153, %v155
    %v157 = vrot.slane %v149, %v156
    %v159 = vunpack.c.l.s4 1983009808
    %v160 = vunpack.c.0.s8 %v159
    %v161 = vlaneseq
    %v162 = vshrl.u32 %v161, 7
    %v163 = vsub.s32 %v160, %v162
    %v164 = vrot.slane %v150, %v163
    %v165 = vcombine.low %v157, %v164
    %v166 = vcombine.high %v157, %v164
    %v167 = vcombine.low %v137, %v138
    %v168 = vcombine.low %v139, %v140
    %v170 = vunpack.c.l.s4 1983009808
    %v171 = vunpack.c.0.s8 %v170
    %v172 = vlaneseq
    %v173 = vshrl.u32 %v172, 7
    %v174 = vsub.s32 %v171, %v173
    %v175 = vrot.slane %v167, %v174
    %v177 = vunpack.c.l.s4 1983009808
    %v178 = vunpack.c.0.s8 %v177
    %v179 = vlaneseq
    %v180 = vshrl.u32 %v179, 7
    %v181 = vsub.s32 %v178, %v180
    %v182 = vrot.slane %v168, %v181
    %v183 = vcombine.low %v175, %v182
    %v184 = vcombine.high %v175, %v182
    %vm189 = vcmask 482304
    %v190 = vsel %vm189, %v166, 0.0
    %v191 = vsel %vm189, %v184, 0.0
    %v192 = vlaneseq
    %v193 = vand.u32 %v192, 127
    %v194 = vadd.s32 %v193, 128
    %vm195 = vcmp.lt.s32.totalorder %v193, 187
    %vm196 = vcmp.lt.s32.totalorder %v194, 187
    %v197 = vld [vmem:[#allocation7] sm:$0xff]
    %v198 = vld [vmem:[#allocation7 + $0x8] sm:$0xff]
    %v199 = vld [vmem:[#allocation7 + $0x10] sm:$0xff]
    %v200 = vld [vmem:[#allocation7 + $0x18] sm:$0xff]
    %v201 = vld [vmem:[#allocation7 + $0x20] sm:$0xff]
    %v202 = vld [vmem:[#allocation7 + $0x28] sm:$0xff]
    %v203 = vld [vmem:[#allocation7 + $0x30] sm:$0xff]
    %v204 = vld [vmem:[#allocation7 + $0x38] sm:$0xff]
    %v205 = vld [vmem:[#allocation7 + $0x40] sm:$0xff]
    %v206 = vld [vmem:[#allocation7 + $0x48] sm:$0xff]
    %v207 = vld [vmem:[#allocation7 + $0x50] sm:$0xff]
    %v208 = vld [vmem:[#allocation7 + $0x58] sm:$0xff]
    %v209 = vld [vmem:[#allocation7 + $0x60] sm:$0xff]
    %v210 = vld [vmem:[#allocation7 + $0x68] sm:$0xff]
    %v211 = vld [vmem:[#allocation7 + $0x70] sm:$0xff]
    %v212 = vld [vmem:[#allocation7 + $0x78] sm:$0xff]
    %v213 = vld [vmem:[#allocation7 + $0x80] sm:$0xff]
    %v214 = vld [vmem:[#allocation7 + $0x88] sm:$0xff]
    %v215 = vld [vmem:[#allocation7 + $0x90] sm:$0xff]
    %v216 = vld [vmem:[#allocation7 + $0x98] sm:$0xff]
    %v217 = vld [vmem:[#allocation7 + $0xa0] sm:$0xff]
    %v218 = vld [vmem:[#allocation7 + $0xa8] sm:$0xff]
    %v219 = vld [vmem:[#allocation7 + $0xb0] sm:$0xff]
    %v220 = vld [vmem:[#allocation7 + $0xb8] sm:$0xff]
    %v221 = vld [vmem:[#allocation7 + $0xc0] sm:$0xff]
    %v222 = vld [vmem:[#allocation7 + $0xc8] sm:$0xff]
    %v223 = vld [vmem:[#allocation7 + $0xd0] sm:$0xff]
    %v224 = vld [vmem:[#allocation7 + $0xd8] sm:$0xff]
    %v225 = vld [vmem:[#allocation7 + $0xe0] sm:$0xff]
    %v226 = vld [vmem:[#allocation7 + $0xe8] sm:$0xff]
    %v227 = vld [vmem:[#allocation7 + $0xf0] sm:$0xff]
    %v228 = vld [vmem:[#allocation7 + $0xf8] sm:$0xff]
    %v229 = vld [vmem:[#allocation7 + $0x100] sm:$0xff]
    %v230 = vld [vmem:[#allocation7 + $0x108] sm:$0xff]
    %v231 = vld [vmem:[#allocation7 + $0x110] sm:$0xff]
    %v232 = vld [vmem:[#allocation7 + $0x118] sm:$0xff]
    %v233 = vld [vmem:[#allocation7 + $0x120] sm:$0xff]
    %v234 = vld [vmem:[#allocation7 + $0x128] sm:$0xff]
    %v235 = vld [vmem:[#allocation7 + $0x130] sm:$0xff]
    %v236 = vld [vmem:[#allocation7 + $0x138] sm:$0xff]
    %v237 = vld [vmem:[#allocation7 + $0x140] sm:$0xff]
    %v238 = vld [vmem:[#allocation7 + $0x148] sm:$0xff]
    %v239 = vld [vmem:[#allocation7 + $0x150] sm:$0xff]
    %v240 = vld [vmem:[#allocation7 + $0x158] sm:$0xff]
    %v241 = vld [vmem:[#allocation7 + $0x160] sm:$0xff]
    %v242 = vld [vmem:[#allocation7 + $0x168] sm:$0xff]
    %v243 = vld [vmem:[#allocation7 + $0x170] sm:$0xff]
    %v244 = vld [vmem:[#allocation7 + $0x178] sm:$0xff]
    %v245 = vld [vmem:[#allocation7 + $0x180] sm:$0xff]
    %v246 = vld [vmem:[#allocation7 + $0x188] sm:$0xff]
    %v247 = vld [vmem:[#allocation7 + $0x190] sm:$0xff]
    %v248 = vld [vmem:[#allocation7 + $0x198] sm:$0xff]
    %v249 = vld [vmem:[#allocation7 + $0x1a0] sm:$0xff]
    %v250 = vld [vmem:[#allocation7 + $0x1a8] sm:$0xff]
    %v251 = vld [vmem:[#allocation7 + $0x1b0] sm:$0xff]
    %v252 = vld [vmem:[#allocation7 + $0x1b8] sm:$0xff]
    %v253 = vld [vmem:[#allocation7 + $0x1c0] sm:$0xff]
    %v254 = vld [vmem:[#allocation7 + $0x1c8] sm:$0xff]
    %v255 = vld [vmem:[#allocation7 + $0x1d0] sm:$0xff]
    %v256 = vld [vmem:[#allocation7 + $0x1d8] sm:$0xff]
    %v257 = vld [vmem:[#allocation7 + $0x1e0] sm:$0xff]
    %v258 = vld [vmem:[#allocation7 + $0x1e8] sm:$0xff]
    %v259 = vld [vmem:[#allocation7 + $0x1f0] sm:$0xff]
    %v260 = vld [vmem:[#allocation7 + $0x1f8] sm:$0xff]
    %v261 = vld [vmem:[#allocation7 + $0x200] sm:$0xff]
    %v262 = vld [vmem:[#allocation7 + $0x208] sm:$0xff]
    %v263 = vld [vmem:[#allocation7 + $0x210] sm:$0xff]
    %v264 = vld [vmem:[#allocation7 + $0x218] sm:$0xff]
    %v265 = vld [vmem:[#allocation7 + $0x220] sm:$0xff]
    %v266 = vld [vmem:[#allocation7 + $0x228] sm:$0xff]
    %v267 = vld [vmem:[#allocation7 + $0x230] sm:$0xff]
    %v268 = vld [vmem:[#allocation7 + $0x238] sm:$0xff]
    %v269 = vld [vmem:[#allocation7 + $0x240] sm:$0xff]
    %v270 = vld [vmem:[#allocation7 + $0x248] sm:$0xff]
    %v271 = vld [vmem:[#allocation7 + $0x250] sm:$0xff]
    %v272 = vld [vmem:[#allocation7 + $0x258] sm:$0xff]
    %v273 = vld [vmem:[#allocation7 + $0x260] sm:$0xff]
    %v274 = vld [vmem:[#allocation7 + $0x268] sm:$0xff]
    %v275 = vld [vmem:[#allocation7 + $0x270] sm:$0xff]
    %v276 = vld [vmem:[#allocation7 + $0x278] sm:$0xff]
    %v277 = vld [vmem:[#allocation7 + $0x280] sm:$0xff]
    %v278 = vld [vmem:[#allocation7 + $0x288] sm:$0xff]
    %v279 = vld [vmem:[#allocation7 + $0x290] sm:$0xff]
    %v280 = vld [vmem:[#allocation7 + $0x298] sm:$0xff]
    %v281 = vld [vmem:[#allocation7 + $0x2a0] sm:$0xff]
    %v282 = vld [vmem:[#allocation7 + $0x2a8] sm:$0xff]
    %v283 = vld [vmem:[#allocation7 + $0x2b0] sm:$0xff]
    %v284 = vld [vmem:[#allocation7 + $0x2b8] sm:$0xff]
    %v285 = vld [vmem:[#allocation7 + $0x2c0] sm:$0xff]
    %v286 = vld [vmem:[#allocation7 + $0x2c8] sm:$0xff]
    %v287 = vld [vmem:[#allocation7 + $0x2d0] sm:$0xff]
    %v288 = vld [vmem:[#allocation7 + $0x2d8] sm:$0xff]
    %v289 = vld [vmem:[#allocation7 + $0x2e0] sm:$0xff]
    %v290 = vld [vmem:[#allocation7 + $0x2e8] sm:$0xff]
    %v291 = vld [vmem:[#allocation7 + $0x2f0] sm:$0xff]
    %v292 = vld [vmem:[#allocation7 + $0x2f8] sm:$0xff]
    %v293 = vld [vmem:[#allocation7 + $0x300] sm:$0xff]
    %v294 = vld [vmem:[#allocation7 + $0x308] sm:$0xff]
    %v295 = vld [vmem:[#allocation7 + $0x310] sm:$0xff]
    %v296 = vld [vmem:[#allocation7 + $0x318] sm:$0xff]
    %v297 = vld [vmem:[#allocation7 + $0x320] sm:$0xff]
    %v298 = vld [vmem:[#allocation7 + $0x328] sm:$0xff]
    %v299 = vld [vmem:[#allocation7 + $0x330] sm:$0xff]
    %v300 = vld [vmem:[#allocation7 + $0x338] sm:$0xff]
    %v301 = vld [vmem:[#allocation7 + $0x340] sm:$0xff]
    %v302 = vld [vmem:[#allocation7 + $0x348] sm:$0xff]
    %v303 = vld [vmem:[#allocation7 + $0x350] sm:$0xff]
    %v304 = vld [vmem:[#allocation7 + $0x358] sm:$0xff]
    %v305 = vld [vmem:[#allocation7 + $0x360] sm:$0xff]
    %v306 = vld [vmem:[#allocation7 + $0x368] sm:$0xff]
    %v307 = vld [vmem:[#allocation7 + $0x370] sm:$0xff]
    %v308 = vld [vmem:[#allocation7 + $0x378] sm:$0xff]
    %v309 = vld [vmem:[#allocation7 + $0x380] sm:$0xff]
    %v310 = vld [vmem:[#allocation7 + $0x388] sm:$0xff]
    %v311 = vld [vmem:[#allocation7 + $0x390] sm:$0xff]
    %v312 = vld [vmem:[#allocation7 + $0x398] sm:$0xff]
    %v313 = vld [vmem:[#allocation7 + $0x3a0] sm:$0xff]
    %v314 = vld [vmem:[#allocation7 + $0x3a8] sm:$0xff]
    %v315 = vld [vmem:[#allocation7 + $0x3b0] sm:$0xff]
    %v316 = vld [vmem:[#allocation7 + $0x3b8] sm:$0xff]
    %v317 = vld [vmem:[#allocation7 + $0x3c0] sm:$0xff]
    %v318 = vld [vmem:[#allocation7 + $0x3c8] sm:$0xff]
    %v319 = vld [vmem:[#allocation7 + $0x3d0] sm:$0xff]
    %v320 = vld [vmem:[#allocation7 + $0x3d8] sm:$0xff]
    %v321 = vld [vmem:[#allocation7 + $0x3e0] sm:$0xff]
    %v322 = vld [vmem:[#allocation7 + $0x3e8] sm:$0xff]
    %v323 = vld [vmem:[#allocation7 + $0x3f0] sm:$0xff]
    %v324 = vld [vmem:[#allocation7 + $0x3f8] sm:$0xff]
    %v325 = vld [vmem:[#allocation7 + $0x400] sm:$0xff]
    %v326 = vld [vmem:[#allocation7 + $0x408] sm:$0xff]
    %v327 = vld [vmem:[#allocation7 + $0x410] sm:$0xff]
    %v328 = vld [vmem:[#allocation7 + $0x418] sm:$0xff]
    %v329 = vld [vmem:[#allocation7 + $0x420] sm:$0xff]
    %v330 = vld [vmem:[#allocation7 + $0x428] sm:$0xff]
    %v331 = vld [vmem:[#allocation7 + $0x430] sm:$0xff]
    %v332 = vld [vmem:[#allocation7 + $0x438] sm:$0xff]
    %v333 = vld [vmem:[#allocation7 + $0x440] sm:$0xff]
    %v334 = vld [vmem:[#allocation7 + $0x448] sm:$0xff]
    %v335 = vld [vmem:[#allocation7 + $0x450] sm:$0xff]
    %v336 = vld [vmem:[#allocation7 + $0x458] sm:$0xff]
    %v337 = vld [vmem:[#allocation7 + $0x460] sm:$0xff]
    %v338 = vld [vmem:[#allocation7 + $0x468] sm:$0xff]
    %v339 = vld [vmem:[#allocation7 + $0x470] sm:$0xff]
    %v340 = vld [vmem:[#allocation7 + $0x478] sm:$0xff]
    %v341 = vld [vmem:[#allocation7 + $0x480] sm:$0xff]
    %v342 = vld [vmem:[#allocation7 + $0x488] sm:$0xff]
    %v343 = vld [vmem:[#allocation7 + $0x490] sm:$0xff]
    %v344 = vld [vmem:[#allocation7 + $0x498] sm:$0xff]
    %v345 = vld [vmem:[#allocation7 + $0x4a0] sm:$0xff]
    %v346 = vld [vmem:[#allocation7 + $0x4a8] sm:$0xff]
    %v347 = vld [vmem:[#allocation7 + $0x4b0] sm:$0xff]
    %v348 = vld [vmem:[#allocation7 + $0x4b8] sm:$0xff]
    %v349 = vld [vmem:[#allocation7 + $0x4c0] sm:$0xff]
    %v350 = vld [vmem:[#allocation7 + $0x4c8] sm:$0xff]
    %v351 = vld [vmem:[#allocation7 + $0x4d0] sm:$0xff]
    %v352 = vld [vmem:[#allocation7 + $0x4d8] sm:$0xff]
    %v353 = vld [vmem:[#allocation7 + $0x4e0] sm:$0xff]
    %v354 = vld [vmem:[#allocation7 + $0x4e8] sm:$0xff]
    %v355 = vld [vmem:[#allocation7 + $0x4f0] sm:$0xff]
    %v356 = vld [vmem:[#allocation7 + $0x4f8] sm:$0xff]
    %v357 = vld [vmem:[#allocation7 + $0x500] sm:$0xff]
    %v358 = vld [vmem:[#allocation7 + $0x508] sm:$0xff]
    %v359 = vld [vmem:[#allocation7 + $0x510] sm:$0xff]
    %v360 = vld [vmem:[#allocation7 + $0x518] sm:$0xff]
    %v361 = vld [vmem:[#allocation7 + $0x520] sm:$0xff]
    %v362 = vld [vmem:[#allocation7 + $0x528] sm:$0xff]
    %v363 = vld [vmem:[#allocation7 + $0x530] sm:$0xff]
    %v364 = vld [vmem:[#allocation7 + $0x538] sm:$0xff]
    %v365 = vld [vmem:[#allocation7 + $0x540] sm:$0xff]
    %v366 = vld [vmem:[#allocation7 + $0x548] sm:$0xff]
    %v367 = vld [vmem:[#allocation7 + $0x550] sm:$0xff]
    %v368 = vld [vmem:[#allocation7 + $0x558] sm:$0xff]
    %v369 = vld [vmem:[#allocation7 + $0x560] sm:$0xff]
    %v370 = vld [vmem:[#allocation7 + $0x568] sm:$0xff]
    %v371 = vld [vmem:[#allocation7 + $0x570] sm:$0xff]
    %v372 = vld [vmem:[#allocation7 + $0x578] sm:$0xff]
    %v373 = vld [vmem:[#allocation7 + $0x580] sm:$0xff]
    %v374 = vld [vmem:[#allocation7 + $0x588] sm:$0xff]
    %v375 = vld [vmem:[#allocation7 + $0x590] sm:$0xff]
    %v376 = vld [vmem:[#allocation7 + $0x598] sm:$0xff]
    %v377 = vld [vmem:[#allocation7 + $0x5a0] sm:$0xff]
    %v378 = vld [vmem:[#allocation7 + $0x5a8] sm:$0xff]
    %v379 = vld [vmem:[#allocation7 + $0x5b0] sm:$0xff]
    %v380 = vld [vmem:[#allocation7 + $0x5b8] sm:$0xff]
    %v381 = vld [vmem:[#allocation7 + $0x5c0] sm:$0xff]
    %v382 = vld [vmem:[#allocation7 + $0x5c8] sm:$0xff]
    %v383 = vld [vmem:[#allocation7 + $0x5d0] sm:$0xff]
    %v384 = vld [vmem:[#allocation7 + $0x5d8] sm:$0xff]
    %v385 = vld [vmem:[#allocation7 + $0x5e0] sm:$0xff]
    %v386 = vld [vmem:[#allocation7 + $0x5e8] sm:$0xff]
    %v387 = vld [vmem:[#allocation7 + $0x5f0] sm:$0xff]
    %v388 = vld [vmem:[#allocation7 + $0x5f8] sm:$0xff]
    %v389 = vld [vmem:[%s3] sm:$0x3f]
    %v391 = vlaneseq
    %v392 = vshrl.u32 %v391, 7
    %v393 = vsub.s32 0, %v392
    %v394 = vrot.slane %v389, %v393
    %v395 = vlaneseq
    %v396 = vshrl.u32 %v395, 7
    %v397 = vsub.s32 1, %v396
    %v398 = vrot.slane %v389, %v397
    %v399 = vlaneseq
    %v400 = vshrl.u32 %v399, 7
    %v401 = vsub.s32 2, %v400
    %v402 = vrot.slane %v389, %v401
    %v403 = vlaneseq
    %v404 = vshrl.u32 %v403, 7
    %v405 = vsub.s32 3, %v404
    %v406 = vrot.slane %v389, %v405
    %v407 = vlaneseq
    %v408 = vshrl.u32 %v407, 7
    %v409 = vsub.s32 4, %v408
    %v410 = vrot.slane %v389, %v409
    %v411 = vlaneseq
    %v412 = vshrl.u32 %v411, 7
    %v413 = vsub.s32 5, %v412
    %v414 = vrot.slane %v389, %v413
    %421 = vmatprep.subr.mxu0 %v198
    %422 = vmatpush1.msra.mxu0 %v197
    %423 = vmatprep.subr.mxu0 %v204
    %424 = vmatpush1.msra.mxu0 %v203
    %425 = vmatprep.subr.mxu0 %v210
    %426 = vmatpush1.msra.mxu0 %v209
    %427 = vmatprep.subr.mxu0 %v216
    %428 = vmatpush1.msra.mxu0 %v215
    %429 = vmatprep.subr.mxu0 %v222
    %430 = vmatpush1.msra.mxu0 %v221
    %431 = vmatprep.subr.mxu0 %v228
    %432 = vmatpush1.msra.mxu0 %v227
    %433 = vmatprep.subr.mxu0 %v234
    %434 = vmatpush1.msra.mxu0 %v233
    %435 = vmatprep.subr.mxu0 %v240
    %436 = vmatpush1.msra.mxu0 %v239
    %437 = vmatprep.subr.mxu0 %v246
    %438 = vmatpush1.msra.mxu0 %v245
    %439 = vmatprep.subr.mxu0 %v252
    %440 = vmatpush1.msra.mxu0 %v251
    %441 = vmatprep.subr.mxu0 %v258
    %442 = vmatpush1.msra.mxu0 %v257
    %443 = vmatprep.subr.mxu0 %v264
    %444 = vmatpush1.msra.mxu0 %v263
    %445 = vmatprep.subr.mxu0 %v270
    %446 = vmatpush1.msra.mxu0 %v269
    %447 = vmatprep.subr.mxu0 %v276
    %448 = vmatpush1.msra.mxu0 %v275
    %449 = vmatprep.subr.mxu0 %v282
    %450 = vmatpush1.msra.mxu0 %v281
    %451 = vmatprep.subr.mxu0 %v288
    %452 = vmatpush1.msra.mxu0 %v287
    %453 = vmatprep.subr.mxu0 %v294
    %454 = vmatpush1.msra.mxu0 %v293
    %455 = vmatprep.subr.mxu0 %v300
    %456 = vmatpush1.msra.mxu0 %v299
    %457 = vmatprep.subr.mxu0 %v306
    %458 = vmatpush1.msra.mxu0 %v305
    %459 = vmatprep.subr.mxu0 %v312
    %460 = vmatpush1.msra.mxu0 %v311
    %461 = vmatprep.subr.mxu0 %v318
    %462 = vmatpush1.msra.mxu0 %v317
    %463 = vmatprep.subr.mxu0 %v324
    %464 = vmatpush1.msra.mxu0 %v323
    %465 = vmatprep.subr.mxu0 %v330
    %466 = vmatpush1.msra.mxu0 %v329
    %467 = vmatprep.subr.mxu0 %v336
    %468 = vmatpush1.msra.mxu0 %v335
    %469 = vmatprep.subr.mxu0 %v342
    %470 = vmatpush1.msra.mxu0 %v341
    %471 = vmatprep.subr.mxu0 %v348
    %472 = vmatpush1.msra.mxu0 %v347
    %473 = vmatprep.subr.mxu0 %v354
    %474 = vmatpush1.msra.mxu0 %v353
    %475 = vmatprep.subr.mxu0 %v360
    %476 = vmatpush1.msra.mxu0 %v359
    %477 = vmatprep.subr.mxu0 %v366
    %478 = vmatpush1.msra.mxu0 %v365
    %479 = vmatprep.subr.mxu0 %v372
    %480 = vmatpush1.msra.mxu0 %v371
    %481 = vmatprep.subr.mxu0 %v378
    %482 = vmatpush1.msra.mxu0 %v377
    %483 = vmatprep.subr.mxu0 %v384
    %484 = vmatpush1.msra.mxu0 %v383
    %485 = vmatprep.mubr.f32.mxu0 %v190
    %486 = vmatmul.mubr.f32.gmra.mrb[0].mxu0 %v165
    %v487 = vpop.f32.mrb[0].mxu0
    %v488 = vadd.f32 %v394, %v487
    %v489 = vpop.f32.mrb[0].mxu0
    %v490 = vadd.f32 %v398, %v489
    %491 = vmatprep.mubr.f32.mxu0 %v191
    %492 = vmatmul.mubr.f32.gmra.mrb[0].mxu0 %v183
    %v493 = vpop.f32.mrb[0].mxu0
    %v494 = vadd.f32 %v394, %v493
    %v495 = vpop.f32.mrb[0].mxu0
    %v496 = vadd.f32 %v398, %v495
    %497 = vdwg.mxu0
    %498 = vmatprep.subr.mxu0 %v200
    %499 = vmatpush1.msra.mxu0 %v199
    %500 = vmatprep.subr.mxu0 %v206
    %501 = vmatpush1.msra.mxu0 %v205
    %502 = vmatprep.subr.mxu0 %v212
    %503 = vmatpush1.msra.mxu0 %v211
    %504 = vmatprep.subr.mxu0 %v218
    %505 = vmatpush1.msra.mxu0 %v217
    %506 = vmatprep.subr.mxu0 %v224
    %507 = vmatpush1.msra.mxu0 %v223
    %508 = vmatprep.subr.mxu0 %v230
    %509 = vmatpush1.msra.mxu0 %v229
    %510 = vmatprep.subr.mxu0 %v236
    %511 = vmatpush1.msra.mxu0 %v235
    %512 = vmatprep.subr.mxu0 %v242
    %513 = vmatpush1.msra.mxu0 %v241
    %514 = vmatprep.subr.mxu0 %v248
    %515 = vmatpush1.msra.mxu0 %v247
    %516 = vmatprep.subr.mxu0 %v254
    %517 = vmatpush1.msra.mxu0 %v253
    %518 = vmatprep.subr.mxu0 %v260
    %519 = vmatpush1.msra.mxu0 %v259
    %520 = vmatprep.subr.mxu0 %v266
    %521 = vmatpush1.msra.mxu0 %v265
    %522 = vmatprep.subr.mxu0 %v272
    %523 = vmatpush1.msra.mxu0 %v271
    %524 = vmatprep.subr.mxu0 %v278
    %525 = vmatpush1.msra.mxu0 %v277
    %526 = vmatprep.subr.mxu0 %v284
    %527 = vmatpush1.msra.mxu0 %v283
    %528 = vmatprep.subr.mxu0 %v290
    %529 = vmatpush1.msra.mxu0 %v289
    %530 = vmatprep.subr.mxu0 %v296
    %531 = vmatpush1.msra.mxu0 %v295
    %532 = vmatprep.subr.mxu0 %v302
    %533 = vmatpush1.msra.mxu0 %v301
    %534 = vmatprep.subr.mxu0 %v308
    %535 = vmatpush1.msra.mxu0 %v307
    %536 = vmatprep.subr.mxu0 %v314
    %537 = vmatpush1.msra.mxu0 %v313
    %538 = vmatprep.subr.mxu0 %v320
    %539 = vmatpush1.msra.mxu0 %v319
    %540 = vmatprep.subr.mxu0 %v326
    %541 = vmatpush1.msra.mxu0 %v325
    %542 = vmatprep.subr.mxu0 %v332
    %543 = vmatpush1.msra.mxu0 %v331
    %544 = vmatprep.subr.mxu0 %v338
    %545 = vmatpush1.msra.mxu0 %v337
    %546 = vmatprep.subr.mxu0 %v344
    %547 = vmatpush1.msra.mxu0 %v343
    %548 = vmatprep.subr.mxu0 %v350
    %549 = vmatpush1.msra.mxu0 %v349
    %550 = vmatprep.subr.mxu0 %v356
    %551 = vmatpush1.msra.mxu0 %v355
    %552 = vmatprep.subr.mxu0 %v362
    %553 = vmatpush1.msra.mxu0 %v361
    %554 = vmatprep.subr.mxu0 %v368
    %555 = vmatpush1.msra.mxu0 %v367
    %556 = vmatprep.subr.mxu0 %v374
    %557 = vmatpush1.msra.mxu0 %v373
    %558 = vmatprep.subr.mxu0 %v380
    %559 = vmatpush1.msra.mxu0 %v379
    %560 = vmatprep.subr.mxu0 %v386
    %561 = vmatpush1.msra.mxu0 %v385
    %562 = vmatprep.mubr.f32.mxu0 %v190
    %563 = vmatmul.mubr.f32.gmra.mrb[0].mxu0 %v165
    %v564 = vpop.f32.mrb[0].mxu0
    %v565 = vadd.f32 %v402, %v564
    %v566 = vpop.f32.mrb[0].mxu0
    %v567 = vadd.f32 %v406, %v566
    %568 = vmatprep.mubr.f32.mxu0 %v191
    %569 = vmatmul.mubr.f32.gmra.mrb[0].mxu0 %v183
    %v570 = vpop.f32.mrb[0].mxu0
    %v571 = vadd.f32 %v402, %v570
    %v572 = vpop.f32.mrb[0].mxu0
    %v573 = vadd.f32 %v406, %v572
    %574 = vdwg.mxu0
    %575 = vmatprep.subr.mxu0 %v202
    %576 = vmatpush1.msra.mxu0 %v201
    %577 = vmatprep.subr.mxu0 %v208
    %578 = vmatpush1.msra.mxu0 %v207
    %579 = vmatprep.subr.mxu0 %v214
    %580 = vmatpush1.msra.mxu0 %v213
    %581 = vmatprep.subr.mxu0 %v220
    %582 = vmatpush1.msra.mxu0 %v219
    %583 = vmatprep.subr.mxu0 %v226
    %584 = vmatpush1.msra.mxu0 %v225
    %585 = vmatprep.subr.mxu0 %v232
    %586 = vmatpush1.msra.mxu0 %v231
    %587 = vmatprep.subr.mxu0 %v238
    %588 = vmatpush1.msra.mxu0 %v237
    %589 = vmatprep.subr.mxu0 %v244
    %590 = vmatpush1.msra.mxu0 %v243
    %591 = vmatprep.subr.mxu0 %v250
    %592 = vmatpush1.msra.mxu0 %v249
    %593 = vmatprep.subr.mxu0 %v256
    %594 = vmatpush1.msra.mxu0 %v255
    %595 = vmatprep.subr.mxu0 %v262
    %596 = vmatpush1.msra.mxu0 %v261
    %597 = vmatprep.subr.mxu0 %v268
    %598 = vmatpush1.msra.mxu0 %v267
    %599 = vmatprep.subr.mxu0 %v274
    %600 = vmatpush1.msra.mxu0 %v273
    %601 = vmatprep.subr.mxu0 %v280
    %602 = vmatpush1.msra.mxu0 %v279
    %603 = vmatprep.subr.mxu0 %v286
    %604 = vmatpush1.msra.mxu0 %v285
    %605 = vmatprep.subr.mxu0 %v292
    %606 = vmatpush1.msra.mxu0 %v291
    %607 = vmatprep.subr.mxu0 %v298
    %608 = vmatpush1.msra.mxu0 %v297
    %609 = vmatprep.subr.mxu0 %v304
    %610 = vmatpush1.msra.mxu0 %v303
    %611 = vmatprep.subr.mxu0 %v310
    %612 = vmatpush1.msra.mxu0 %v309
    %613 = vmatprep.subr.mxu0 %v316
    %614 = vmatpush1.msra.mxu0 %v315
    %615 = vmatprep.subr.mxu0 %v322
    %616 = vmatpush1.msra.mxu0 %v321
    %617 = vmatprep.subr.mxu0 %v328
    %618 = vmatpush1.msra.mxu0 %v327
    %619 = vmatprep.subr.mxu0 %v334
    %620 = vmatpush1.msra.mxu0 %v333
    %621 = vmatprep.subr.mxu0 %v340
    %622 = vmatpush1.msra.mxu0 %v339
    %623 = vmatprep.subr.mxu0 %v346
    %624 = vmatpush1.msra.mxu0 %v345
    %625 = vmatprep.subr.mxu0 %v352
    %626 = vmatpush1.msra.mxu0 %v351
    %627 = vmatprep.subr.mxu0 %v358
    %628 = vmatpush1.msra.mxu0 %v357
    %629 = vmatprep.subr.mxu0 %v364
    %630 = vmatpush1.msra.mxu0 %v363
    %631 = vmatprep.subr.mxu0 %v370
    %632 = vmatpush1.msra.mxu0 %v369
    %633 = vmatprep.subr.mxu0 %v376
    %634 = vmatpush1.msra.mxu0 %v375
    %635 = vmatprep.subr.mxu0 %v382
    %636 = vmatpush1.msra.mxu0 %v381
    %637 = vmatprep.subr.mxu0 %v388
    %638 = vmatpush1.msra.mxu0 %v387
    %639 = vmatprep.mubr.f32.mxu0 %v190
    %640 = vmatmul.mubr.f32.gmra.mrb[0].mxu0 %v165
    %v641 = vpop.f32.mrb[0].mxu0
    %v642 = vadd.f32 %v410, %v641
    %v643 = vpop.f32.mrb[0].mxu0
    %v644 = vadd.f32 %v414, %v643
    %645 = vmatprep.mubr.f32.mxu0 %v191
    %646 = vmatmul.mubr.f32.gmra.mrb[0].mxu0 %v183
    %v647 = vpop.f32.mrb[0].mxu0
    %v648 = vadd.f32 %v410, %v647
    %v649 = vpop.f32.mrb[0].mxu0
    %v650 = vadd.f32 %v414, %v649
    %651 = vdwg.mxu0
    %v652 = vld [vmem:[#allocation5] sm:$0xff]
    %v653 = vld [vmem:[#allocation5 + $0x8] sm:$0xff]
    %654 = vmatprep.subr.mxu0 %v567
    %655 = vmatpush1.xpose.msra.mxu0 %v565
    %656 = vmatprep.subr.mxu0 %v573
    %657 = vmatpush1.xpose.msra.mxu0 %v571
    %658 = vmatprep.subr.mxu0 0.0
    %659 = vmatpush1.xpose.msra.mxu0 0.0
    %660 = vmatprep.subr.mxu0 0.0
    %661 = vmatpush1.xpose.msra.mxu0 0.0
    %662 = vmatprep.subr.mxu0 0.0
    %663 = vmatpush1.xpose.msra.mxu0 0.0
    %664 = vmatprep.subr.mxu0 0.0
    %665 = vmatpush1.xpose.msra.mxu0 0.0
    %666 = vmatprep.subr.mxu0 0.0
    %667 = vmatpush1.xpose.msra.mxu0 0.0
    %668 = vmatprep.subr.mxu0 0.0
    %669 = vmatpush1.xpose.msra.mxu0 0.0
    %670 = vmatprep.subr.mxu0 0.0
    %671 = vmatpush1.xpose.msra.mxu0 0.0
    %672 = vmatprep.subr.mxu0 0.0
    %673 = vmatpush1.xpose.msra.mxu0 0.0
    %674 = vmatprep.subr.mxu0 0.0
    %675 = vmatpush1.xpose.msra.mxu0 0.0
    %676 = vmatprep.subr.mxu0 0.0
    %677 = vmatpush1.xpose.msra.mxu0 0.0
    %678 = vmatprep.subr.mxu0 0.0
    %679 = vmatpush1.xpose.msra.mxu0 0.0
    %680 = vmatprep.subr.mxu0 0.0
    %681 = vmatpush1.xpose.msra.mxu0 0.0
    %682 = vmatprep.subr.mxu0 0.0
    %683 = vmatpush1.xpose.msra.mxu0 0.0
    %684 = vmatprep.subr.mxu0 0.0
    %685 = vmatpush1.xpose.msra.mxu0 0.0
    %686 = vmatprep.subr.mxu0 0.0
    %687 = vmatpush1.xpose.msra.mxu0 0.0
    %688 = vmatprep.subr.mxu0 0.0
    %689 = vmatpush1.xpose.msra.mxu0 0.0
    %690 = vmatprep.subr.mxu0 0.0
    %691 = vmatpush1.xpose.msra.mxu0 0.0
    %692 = vmatprep.subr.mxu0 0.0
    %693 = vmatpush1.xpose.msra.mxu0 0.0
    %694 = vmatprep.subr.mxu0 0.0
    %695 = vmatpush1.xpose.msra.mxu0 0.0
    %696 = vmatprep.subr.mxu0 0.0
    %697 = vmatpush1.xpose.msra.mxu0 0.0
    %698 = vmatprep.subr.mxu0 0.0
    %699 = vmatpush1.xpose.msra.mxu0 0.0
    %700 = vmatprep.subr.mxu0 0.0
    %701 = vmatpush1.xpose.msra.mxu0 0.0
    %702 = vmatprep.subr.mxu0 0.0
    %703 = vmatpush1.xpose.msra.mxu0 0.0
    %704 = vmatprep.subr.mxu0 0.0
    %705 = vmatpush1.xpose.msra.mxu0 0.0
    %706 = vmatprep.subr.mxu0 0.0
    %707 = vmatpush1.xpose.msra.mxu0 0.0
    %708 = vmatprep.subr.mxu0 0.0
    %709 = vmatpush1.xpose.msra.mxu0 0.0
    %710 = vmatprep.subr.mxu0 0.0
    %711 = vmatpush1.xpose.msra.mxu0 0.0
    %712 = vmatprep.subr.mxu0 0.0
    %713 = vmatpush1.xpose.msra.mxu0 0.0
    %714 = vmatprep.subr.mxu0 0.0
    %715 = vmatpush1.xpose.msra.mxu0 0.0
    %716 = vmatprep.subr.mxu0 0.0
    %717 = vmatpush1.xpose.msra.mxu0 0.0
    %718 = vmatprep.mubr.f32.mxu0 %v490
    %719 = vmatmul.mubr.f32.gmra.mrb[0].mxu0 %v488
    %v720 = vpop.f32.mrb[0].mxu0
    %v721 = vadd.f32 %v652, %v720
    %v722 = vpop.f32.mrb[0].mxu0
    %723 = vmatprep.mubr.f32.mxu0 %v496
    %724 = vmatmul.mubr.f32.gmra.mrb[0].mxu0 %v494
    %v725 = vpop.f32.mrb[0].mxu0
    %v726 = vadd.f32 %v653, %v725
    %v727 = vpop.f32.mrb[0].mxu0
    %728 = vdwg.mxu0
    %vm729 = vcmask 130048
    %v730 = vsel %vm729, %v721, -inf
    %731 = vmax.xlane.f32.xlu0 %v730
    %v732 = vpop.xlane.xlu0 %731
    %v733 = vsel %vm729, %v726, -inf
    %734 = vmax.xlane.f32.xlu0 %v733
    %v735 = vpop.xlane.xlu0 %734
    %v736 = vsub.f32 %v721, %v732
    %v737 = vsub.f32 %v726, %v735
    %v738 = vmul.f32 %v736, 1.442695
    %v739 = vpow.pop %v738
    %v740 = vmul.f32 %v737, 1.442695
    %v741 = vpow.pop %v740
    %v742 = vsel %vm729, %v739, 0.0
    %743 = vadd.xlane.f32.xlu0 %v742
    %v744 = vpop.xlane.xlu0 %743
    %v745 = vsel %vm729, %v741, 0.0
    %746 = vadd.xlane.f32.xlu0 %v745
    %v747 = vpop.xlane.xlu0 %746
    %v748 = vrcp.pop %v744
    %v749 = vmul.f32 %v739, %v748
    %v750 = vrcp.pop %v747
    %v751 = vmul.f32 %v741, %v750
    %v753 = vsel %vm729, %v749, 0
    %v756 = vsel %vm729, %v751, 0
    %758 = vmatprep.subr.mxu0 %v644
    %759 = vmatpush1.msra.mxu0 %v642
    %760 = vmatprep.subr.mxu0 %v650
    %761 = vmatpush1.msra.mxu0 %v648
    %762 = vmatprep.subr.mxu0 0.0
    %763 = vmatpush1.msra.mxu0 0.0
    %764 = vmatprep.subr.mxu0 0.0
    %765 = vmatpush1.msra.mxu0 0.0
    %766 = vmatprep.subr.mxu0 0.0
    %767 = vmatpush1.msra.mxu0 0.0
    %768 = vmatprep.subr.mxu0 0.0
    %769 = vmatpush1.msra.mxu0 0.0
    %770 = vmatprep.subr.mxu0 0.0
    %771 = vmatpush1.msra.mxu0 0.0
    %772 = vmatprep.subr.mxu0 0.0
    %773 = vmatpush1.msra.mxu0 0.0
    %774 = vmatprep.subr.mxu0 0.0
    %775 = vmatpush1.msra.mxu0 0.0
    %776 = vmatprep.subr.mxu0 0.0
    %777 = vmatpush1.msra.mxu0 0.0
    %778 = vmatprep.subr.mxu0 0.0
    %779 = vmatpush1.msra.mxu0 0.0
    %780 = vmatprep.subr.mxu0 0.0
    %781 = vmatpush1.msra.mxu0 0.0
    %782 = vmatprep.subr.mxu0 0.0
    %783 = vmatpush1.msra.mxu0 0.0
    %784 = vmatprep.subr.mxu0 0.0
    %785 = vmatpush1.msra.mxu0 0.0
    %786 = vmatprep.subr.mxu0 0.0
    %787 = vmatpush1.msra.mxu0 0.0
    %788 = vmatprep.subr.mxu0 0.0
    %789 = vmatpush1.msra.mxu0 0.0
    %790 = vmatprep.subr.mxu0 0.0
    %791 = vmatpush1.msra.mxu0 0.0
    %792 = vmatprep.subr.mxu0 0.0
    %793 = vmatpush1.msra.mxu0 0.0
    %794 = vmatprep.subr.mxu0 0.0
    %795 = vmatpush1.msra.mxu0 0.0
    %796 = vmatprep.subr.mxu0 0.0
    %797 = vmatpush1.msra.mxu0 0.0
    %798 = vmatprep.subr.mxu0 0.0
    %799 = vmatpush1.msra.mxu0 0.0
    %800 = vmatprep.subr.mxu0 0.0
    %801 = vmatpush1.msra.mxu0 0.0
    %802 = vmatprep.subr.mxu0 0.0
    %803 = vmatpush1.msra.mxu0 0.0
    %804 = vmatprep.subr.mxu0 0.0
    %805 = vmatpush1.msra.mxu0 0.0
    %806 = vmatprep.subr.mxu0 0.0
    %807 = vmatpush1.msra.mxu0 0.0
    %808 = vmatprep.subr.mxu0 0.0
    %809 = vmatpush1.msra.mxu0 0.0
    %810 = vmatprep.subr.mxu0 0.0
    %811 = vmatpush1.msra.mxu0 0.0
    %812 = vmatprep.subr.mxu0 0.0
    %813 = vmatpush1.msra.mxu0 0.0
    %814 = vmatprep.subr.mxu0 0.0
    %815 = vmatpush1.msra.mxu0 0.0
    %816 = vmatprep.subr.mxu0 0.0
    %817 = vmatpush1.msra.mxu0 0.0
    %818 = vmatprep.subr.mxu0 0.0
    %819 = vmatpush1.msra.mxu0 0.0
    %820 = vmatprep.subr.mxu0 0.0
    %821 = vmatpush1.msra.mxu0 0.0
    %822 = vmatprep.mubr.f32.mxu0 0.0
    %823 = vmatmul.mubr.f32.gmra.mrb[0].mxu0 %v753
    %v824 = vpop.f32.mrb[0].mxu0
    %v825 = vadd.f32 0.0, %v824
    %v826 = vpop.f32.mrb[0].mxu0
    %v827 = vadd.f32 0.0, %v826
    %828 = vmatprep.mubr.f32.mxu0 0.0
    %829 = vmatmul.mubr.f32.gmra.mrb[0].mxu0 %v756
    %v830 = vpop.f32.mrb[0].mxu0
    %v831 = vadd.f32 0.0, %v830
    %v832 = vpop.f32.mrb[0].mxu0
    %v833 = vadd.f32 0.0, %v832
    %834 = vdwg.mxu0
    %v835 = vld [vmem:[#allocation8] sm:$0xff]
    %v836 = vld [vmem:[#allocation8 + $0x8] sm:$0xff]
    %v837 = vld [vmem:[#allocation8 + $0x10] sm:$0xff]
    %v838 = vld [vmem:[#allocation8 + $0x18] sm:$0xff]
    %v839 = vld [vmem:[#allocation8 + $0x20] sm:$0xff]
    %v840 = vld [vmem:[#allocation8 + $0x28] sm:$0xff]
    %v841 = vld [vmem:[#allocation8 + $0x30] sm:$0xff]
    %v842 = vld [vmem:[#allocation8 + $0x38] sm:$0xff]
    %v843 = vld [vmem:[#allocation8 + $0x40] sm:$0xff]
    %v844 = vld [vmem:[#allocation8 + $0x48] sm:$0xff]
    %v845 = vld [vmem:[#allocation8 + $0x50] sm:$0xff]
    %v846 = vld [vmem:[#allocation8 + $0x58] sm:$0xff]
    %v847 = vld [vmem:[#allocation8 + $0x60] sm:$0xff]
    %v848 = vld [vmem:[#allocation8 + $0x68] sm:$0xff]
    %v849 = vld [vmem:[#allocation8 + $0x70] sm:$0xff]
    %v850 = vld [vmem:[#allocation8 + $0x78] sm:$0xff]
    %v851 = vld [vmem:[#allocation8 + $0x80] sm:$0xff]
    %v852 = vld [vmem:[#allocation8 + $0x88] sm:$0xff]
    %v853 = vld [vmem:[#allocation8 + $0x90] sm:$0xff]
    %v854 = vld [vmem:[#allocation8 + $0x98] sm:$0xff]
    %v855 = vld [vmem:[#allocation8 + $0xa0] sm:$0xff]
    %v856 = vld [vmem:[#allocation8 + $0xa8] sm:$0xff]
    %v857 = vld [vmem:[#allocation8 + $0xb0] sm:$0xff]
    %v858 = vld [vmem:[#allocation8 + $0xb8] sm:$0xff]
    %v859 = vld [vmem:[#allocation8 + $0xc0] sm:$0xff]
    %v860 = vld [vmem:[#allocation8 + $0xc8] sm:$0xff]
    %v861 = vld [vmem:[#allocation8 + $0xd0] sm:$0xff]
    %v862 = vld [vmem:[#allocation8 + $0xd8] sm:$0xff]
    %v863 = vld [vmem:[#allocation8 + $0xe0] sm:$0xff]
    %v864 = vld [vmem:[#allocation8 + $0xe8] sm:$0xff]
    %v865 = vld [vmem:[#allocation8 + $0xf0] sm:$0xff]
    %v866 = vld [vmem:[#allocation8 + $0xf8] sm:$0xff]
    %v867 = vld [vmem:[#allocation8 + $0x100] sm:$0xff]
    %v868 = vld [vmem:[#allocation8 + $0x108] sm:$0xff]
    %v869 = vld [vmem:[#allocation8 + $0x110] sm:$0xff]
    %v870 = vld [vmem:[#allocation8 + $0x118] sm:$0xff]
    %v871 = vld [vmem:[#allocation8 + $0x120] sm:$0xff]
    %v872 = vld [vmem:[#allocation8 + $0x128] sm:$0xff]
    %v873 = vld [vmem:[#allocation8 + $0x130] sm:$0xff]
    %v874 = vld [vmem:[#allocation8 + $0x138] sm:$0xff]
    %v875 = vld [vmem:[#allocation8 + $0x140] sm:$0xff]
    %v876 = vld [vmem:[#allocation8 + $0x148] sm:$0xff]
    %v877 = vld [vmem:[#allocation8 + $0x150] sm:$0xff]
    %v878 = vld [vmem:[#allocation8 + $0x158] sm:$0xff]
    %v879 = vld [vmem:[#allocation8 + $0x160] sm:$0xff]
    %v880 = vld [vmem:[#allocation8 + $0x168] sm:$0xff]
    %v881 = vld [vmem:[#allocation8 + $0x170] sm:$0xff]
    %v882 = vld [vmem:[#allocation8 + $0x178] sm:$0xff]
    %v883 = vld [vmem:[#allocation8 + $0x180] sm:$0xff]
    %v884 = vld [vmem:[#allocation8 + $0x188] sm:$0xff]
    %v885 = vld [vmem:[#allocation8 + $0x190] sm:$0xff]
    %v886 = vld [vmem:[#allocation8 + $0x198] sm:$0xff]
    %v887 = vld [vmem:[#allocation8 + $0x1a0] sm:$0xff]
    %v888 = vld [vmem:[#allocation8 + $0x1a8] sm:$0xff]
    %v889 = vld [vmem:[#allocation8 + $0x1b0] sm:$0xff]
    %v890 = vld [vmem:[#allocation8 + $0x1b8] sm:$0xff]
    %v891 = vld [vmem:[#allocation8 + $0x1c0] sm:$0xff]
    %v892 = vld [vmem:[#allocation8 + $0x1c8] sm:$0xff]
    %v893 = vld [vmem:[#allocation8 + $0x1d0] sm:$0xff]
    %v894 = vld [vmem:[#allocation8 + $0x1d8] sm:$0xff]
    %v895 = vld [vmem:[#allocation8 + $0x1e0] sm:$0xff]
    %v896 = vld [vmem:[#allocation8 + $0x1e8] sm:$0xff]
    %v897 = vld [vmem:[#allocation8 + $0x1f0] sm:$0xff]
    %v898 = vld [vmem:[#allocation8 + $0x1f8] sm:$0xff]
    %v899 = vld [vmem:[%s5] sm:$0x3]
    %v901 = vlaneseq
    %v902 = vshrl.u32 %v901, 7
    %v903 = vsub.s32 0, %v902
    %v904 = vrot.slane %v899, %v903
    %v905 = vlaneseq
    %v906 = vshrl.u32 %v905, 7
    %v907 = vsub.s32 1, %v906
    %v908 = vrot.slane %v899, %v907
    %911 = vmatprep.subr.mxu0 %v836
    %912 = vmatpush1.msra.mxu0 %v835
    %913 = vmatprep.subr.mxu0 %v838
    %914 = vmatpush1.msra.mxu0 %v837
    %915 = vmatprep.subr.mxu0 %v840
    %916 = vmatpush1.msra.mxu0 %v839
    %917 = vmatprep.subr.mxu0 %v842
    %918 = vmatpush1.msra.mxu0 %v841
    %919 = vmatprep.subr.mxu0 %v844
    %920 = vmatpush1.msra.mxu0 %v843
    %921 = vmatprep.subr.mxu0 %v846
    %922 = vmatpush1.msra.mxu0 %v845
    %923 = vmatprep.subr.mxu0 %v848
    %924 = vmatpush1.msra.mxu0 %v847
    %925 = vmatprep.subr.mxu0 %v850
    %926 = vmatpush1.msra.mxu0 %v849
    %927 = vmatprep.subr.mxu0 %v852
    %928 = vmatpush1.msra.mxu0 %v851
    %929 = vmatprep.subr.mxu0 %v854
    %930 = vmatpush1.msra.mxu0 %v853
    %931 = vmatprep.subr.mxu0 %v856
    %932 = vmatpush1.msra.mxu0 %v855
    %933 = vmatprep.subr.mxu0 %v858
    %934 = vmatpush1.msra.mxu0 %v857
    %935 = vmatprep.subr.mxu0 %v860
    %936 = vmatpush1.msra.mxu0 %v859
    %937 = vmatprep.subr.mxu0 %v862
    %938 = vmatpush1.msra.mxu0 %v861
    %939 = vmatprep.subr.mxu0 %v864
    %940 = vmatpush1.msra.mxu0 %v863
    %941 = vmatprep.subr.mxu0 %v866
    %942 = vmatpush1.msra.mxu0 %v865
    %943 = vmatprep.subr.mxu0 %v868
    %944 = vmatpush1.msra.mxu0 %v867
    %945 = vmatprep.subr.mxu0 %v870
    %946 = vmatpush1.msra.mxu0 %v869
    %947 = vmatprep.subr.mxu0 %v872
    %948 = vmatpush1.msra.mxu0 %v871
    %949 = vmatprep.subr.mxu0 %v874
    %950 = vmatpush1.msra.mxu0 %v873
    %951 = vmatprep.subr.mxu0 %v876
    %952 = vmatpush1.msra.mxu0 %v875
    %953 = vmatprep.subr.mxu0 %v878
    %954 = vmatpush1.msra.mxu0 %v877
    %955 = vmatprep.subr.mxu0 %v880
    %956 = vmatpush1.msra.mxu0 %v879
    %957 = vmatprep.subr.mxu0 %v882
    %958 = vmatpush1.msra.mxu0 %v881
    %959 = vmatprep.subr.mxu0 %v884
    %960 = vmatpush1.msra.mxu0 %v883
    %961 = vmatprep.subr.mxu0 %v886
    %962 = vmatpush1.msra.mxu0 %v885
    %963 = vmatprep.subr.mxu0 %v888
    %964 = vmatpush1.msra.mxu0 %v887
    %965 = vmatprep.subr.mxu0 %v890
    %966 = vmatpush1.msra.mxu0 %v889
    %967 = vmatprep.subr.mxu0 %v892
    %968 = vmatpush1.msra.mxu0 %v891
    %969 = vmatprep.subr.mxu0 %v894
    %970 = vmatpush1.msra.mxu0 %v893
    %971 = vmatprep.subr.mxu0 %v896
    %972 = vmatpush1.msra.mxu0 %v895
    %973 = vmatprep.subr.mxu0 %v898
    %974 = vmatpush1.msra.mxu0 %v897
    %975 = vmatprep.mubr.f32.mxu0 %v827
    %976 = vmatmul.mubr.f32.gmra.mrb[0].mxu0 %v825
    %v977 = vpop.f32.mrb[0].mxu0
    %v978 = vadd.f32 %v904, %v977
    %v979 = vpop.f32.mrb[0].mxu0
    %v980 = vadd.f32 %v908, %v979
    %981 = vmatprep.mubr.f32.mxu0 %v833
    %982 = vmatmul.mubr.f32.gmra.mrb[0].mxu0 %v831
    %v983 = vpop.f32.mrb[0].mxu0
    %v984 = vadd.f32 %v904, %v983
    %v985 = vpop.f32.mrb[0].mxu0
    %v986 = vadd.f32 %v908, %v985
    %987 = vdwg.mxu0
    %v988 = vadd.f32 %v165, %v978
    %v989 = vadd.f32 %v190, %v980
    %v990 = vadd.f32 %v183, %v984
    %v991 = vadd.f32 %v191, %v986
    %v992 = vld [vmem:[%s6] sm:$0x3]
    %v993 = vld [vmem:[%s7] sm:$0x3]
    %v994 = vadd.f32 %v988, %v989
    %995 = vadd.xlane.f32.xlu0 %v994
    %v996 = vpop.xlane.xlu0 %995
    %v997 = vadd.f32 %v990, %v991
    %998 = vadd.xlane.f32.xlu0 %v997
    %v999 = vpop.xlane.xlu0 %998
    %v1000 = vmul.f32 %v996, 0.0053475937
    %v1001 = vmul.f32 %v999, 0.0053475937
    %v1002 = vsub.f32 %v988, %v1000
    %v1003 = vsub.f32 %v989, %v1000
    %v1004 = vsub.f32 %v990, %v1001
    %v1005 = vsub.f32 %v991, %v1001
    %v1006 = vsel %vm195, 1, 0
    %v1007 = vsel %vm196, 1, 0
    %vm1008 = vcmp.eq.s32.totalorder %v1006, 1
    %vm1009 = vcmp.eq.s32.totalorder %v1007, 1
    %v1010 = vsel %vm1008, %v1002, 0.0
    %v1011 = vsel %vm1009, %v1003, 0.0
    %v1012 = vsel %vm1008, %v1004, 0.0
    %v1013 = vsel %vm1009, %v1005, 0.0
    %v1014 = vmul.f32 %v1010, %v1010
    %v1015 = vmul.f32 %v1011, %v1011
    %v1016 = vmul.f32 %v1012, %v1012
    %v1017 = vmul.f32 %v1013, %v1013
    %v1018 = vadd.f32 %v1014, %v1015
    %1019 = vadd.xlane.f32.xlu0 %v1018
    %v1020 = vpop.xlane.xlu0 %1019
    %v1021 = vadd.f32 %v1016, %v1017
    %1022 = vadd.xlane.f32.xlu0 %v1021
    %v1023 = vpop.xlane.xlu0 %1022
    %v1024 = vmul.f32 %v1020, 0.0053475937
    %v1025 = vmul.f32 %v1023, 0.0053475937
    %v1026 = vadd.f32 %v1024, 1e-05
    %v1027 = vadd.f32 %v1025, 1e-05
    %v1028 = vrsqrt.pop %v1026
    %v1029 = vrsqrt.pop %v1027
    %v1030 = vmul.f32 %v1010, %v1028
    %v1031 = vmul.f32 %v1011, %v1028
    %v1032 = vmul.f32 %v1012, %v1029
    %v1033 = vmul.f32 %v1013, %v1029
    %v1035 = vlaneseq
    %v1036 = vshrl.u32 %v1035, 7
    %v1037 = vsub.s32 0, %v1036
    %v1038 = vrot.slane %v992, %v1037
    %v1039 = vlaneseq
    %v1040 = vshrl.u32 %v1039, 7
    %v1041 = vsub.s32 1, %v1040
    %v1042 = vrot.slane %v992, %v1041
    %v1045 = vmul.f32 %v1030, %v1038
    %v1046 = vmul.f32 %v1031, %v1042
    %v1047 = vmul.f32 %v1032, %v1038
    %v1048 = vmul.f32 %v1033, %v1042
    %v1050 = vlaneseq
    %v1051 = vshrl.u32 %v1050, 7
    %v1052 = vsub.s32 0, %v1051
    %v1053 = vrot.slane %v993, %v1052
    %v1054 = vlaneseq
    %v1055 = vshrl.u32 %v1054, 7
    %v1056 = vsub.s32 1, %v1055
    %v1057 = vrot.slane %v993, %v1056
    %v1060 = vadd.f32 %v1045, %v1053
    %v1061 = vadd.f32 %v1046, %v1057
    %v1062 = vadd.f32 %v1047, %v1053
    %v1063 = vadd.f32 %v1048, %v1057
    %v1064 = vld [vmem:[#allocation10] sm:$0xff]
    %v1065 = vld [vmem:[#allocation10 + $0x8] sm:$0xff]
    %v1066 = vld [vmem:[#allocation10 + $0x10] sm:$0xff]
    %v1067 = vld [vmem:[#allocation10 + $0x18] sm:$0xff]
    %v1068 = vld [vmem:[#allocation10 + $0x20] sm:$0xff]
    %v1069 = vld [vmem:[#allocation10 + $0x28] sm:$0xff]
    %v1070 = vld [vmem:[#allocation10 + $0x30] sm:$0xff]
    %v1071 = vld [vmem:[#allocation10 + $0x38] sm:$0xff]
    %v1072 = vld [vmem:[#allocation10 + $0x40] sm:$0xff]
    %v1073 = vld [vmem:[#allocation10 + $0x48] sm:$0xff]
    %v1074 = vld [vmem:[#allocation10 + $0x50] sm:$0xff]
    %v1075 = vld [vmem:[#allocation10 + $0x58] sm:$0xff]
    %v1076 = vld [vmem:[#allocation10 + $0x60] sm:$0xff]
    %v1077 = vld [vmem:[#allocation10 + $0x68] sm:$0xff]
    %v1078 = vld [vmem:[#allocation10 + $0x70] sm:$0xff]
    %v1079 = vld [vmem:[#allocation10 + $0x78] sm:$0xff]
    %v1080 = vld [vmem:[#allocation10 + $0x80] sm:$0xff]
    %v1081 = vld [vmem:[#allocation10 + $0x88] sm:$0xff]
    %v1082 = vld [vmem:[#allocation10 + $0x90] sm:$0xff]
    %v1083 = vld [vmem:[#allocation10 + $0x98] sm:$0xff]
    %v1084 = vld [vmem:[#allocation10 + $0xa0] sm:$0xff]
    %v1085 = vld [vmem:[#allocation10 + $0xa8] sm:$0xff]
    %v1086 = vld [vmem:[#allocation10 + $0xb0] sm:$0xff]
    %v1087 = vld [vmem:[#allocation10 + $0xb8] sm:$0xff]
    %v1088 = vld [vmem:[#allocation10 + $0xc0] sm:$0xff]
    %v1089 = vld [vmem:[#allocation10 + $0xc8] sm:$0xff]
    %v1090 = vld [vmem:[#allocation10 + $0xd0] sm:$0xff]
    %v1091 = vld [vmem:[#allocation10 + $0xd8] sm:$0xff]
    %v1092 = vld [vmem:[#allocation10 + $0xe0] sm:$0xff]
    %v1093 = vld [vmem:[#allocation10 + $0xe8] sm:$0xff]
    %v1094 = vld [vmem:[#allocation10 + $0xf0] sm:$0xff]
    %v1095 = vld [vmem:[#allocation10 + $0xf8] sm:$0xff]
    %v1096 = vld [vmem:[#allocation10 + $0x100] sm:$0xff]
    %v1097 = vld [vmem:[#allocation10 + $0x108] sm:$0xff]
    %v1098 = vld [vmem:[#allocation10 + $0x110] sm:$0xff]
    %v1099 = vld [vmem:[#allocation10 + $0x118] sm:$0xff]
    %v1100 = vld [vmem:[#allocation10 + $0x120] sm:$0xff]
    %v1101 = vld [vmem:[#allocation10 + $0x128] sm:$0xff]
    %v1102 = vld [vmem:[#allocation10 + $0x130] sm:$0xff]
    %v1103 = vld [vmem:[#allocation10 + $0x138] sm:$0xff]
    %v1104 = vld [vmem:[#allocation10 + $0x140] sm:$0xff]
    %v1105 = vld [vmem:[#allocation10 + $0x148] sm:$0xff]
    %v1106 = vld [vmem:[#allocation10 + $0x150] sm:$0xff]
    %v1107 = vld [vmem:[#allocation10 + $0x158] sm:$0xff]
    %v1108 = vld [vmem:[#allocation10 + $0x160] sm:$0xff]
    %v1109 = vld [vmem:[#allocation10 + $0x168] sm:$0xff]
    %v1110 = vld [vmem:[#allocation10 + $0x170] sm:$0xff]
    %v1111 = vld [vmem:[#allocation10 + $0x178] sm:$0xff]
    %v1112 = vld [vmem:[#allocation10 + $0x180] sm:$0xff]
    %v1113 = vld [vmem:[#allocation10 + $0x188] sm:$0xff]
    %v1114 = vld [vmem:[#allocation10 + $0x190] sm:$0xff]
    %v1115 = vld [vmem:[#allocation10 + $0x198] sm:$0xff]
    %v1116 = vld [vmem:[#allocation10 + $0x1a0] sm:$0xff]
    %v1117 = vld [vmem:[#allocation10 + $0x1a8] sm:$0xff]
    %v1118 = vld [vmem:[#allocation10 + $0x1b0] sm:$0xff]
    %v1119 = vld [vmem:[#allocation10 + $0x1b8] sm:$0xff]
    %v1120 = vld [vmem:[#allocation10 + $0x1c0] sm:$0xff]
    %v1121 = vld [vmem:[#allocation10 + $0x1c8] sm:$0xff]
    %v1122 = vld [vmem:[#allocation10 + $0x1d0] sm:$0xff]
    %v1123 = vld [vmem:[#allocation10 + $0x1d8] sm:$0xff]
    %v1124 = vld [vmem:[#allocation10 + $0x1e0] sm:$0xff]
    %v1125 = vld [vmem:[#allocation10 + $0x1e8] sm:$0xff]
    %v1126 = vld [vmem:[#allocation10 + $0x1f0] sm:$0xff]
    %v1127 = vld [vmem:[#allocation10 + $0x1f8] sm:$0xff]
    %v1128 = vld [vmem:[#allocation10 + $0x200] sm:$0xff]
    %v1129 = vld [vmem:[#allocation10 + $0x208] sm:$0xff]
    %v1130 = vld [vmem:[#allocation10 + $0x210] sm:$0xff]
    %v1131 = vld [vmem:[#allocation10 + $0x218] sm:$0xff]
    %v1132 = vld [vmem:[#allocation10 + $0x220] sm:$0xff]
    %v1133 = vld [vmem:[#allocation10 + $0x228] sm:$0xff]
    %v1134 = vld [vmem:[#allocation10 + $0x230] sm:$0xff]
    %v1135 = vld [vmem:[#allocation10 + $0x238] sm:$0xff]
    %v1136 = vld [vmem:[#allocation10 + $0x240] sm:$0xff]
    %v1137 = vld [vmem:[#allocation10 + $0x248] sm:$0xff]
    %v1138 = vld [vmem:[#allocation10 + $0x250] sm:$0xff]
    %v1139 = vld [vmem:[#allocation10 + $0x258] sm:$0xff]
    %v1140 = vld [vmem:[#allocation10 + $0x260] sm:$0xff]
    %v1141 = vld [vmem:[#allocation10 + $0x268] sm:$0xff]
    %v1142 = vld [vmem:[#allocation10 + $0x270] sm:$0xff]
    %v1143 = vld [vmem:[#allocation10 + $0x278] sm:$0xff]
    %v1144 = vld [vmem:[#allocation10 + $0x280] sm:$0xff]
    %v1145 = vld [vmem:[#allocation10 + $0x288] sm:$0xff]
    %v1146 = vld [vmem:[#allocation10 + $0x290] sm:$0xff]
    %v1147 = vld [vmem:[#allocation10 + $0x298] sm:$0xff]
    %v1148 = vld [vmem:[#allocation10 + $0x2a0] sm:$0xff]
    %v1149 = vld [vmem:[#allocation10 + $0x2a8] sm:$0xff]
    %v1150 = vld [vmem:[#allocation10 + $0x2b0] sm:$0xff]
    %v1151 = vld [vmem:[#allocation10 + $0x2b8] sm:$0xff]
    %v1152 = vld [vmem:[#allocation10 + $0x2c0] sm:$0xff]
    %v1153 = vld [vmem:[#allocation10 + $0x2c8] sm:$0xff]
    %v1154 = vld [vmem:[#allocation10 + $0x2d0] sm:$0xff]
    %v1155 = vld [vmem:[#allocation10 + $0x2d8] sm:$0xff]
    %v1156 = vld [vmem:[#allocation10 + $0x2e0] sm:$0xff]
    %v1157 = vld [vmem:[#allocation10 + $0x2e8] sm:$0xff]
    %v1158 = vld [vmem:[#allocation10 + $0x2f0] sm:$0xff]
    %v1159 = vld [vmem:[#allocation10 + $0x2f8] sm:$0xff]
    %v1160 = vld [vmem:[#allocation10 + $0x300] sm:$0xff]
    %v1161 = vld [vmem:[#allocation10 + $0x308] sm:$0xff]
    %v1162 = vld [vmem:[#allocation10 + $0x310] sm:$0xff]
    %v1163 = vld [vmem:[#allocation10 + $0x318] sm:$0xff]
    %v1164 = vld [vmem:[#allocation10 + $0x320] sm:$0xff]
    %v1165 = vld [vmem:[#allocation10 + $0x328] sm:$0xff]
    %v1166 = vld [vmem:[#allocation10 + $0x330] sm:$0xff]
    %v1167 = vld [vmem:[#allocation10 + $0x338] sm:$0xff]
    %v1168 = vld [vmem:[#allocation10 + $0x340] sm:$0xff]
    %v1169 = vld [vmem:[#allocation10 + $0x348] sm:$0xff]
    %v1170 = vld [vmem:[#allocation10 + $0x350] sm:$0xff]
    %v1171 = vld [vmem:[#allocation10 + $0x358] sm:$0xff]
    %v1172 = vld [vmem:[#allocation10 + $0x360] sm:$0xff]
    %v1173 = vld [vmem:[#allocation10 + $0x368] sm:$0xff]
    %v1174 = vld [vmem:[#allocation10 + $0x370] sm:$0xff]
    %v1175 = vld [vmem:[#allocation10 + $0x378] sm:$0xff]
    %v1176 = vld [vmem:[#allocation10 + $0x380] sm:$0xff]
    %v1177 = vld [vmem:[#allocation10 + $0x388] sm:$0xff]
    %v1178 = vld [vmem:[#allocation10 + $0x390] sm:$0xff]
    %v1179 = vld [vmem:[#allocation10 + $0x398] sm:$0xff]
    %v1180 = vld [vmem:[#allocation10 + $0x3a0] sm:$0xff]
    %v1181 = vld [vmem:[#allocation10 + $0x3a8] sm:$0xff]
    %v1182 = vld [vmem:[#allocation10 + $0x3b0] sm:$0xff]
    %v1183 = vld [vmem:[#allocation10 + $0x3b8] sm:$0xff]
    %v1184 = vld [vmem:[#allocation10 + $0x3c0] sm:$0xff]
    %v1185 = vld [vmem:[#allocation10 + $0x3c8] sm:$0xff]
    %v1186 = vld [vmem:[#allocation10 + $0x3d0] sm:$0xff]
    %v1187 = vld [vmem:[#allocation10 + $0x3d8] sm:$0xff]
    %v1188 = vld [vmem:[#allocation10 + $0x3e0] sm:$0xff]
    %v1189 = vld [vmem:[#allocation10 + $0x3e8] sm:$0xff]
    %v1190 = vld [vmem:[#allocation10 + $0x3f0] sm:$0xff]
    %v1191 = vld [vmem:[#allocation10 + $0x3f8] sm:$0xff]
    %v1192 = vld [vmem:[%s9] sm:$0xf]
    %v1194 = vlaneseq
    %v1195 = vshrl.u32 %v1194, 7
    %v1196 = vsub.s32 0, %v1195
    %v1197 = vrot.slane %v1192, %v1196
    %v1198 = vlaneseq
    %v1199 = vshrl.u32 %v1198, 7
    %v1200 = vsub.s32 1, %v1199
    %v1201 = vrot.slane %v1192, %v1200
    %v1202 = vlaneseq
    %v1203 = vshrl.u32 %v1202, 7
    %v1204 = vsub.s32 2, %v1203
    %v1205 = vrot.slane %v1192, %v1204
    %v1206 = vlaneseq
    %v1207 = vshrl.u32 %v1206, 7
    %v1208 = vsub.s32 3, %v1207
    %v1209 = vrot.slane %v1192, %v1208
    %1214 = vmatprep.subr.mxu0 %v1065
    %1215 = vmatpush1.msra.mxu0 %v1064
    %1216 = vmatprep.subr.mxu0 %v1069
    %1217 = vmatpush1.msra.mxu0 %v1068
    %1218 = vmatprep.subr.mxu0 %v1073
    %1219 = vmatpush1.msra.mxu0 %v1072
    %1220 = vmatprep.subr.mxu0 %v1077
    %1221 = vmatpush1.msra.mxu0 %v1076
    %1222 = vmatprep.subr.mxu0 %v1081
    %1223 = vmatpush1.msra.mxu0 %v1080
    %1224 = vmatprep.subr.mxu0 %v1085
    %1225 = vmatpush1.msra.mxu0 %v1084
    %1226 = vmatprep.subr.mxu0 %v1089
    %1227 = vmatpush1.msra.mxu0 %v1088
    %1228 = vmatprep.subr.mxu0 %v1093
    %1229 = vmatpush1.msra.mxu0 %v1092
    %1230 = vmatprep.subr.mxu0 %v1097
    %1231 = vmatpush1.msra.mxu0 %v1096
    %1232 = vmatprep.subr.mxu0 %v1101
    %1233 = vmatpush1.msra.mxu0 %v1100
    %1234 = vmatprep.subr.mxu0 %v1105
    %1235 = vmatpush1.msra.mxu0 %v1104
    %1236 = vmatprep.subr.mxu0 %v1109
    %1237 = vmatpush1.msra.mxu0 %v1108
    %1238 = vmatprep.subr.mxu0 %v1113
    %1239 = vmatpush1.msra.mxu0 %v1112
    %1240 = vmatprep.subr.mxu0 %v1117
    %1241 = vmatpush1.msra.mxu0 %v1116
    %1242 = vmatprep.subr.mxu0 %v1121
    %1243 = vmatpush1.msra.mxu0 %v1120
    %1244 = vmatprep.subr.mxu0 %v1125
    %1245 = vmatpush1.msra.mxu0 %v1124
    %1246 = vmatprep.subr.mxu0 %v1129
    %1247 = vmatpush1.msra.mxu0 %v1128
    %1248 = vmatprep.subr.mxu0 %v1133
    %1249 = vmatpush1.msra.mxu0 %v1132
    %1250 = vmatprep.subr.mxu0 %v1137
    %1251 = vmatpush1.msra.mxu0 %v1136
    %1252 = vmatprep.subr.mxu0 %v1141
    %1253 = vmatpush1.msra.mxu0 %v1140
    %1254 = vmatprep.subr.mxu0 %v1145
    %1255 = vmatpush1.msra.mxu0 %v1144
    %1256 = vmatprep.subr.mxu0 %v1149
    %1257 = vmatpush1.msra.mxu0 %v1148
    %1258 = vmatprep.subr.mxu0 %v1153
    %1259 = vmatpush1.msra.mxu0 %v1152
    %1260 = vmatprep.subr.mxu0 %v1157
    %1261 = vmatpush1.msra.mxu0 %v1156
    %1262 = vmatprep.subr.mxu0 %v1161
    %1263 = vmatpush1.msra.mxu0 %v1160
    %1264 = vmatprep.subr.mxu0 %v1165
    %1265 = vmatpush1.msra.mxu0 %v1164
    %1266 = vmatprep.subr.mxu0 %v1169
    %1267 = vmatpush1.msra.mxu0 %v1168
    %1268 = vmatprep.subr.mxu0 %v1173
    %1269 = vmatpush1.msra.mxu0 %v1172
    %1270 = vmatprep.subr.mxu0 %v1177
    %1271 = vmatpush1.msra.mxu0 %v1176
    %1272 = vmatprep.subr.mxu0 %v1181
    %1273 = vmatpush1.msra.mxu0 %v1180
    %1274 = vmatprep.subr.mxu0 %v1185
    %1275 = vmatpush1.msra.mxu0 %v1184
    %1276 = vmatprep.subr.mxu0 %v1189
    %1277 = vmatpush1.msra.mxu0 %v1188
    %1278 = vmatprep.mubr.f32.mxu0 %v1061
    %1279 = vmatmul.mubr.f32.gmra.mrb[0].mxu0 %v1060
    %v1280 = vpop.f32.mrb[0].mxu0
    %v1281 = vadd.f32 %v1197, %v1280
    %v1282 = vpop.f32.mrb[0].mxu0
    %v1283 = vadd.f32 %v1201, %v1282
    %1284 = vmatprep.mubr.f32.mxu0 %v1063
    %1285 = vmatmul.mubr.f32.gmra.mrb[0].mxu0 %v1062
    %v1286 = vpop.f32.mrb[0].mxu0
    %v1287 = vadd.f32 %v1197, %v1286
    %v1288 = vpop.f32.mrb[0].mxu0
    %v1289 = vadd.f32 %v1201, %v1288
    %1290 = vdwg.mxu0
    %1291 = vmatprep.subr.mxu0 %v1067
    %1292 = vmatpush1.msra.mxu0 %v1066
    %1293 = vmatprep.subr.mxu0 %v1071
    %1294 = vmatpush1.msra.mxu0 %v1070
    %1295 = vmatprep.subr.mxu0 %v1075
    %1296 = vmatpush1.msra.mxu0 %v1074
    %1297 = vmatprep.subr.mxu0 %v1079
    %1298 = vmatpush1.msra.mxu0 %v1078
    %1299 = vmatprep.subr.mxu0 %v1083
    %1300 = vmatpush1.msra.mxu0 %v1082
    %1301 = vmatprep.subr.mxu0 %v1087
    %1302 = vmatpush1.msra.mxu0 %v1086
    %1303 = vmatprep.subr.mxu0 %v1091
    %1304 = vmatpush1.msra.mxu0 %v1090
    %1305 = vmatprep.subr.mxu0 %v1095
    %1306 = vmatpush1.msra.mxu0 %v1094
    %1307 = vmatprep.subr.mxu0 %v1099
    %1308 = vmatpush1.msra.mxu0 %v1098
    %1309 = vmatprep.subr.mxu0 %v1103
    %1310 = vmatpush1.msra.mxu0 %v1102
    %1311 = vmatprep.subr.mxu0 %v1107
    %1312 = vmatpush1.msra.mxu0 %v1106
    %1313 = vmatprep.subr.mxu0 %v1111
    %1314 = vmatpush1.msra.mxu0 %v1110
    %1315 = vmatprep.subr.mxu0 %v1115
    %1316 = vmatpush1.msra.mxu0 %v1114
    %1317 = vmatprep.subr.mxu0 %v1119
    %1318 = vmatpush1.msra.mxu0 %v1118
    %1319 = vmatprep.subr.mxu0 %v1123
    %1320 = vmatpush1.msra.mxu0 %v1122
    %1321 = vmatprep.subr.mxu0 %v1127
    %1322 = vmatpush1.msra.mxu0 %v1126
    %1323 = vmatprep.subr.mxu0 %v1131
    %1324 = vmatpush1.msra.mxu0 %v1130
    %1325 = vmatprep.subr.mxu0 %v1135
    %1326 = vmatpush1.msra.mxu0 %v1134
    %1327 = vmatprep.subr.mxu0 %v1139
    %1328 = vmatpush1.msra.mxu0 %v1138
    %1329 = vmatprep.subr.mxu0 %v1143
    %1330 = vmatpush1.msra.mxu0 %v1142
    %1331 = vmatprep.subr.mxu0 %v1147
    %1332 = vmatpush1.msra.mxu0 %v1146
    %1333 = vmatprep.subr.mxu0 %v1151
    %1334 = vmatpush1.msra.mxu0 %v1150
    %1335 = vmatprep.subr.mxu0 %v1155
    %1336 = vmatpush1.msra.mxu0 %v1154
    %1337 = vmatprep.subr.mxu0 %v1159
    %1338 = vmatpush1.msra.mxu0 %v1158
    %1339 = vmatprep.subr.mxu0 %v1163
    %1340 = vmatpush1.msra.mxu0 %v1162
    %1341 = vmatprep.subr.mxu0 %v1167
    %1342 = vmatpush1.msra.mxu0 %v1166
    %1343 = vmatprep.subr.mxu0 %v1171
    %1344 = vmatpush1.msra.mxu0 %v1170
    %1345 = vmatprep.subr.mxu0 %v1175
    %1346 = vmatpush1.msra.mxu0 %v1174
    %1347 = vmatprep.subr.mxu0 %v1179
    %1348 = vmatpush1.msra.mxu0 %v1178
    %1349 = vmatprep.subr.mxu0 %v1183
    %1350 = vmatpush1.msra.mxu0 %v1182
    %1351 = vmatprep.subr.mxu0 %v1187
    %1352 = vmatpush1.msra.mxu0 %v1186
    %1353 = vmatprep.subr.mxu0 %v1191
    %1354 = vmatpush1.msra.mxu0 %v1190
    %1355 = vmatprep.mubr.f32.mxu0 %v1061
    %1356 = vmatmul.mubr.f32.gmra.mrb[0].mxu0 %v1060
    %v1357 = vpop.f32.mrb[0].mxu0
    %v1358 = vadd.f32 %v1205, %v1357
    %v1359 = vpop.f32.mrb[0].mxu0
    %v1360 = vadd.f32 %v1209, %v1359
    %1361 = vmatprep.mubr.f32.mxu0 %v1063
    %1362 = vmatmul.mubr.f32.gmra.mrb[0].mxu0 %v1062
    %v1363 = vpop.f32.mrb[0].mxu0
    %v1364 = vadd.f32 %v1205, %v1363
    %v1365 = vpop.f32.mrb[0].mxu0
    %v1366 = vadd.f32 %v1209, %v1365
    %1367 = vdwg.mxu0
    %v1368 = vmax.f32 %v1281, 0.0
    %v1369 = vmax.f32 %v1283, 0.0
    %v1370 = vmax.f32 %v1358, 0.0
    %v1371 = vmax.f32 %v1360, 0.0
    %v1372 = vmax.f32 %v1287, 0.0
    %v1373 = vmax.f32 %v1289, 0.0
    %v1374 = vmax.f32 %v1364, 0.0
    %v1375 = vmax.f32 %v1366, 0.0
    %v1376 = vld [vmem:[#allocation11] sm:$0xff]
    %v1377 = vld [vmem:[#allocation11 + $0x8] sm:$0xff]
    %v1378 = vld [vmem:[#allocation11 + $0x10] sm:$0xff]
    %v1379 = vld [vmem:[#allocation11 + $0x18] sm:$0xff]
    %v1380 = vld [vmem:[#allocation11 + $0x20] sm:$0xff]
    %v1381 = vld [vmem:[#allocation11 + $0x28] sm:$0xff]
    %v1382 = vld [vmem:[#allocation11 + $0x30] sm:$0xff]
    %v1383 = vld [vmem:[#allocation11 + $0x38] sm:$0xff]
    %v1384 = vld [vmem:[#allocation11 + $0x40] sm:$0xff]
    %v1385 = vld [vmem:[#allocation11 + $0x48] sm:$0xff]
    %v1386 = vld [vmem:[#allocation11 + $0x50] sm:$0xff]
    %v1387 = vld [vmem:[#allocation11 + $0x58] sm:$0xff]
    %v1388 = vld [vmem:[#allocation11 + $0x60] sm:$0xff]
    %v1389 = vld [vmem:[#allocation11 + $0x68] sm:$0xff]
    %v1390 = vld [vmem:[#allocation11 + $0x70] sm:$0xff]
    %v1391 = vld [vmem:[#allocation11 + $0x78] sm:$0xff]
    %v1392 = vld [vmem:[#allocation11 + $0x80] sm:$0xff]
    %v1393 = vld [vmem:[#allocation11 + $0x88] sm:$0xff]
    %v1394 = vld [vmem:[#allocation11 + $0x90] sm:$0xff]
    %v1395 = vld [vmem:[#allocation11 + $0x98] sm:$0xff]
    %v1396 = vld [vmem:[#allocation11 + $0xa0] sm:$0xff]
    %v1397 = vld [vmem:[#allocation11 + $0xa8] sm:$0xff]
    %v1398 = vld [vmem:[#allocation11 + $0xb0] sm:$0xff]
    %v1399 = vld [vmem:[#allocation11 + $0xb8] sm:$0xff]
    %v1400 = vld [vmem:[#allocation11 + $0xc0] sm:$0xff]
    %v1401 = vld [vmem:[#allocation11 + $0xc8] sm:$0xff]
    %v1402 = vld [vmem:[#allocation11 + $0xd0] sm:$0xff]
    %v1403 = vld [vmem:[#allocation11 + $0xd8] sm:$0xff]
    %v1404 = vld [vmem:[#allocation11 + $0xe0] sm:$0xff]
    %v1405 = vld [vmem:[#allocation11 + $0xe8] sm:$0xff]
    %v1406 = vld [vmem:[#allocation11 + $0xf0] sm:$0xff]
    %v1407 = vld [vmem:[#allocation11 + $0xf8] sm:$0xff]
    %v1408 = vld [vmem:[#allocation11 + $0x100] sm:$0xff]
    %v1409 = vld [vmem:[#allocation11 + $0x108] sm:$0xff]
    %v1410 = vld [vmem:[#allocation11 + $0x110] sm:$0xff]
    %v1411 = vld [vmem:[#allocation11 + $0x118] sm:$0xff]
    %v1412 = vld [vmem:[#allocation11 + $0x120] sm:$0xff]
    %v1413 = vld [vmem:[#allocation11 + $0x128] sm:$0xff]
    %v1414 = vld [vmem:[#allocation11 + $0x130] sm:$0xff]
    %v1415 = vld [vmem:[#allocation11 + $0x138] sm:$0xff]
    %v1416 = vld [vmem:[#allocation11 + $0x140] sm:$0xff]
    %v1417 = vld [vmem:[#allocation11 + $0x148] sm:$0xff]
    %v1418 = vld [vmem:[#allocation11 + $0x150] sm:$0xff]
    %v1419 = vld [vmem:[#allocation11 + $0x158] sm:$0xff]
    %v1420 = vld [vmem:[#allocation11 + $0x160] sm:$0xff]
    %v1421 = vld [vmem:[#allocation11 + $0x168] sm:$0xff]
    %v1422 = vld [vmem:[#allocation11 + $0x170] sm:$0xff]
    %v1423 = vld [vmem:[#allocation11 + $0x178] sm:$0xff]
    %v1424 = vld [vmem:[#allocation11 + $0x180] sm:$0xff]
    %v1425 = vld [vmem:[#allocation11 + $0x188] sm:$0xff]
    %v1426 = vld [vmem:[#allocation11 + $0x190] sm:$0xff]
    %v1427 = vld [vmem:[#allocation11 + $0x198] sm:$0xff]
    %v1428 = vld [vmem:[#allocation11 + $0x1a0] sm:$0xff]
    %v1429 = vld [vmem:[#allocation11 + $0x1a8] sm:$0xff]
    %v1430 = vld [vmem:[#allocation11 + $0x1b0] sm:$0xff]
    %v1431 = vld [vmem:[#allocation11 + $0x1b8] sm:$0xff]
    %v1432 = vld [vmem:[#allocation11 + $0x1c0] sm:$0xff]
    %v1433 = vld [vmem:[#allocation11 + $0x1c8] sm:$0xff]
    %v1434 = vld [vmem:[#allocation11 + $0x1d0] sm:$0xff]
    %v1435 = vld [vmem:[#allocation11 + $0x1d8] sm:$0xff]
    %v1436 = vld [vmem:[#allocation11 + $0x1e0] sm:$0xff]
    %v1437 = vld [vmem:[#allocation11 + $0x1e8] sm:$0xff]
    %v1438 = vld [vmem:[#allocation11 + $0x1f0] sm:$0xff]
    %v1439 = vld [vmem:[#allocation11 + $0x1f8] sm:$0xff]
    %v1440 = vld [vmem:[#allocation11 + $0x200] sm:$0xff]
    %v1441 = vld [vmem:[#allocation11 + $0x208] sm:$0xff]
    %v1442 = vld [vmem:[#allocation11 + $0x210] sm:$0xff]
    %v1443 = vld [vmem:[#allocation11 + $0x218] sm:$0xff]
    %v1444 = vld [vmem:[#allocation11 + $0x220] sm:$0xff]
    %v1445 = vld [vmem:[#allocation11 + $0x228] sm:$0xff]
    %v1446 = vld [vmem:[#allocation11 + $0x230] sm:$0xff]
    %v1447 = vld [vmem:[#allocation11 + $0x238] sm:$0xff]
    %v1448 = vld [vmem:[#allocation11 + $0x240] sm:$0xff]
    %v1449 = vld [vmem:[#allocation11 + $0x248] sm:$0xff]
    %v1450 = vld [vmem:[#allocation11 + $0x250] sm:$0xff]
    %v1451 = vld [vmem:[#allocation11 + $0x258] sm:$0xff]
    %v1452 = vld [vmem:[#allocation11 + $0x260] sm:$0xff]
    %v1453 = vld [vmem:[#allocation11 + $0x268] sm:$0xff]
    %v1454 = vld [vmem:[#allocation11 + $0x270] sm:$0xff]
    %v1455 = vld [vmem:[#allocation11 + $0x278] sm:$0xff]
    %v1456 = vld [vmem:[#allocation11 + $0x280] sm:$0xff]
    %v1457 = vld [vmem:[#allocation11 + $0x288] sm:$0xff]
    %v1458 = vld [vmem:[#allocation11 + $0x290] sm:$0xff]
    %v1459 = vld [vmem:[#allocation11 + $0x298] sm:$0xff]
    %v1460 = vld [vmem:[#allocation11 + $0x2a0] sm:$0xff]
    %v1461 = vld [vmem:[#allocation11 + $0x2a8] sm:$0xff]
    %v1462 = vld [vmem:[#allocation11 + $0x2b0] sm:$0xff]
    %v1463 = vld [vmem:[#allocation11 + $0x2b8] sm:$0xff]
    %v1464 = vld [vmem:[#allocation11 + $0x2c0] sm:$0xff]
    %v1465 = vld [vmem:[#allocation11 + $0x2c8] sm:$0xff]
    %v1466 = vld [vmem:[#allocation11 + $0x2d0] sm:$0xff]
    %v1467 = vld [vmem:[#allocation11 + $0x2d8] sm:$0xff]
    %v1468 = vld [vmem:[#allocation11 + $0x2e0] sm:$0xff]
    %v1469 = vld [vmem:[#allocation11 + $0x2e8] sm:$0xff]
    %v1470 = vld [vmem:[#allocation11 + $0x2f0] sm:$0xff]
    %v1471 = vld [vmem:[#allocation11 + $0x2f8] sm:$0xff]
    %v1472 = vld [vmem:[#allocation11 + $0x300] sm:$0xff]
    %v1473 = vld [vmem:[#allocation11 + $0x308] sm:$0xff]
    %v1474 = vld [vmem:[#allocation11 + $0x310] sm:$0xff]
    %v1475 = vld [vmem:[#allocation11 + $0x318] sm:$0xff]
    %v1476 = vld [vmem:[#allocation11 + $0x320] sm:$0xff]
    %v1477 = vld [vmem:[#allocation11 + $0x328] sm:$0xff]
    %v1478 = vld [vmem:[#allocation11 + $0x330] sm:$0xff]
    %v1479 = vld [vmem:[#allocation11 + $0x338] sm:$0xff]
    %v1480 = vld [vmem:[#allocation11 + $0x340] sm:$0xff]
    %v1481 = vld [vmem:[#allocation11 + $0x348] sm:$0xff]
    %v1482 = vld [vmem:[#allocation11 + $0x350] sm:$0xff]
    %v1483 = vld [vmem:[#allocation11 + $0x358] sm:$0xff]
    %v1484 = vld [vmem:[#allocation11 + $0x360] sm:$0xff]
    %v1485 = vld [vmem:[#allocation11 + $0x368] sm:$0xff]
    %v1486 = vld [vmem:[#allocation11 + $0x370] sm:$0xff]
    %v1487 = vld [vmem:[#allocation11 + $0x378] sm:$0xff]
    %v1488 = vld [vmem:[#allocation11 + $0x380] sm:$0xff]
    %v1489 = vld [vmem:[#allocation11 + $0x388] sm:$0xff]
    %v1490 = vld [vmem:[#allocation11 + $0x390] sm:$0xff]
    %v1491 = vld [vmem:[#allocation11 + $0x398] sm:$0xff]
    %v1492 = vld [vmem:[#allocation11 + $0x3a0] sm:$0xff]
    %v1493 = vld [vmem:[#allocation11 + $0x3a8] sm:$0xff]
    %v1494 = vld [vmem:[#allocation11 + $0x3b0] sm:$0xff]
    %v1495 = vld [vmem:[#allocation11 + $0x3b8] sm:$0xff]
    %v1496 = vld [vmem:[#allocation11 + $0x3c0] sm:$0xff]
    %v1497 = vld [vmem:[#allocation11 + $0x3c8] sm:$0xff]
    %v1498 = vld [vmem:[#allocation11 + $0x3d0] sm:$0xff]
    %v1499 = vld [vmem:[#allocation11 + $0x3d8] sm:$0xff]
    %v1500 = vld [vmem:[#allocation11 + $0x3e0] sm:$0xff]
    %v1501 = vld [vmem:[#allocation11 + $0x3e8] sm:$0xff]
    %v1502 = vld [vmem:[#allocation11 + $0x3f0] sm:$0xff]
    %v1503 = vld [vmem:[#allocation11 + $0x3f8] sm:$0xff]
    %v1504 = vld [vmem:[%s11] sm:$0x3]
    %v1506 = vlaneseq
    %v1507 = vshrl.u32 %v1506, 7
    %v1508 = vsub.s32 0, %v1507
    %v1509 = vrot.slane %v1504, %v1508
    %v1510 = vlaneseq
    %v1511 = vshrl.u32 %v1510, 7
    %v1512 = vsub.s32 1, %v1511
    %v1513 = vrot.slane %v1504, %v1512
    %1516 = vmatprep.subr.mxu0 %v1377
    %1517 = vmatpush1.msra.mxu0 %v1376
    %1518 = vmatprep.subr.mxu0 %v1379
    %1519 = vmatpush1.msra.mxu0 %v1378
    %1520 = vmatprep.subr.mxu0 %v1381
    %1521 = vmatpush1.msra.mxu0 %v1380
    %1522 = vmatprep.subr.mxu0 %v1383
    %1523 = vmatpush1.msra.mxu0 %v1382
    %1524 = vmatprep.subr.mxu0 %v1385
    %1525 = vmatpush1.msra.mxu0 %v1384
    %1526 = vmatprep.subr.mxu0 %v1387
    %1527 = vmatpush1.msra.mxu0 %v1386
    %1528 = vmatprep.subr.mxu0 %v1389
    %1529 = vmatpush1.msra.mxu0 %v1388
    %1530 = vmatprep.subr.mxu0 %v1391
    %1531 = vmatpush1.msra.mxu0 %v1390
    %1532 = vmatprep.subr.mxu0 %v1393
    %1533 = vmatpush1.msra.mxu0 %v1392
    %1534 = vmatprep.subr.mxu0 %v1395
    %1535 = vmatpush1.msra.mxu0 %v1394
    %1536 = vmatprep.subr.mxu0 %v1397
    %1537 = vmatpush1.msra.mxu0 %v1396
    %1538 = vmatprep.subr.mxu0 %v1399
    %1539 = vmatpush1.msra.mxu0 %v1398
    %1540 = vmatprep.subr.mxu0 %v1401
    %1541 = vmatpush1.msra.mxu0 %v1400
    %1542 = vmatprep.subr.mxu0 %v1403
    %1543 = vmatpush1.msra.mxu0 %v1402
    %1544 = vmatprep.subr.mxu0 %v1405
    %1545 = vmatpush1.msra.mxu0 %v1404
    %1546 = vmatprep.subr.mxu0 %v1407
    %1547 = vmatpush1.msra.mxu0 %v1406
    %1548 = vmatprep.subr.mxu0 %v1409
    %1549 = vmatpush1.msra.mxu0 %v1408
    %1550 = vmatprep.subr.mxu0 %v1411
    %1551 = vmatpush1.msra.mxu0 %v1410
    %1552 = vmatprep.subr.mxu0 %v1413
    %1553 = vmatpush1.msra.mxu0 %v1412
    %1554 = vmatprep.subr.mxu0 %v1415
    %1555 = vmatpush1.msra.mxu0 %v1414
    %1556 = vmatprep.subr.mxu0 %v1417
    %1557 = vmatpush1.msra.mxu0 %v1416
    %1558 = vmatprep.subr.mxu0 %v1419
    %1559 = vmatpush1.msra.mxu0 %v1418
    %1560 = vmatprep.subr.mxu0 %v1421
    %1561 = vmatpush1.msra.mxu0 %v1420
    %1562 = vmatprep.subr.mxu0 %v1423
    %1563 = vmatpush1.msra.mxu0 %v1422
    %1564 = vmatprep.subr.mxu0 %v1425
    %1565 = vmatpush1.msra.mxu0 %v1424
    %1566 = vmatprep.subr.mxu0 %v1427
    %1567 = vmatpush1.msra.mxu0 %v1426
    %1568 = vmatprep.subr.mxu0 %v1429
    %1569 = vmatpush1.msra.mxu0 %v1428
    %1570 = vmatprep.subr.mxu0 %v1431
    %1571 = vmatpush1.msra.mxu0 %v1430
    %1572 = vmatprep.subr.mxu0 %v1433
    %1573 = vmatpush1.msra.mxu0 %v1432
    %1574 = vmatprep.subr.mxu0 %v1435
    %1575 = vmatpush1.msra.mxu0 %v1434
    %1576 = vmatprep.subr.mxu0 %v1437
    %1577 = vmatpush1.msra.mxu0 %v1436
    %1578 = vmatprep.subr.mxu0 %v1439
    %1579 = vmatpush1.msra.mxu0 %v1438
    %1580 = vmatprep.mubr.f32.mxu0 %v1369
    %1581 = vmatmul.mubr.f32.gmra.mrb[0].mxu0 %v1368
    %v1582 = vpop.f32.mrb[0].mxu0
    %v1583 = vadd.f32 %v1509, %v1582
    %v1584 = vpop.f32.mrb[0].mxu0
    %v1585 = vadd.f32 %v1513, %v1584
    %1586 = vmatprep.mubr.f32.mxu0 %v1373
    %1587 = vmatmul.mubr.f32.gmra.mrb[0].mxu0 %v1372
    %v1588 = vpop.f32.mrb[0].mxu0
    %v1589 = vadd.f32 %v1509, %v1588
    %v1590 = vpop.f32.mrb[0].mxu0
    %v1591 = vadd.f32 %v1513, %v1590
    %1592 = vdwg.mxu0
    %1593 = vmatprep.subr.mxu0 %v1441
    %1594 = vmatpush1.msra.mxu0 %v1440
    %1595 = vmatprep.subr.mxu0 %v1443
    %1596 = vmatpush1.msra.mxu0 %v1442
    %1597 = vmatprep.subr.mxu0 %v1445
    %1598 = vmatpush1.msra.mxu0 %v1444
    %1599 = vmatprep.subr.mxu0 %v1447
    %1600 = vmatpush1.msra.mxu0 %v1446
    %1601 = vmatprep.subr.mxu0 %v1449
    %1602 = vmatpush1.msra.mxu0 %v1448
    %1603 = vmatprep.subr.mxu0 %v1451
    %1604 = vmatpush1.msra.mxu0 %v1450
    %1605 = vmatprep.subr.mxu0 %v1453
    %1606 = vmatpush1.msra.mxu0 %v1452
    %1607 = vmatprep.subr.mxu0 %v1455
    %1608 = vmatpush1.msra.mxu0 %v1454
    %1609 = vmatprep.subr.mxu0 %v1457
    %1610 = vmatpush1.msra.mxu0 %v1456
    %1611 = vmatprep.subr.mxu0 %v1459
    %1612 = vmatpush1.msra.mxu0 %v1458
    %1613 = vmatprep.subr.mxu0 %v1461
    %1614 = vmatpush1.msra.mxu0 %v1460
    %1615 = vmatprep.subr.mxu0 %v1463
    %1616 = vmatpush1.msra.mxu0 %v1462
    %1617 = vmatprep.subr.mxu0 %v1465
    %1618 = vmatpush1.msra.mxu0 %v1464
    %1619 = vmatprep.subr.mxu0 %v1467
    %1620 = vmatpush1.msra.mxu0 %v1466
    %1621 = vmatprep.subr.mxu0 %v1469
    %1622 = vmatpush1.msra.mxu0 %v1468
    %1623 = vmatprep.subr.mxu0 %v1471
    %1624 = vmatpush1.msra.mxu0 %v1470
    %1625 = vmatprep.subr.mxu0 %v1473
    %1626 = vmatpush1.msra.mxu0 %v1472
    %1627 = vmatprep.subr.mxu0 %v1475
    %1628 = vmatpush1.msra.mxu0 %v1474
    %1629 = vmatprep.subr.mxu0 %v1477
    %1630 = vmatpush1.msra.mxu0 %v1476
    %1631 = vmatprep.subr.mxu0 %v1479
    %1632 = vmatpush1.msra.mxu0 %v1478
    %1633 = vmatprep.subr.mxu0 %v1481
    %1634 = vmatpush1.msra.mxu0 %v1480
    %1635 = vmatprep.subr.mxu0 %v1483
    %1636 = vmatpush1.msra.mxu0 %v1482
    %1637 = vmatprep.subr.mxu0 %v1485
    %1638 = vmatpush1.msra.mxu0 %v1484
    %1639 = vmatprep.subr.mxu0 %v1487
    %1640 = vmatpush1.msra.mxu0 %v1486
    %1641 = vmatprep.subr.mxu0 %v1489
    %1642 = vmatpush1.msra.mxu0 %v1488
    %1643 = vmatprep.subr.mxu0 %v1491
    %1644 = vmatpush1.msra.mxu0 %v1490
    %1645 = vmatprep.subr.mxu0 %v1493
    %1646 = vmatpush1.msra.mxu0 %v1492
    %1647 = vmatprep.subr.mxu0 %v1495
    %1648 = vmatpush1.msra.mxu0 %v1494
    %1649 = vmatprep.subr.mxu0 %v1497
    %1650 = vmatpush1.msra.mxu0 %v1496
    %1651 = vmatprep.subr.mxu0 %v1499
    %1652 = vmatpush1.msra.mxu0 %v1498
    %1653 = vmatprep.subr.mxu0 %v1501
    %1654 = vmatpush1.msra.mxu0 %v1500
    %1655 = vmatprep.subr.mxu0 %v1503
    %1656 = vmatpush1.msra.mxu0 %v1502
    %1657 = vmatprep.mubr.f32.mxu0 %v1371
    %1658 = vmatmul.mubr.f32.gmra.mrb[0].mxu0 %v1370
    %v1659 = vpop.f32.mrb[0].mxu0
    %v1660 = vadd.f32 %v1583, %v1659
    %v1661 = vpop.f32.mrb[0].mxu0
    %v1662 = vadd.f32 %v1585, %v1661
    %1663 = vmatprep.mubr.f32.mxu0 %v1375
    %1664 = vmatmul.mubr.f32.gmra.mrb[0].mxu0 %v1374
    %v1665 = vpop.f32.mrb[0].mxu0
    %v1666 = vadd.f32 %v1589, %v1665
    %v1667 = vpop.f32.mrb[0].mxu0
    %v1668 = vadd.f32 %v1591, %v1667
    %1669 = vdwg.mxu0
    %v1670 = vadd.f32 %v1060, %v1660
    %v1671 = vadd.f32 %v1061, %v1662
    %v1672 = vadd.f32 %v1062, %v1666
    %v1673 = vadd.f32 %v1063, %v1668
    %v1674 = vld [vmem:[%s12] sm:$0x3]
    %v1675 = vld [vmem:[%s13] sm:$0x3]
    %v1676 = vadd.f32 %v1670, %v1671
    %1677 = vadd.xlane.f32.xlu0 %v1676
    %v1678 = vpop.xlane.xlu0 %1677
    %v1679 = vadd.f32 %v1672, %v1673
    %1680 = vadd.xlane.f32.xlu0 %v1679
    %v1681 = vpop.xlane.xlu0 %1680
    %v1682 = vmul.f32 %v1678, 0.0053475937
    %v1683 = vmul.f32 %v1681, 0.0053475937
    %v1684 = vsub.f32 %v1670, %v1682
    %v1685 = vsub.f32 %v1671, %v1682
    %v1686 = vsub.f32 %v1672, %v1683
    %v1687 = vsub.f32 %v1673, %v1683
    %v1688 = vsel %vm1008, %v1684, 0.0
    %v1689 = vsel %vm1009, %v1685, 0.0
    %v1690 = vsel %vm1008, %v1686, 0.0
    %v1691 = vsel %vm1009, %v1687, 0.0
    %v1692 = vmul.f32 %v1688, %v1688
    %v1693 = vmul.f32 %v1689, %v1689
    %v1694 = vmul.f32 %v1690, %v1690
    %v1695 = vmul.f32 %v1691, %v1691
    %v1696 = vadd.f32 %v1692, %v1693
    %1697 = vadd.xlane.f32.xlu0 %v1696
    %v1698 = vpop.xlane.xlu0 %1697
    %v1699 = vadd.f32 %v1694, %v1695
    %1700 = vadd.xlane.f32.xlu0 %v1699
    %v1701 = vpop.xlane.xlu0 %1700
    %v1702 = vmul.f32 %v1698, 0.0053475937
    %v1703 = vmul.f32 %v1701, 0.0053475937
    %v1704 = vadd.f32 %v1702, 1e-05
    %v1705 = vadd.f32 %v1703, 1e-05
    %v1706 = vrsqrt.pop %v1704
    %v1707 = vrsqrt.pop %v1705
    %v1708 = vmul.f32 %v1688, %v1706
    %v1709 = vmul.f32 %v1689, %v1706
    %v1710 = vmul.f32 %v1690, %v1707
    %v1711 = vmul.f32 %v1691, %v1707
    %v1713 = vlaneseq
    %v1714 = vshrl.u32 %v1713, 7
    %v1715 = vsub.s32 0, %v1714
    %v1716 = vrot.slane %v1674, %v1715
    %v1717 = vlaneseq
    %v1718 = vshrl.u32 %v1717, 7
    %v1719 = vsub.s32 1, %v1718
    %v1720 = vrot.slane %v1674, %v1719
    %v1723 = vmul.f32 %v1708, %v1716
    %v1724 = vmul.f32 %v1709, %v1720
    %v1725 = vmul.f32 %v1710, %v1716
    %v1726 = vmul.f32 %v1711, %v1720
    %v1728 = vlaneseq
    %v1729 = vshrl.u32 %v1728, 7
    %v1730 = vsub.s32 0, %v1729
    %v1731 = vrot.slane %v1675, %v1730
    %v1732 = vlaneseq
    %v1733 = vshrl.u32 %v1732, 7
    %v1734 = vsub.s32 1, %v1733
    %v1735 = vrot.slane %v1675, %v1734
    %v1738 = vadd.f32 %v1723, %v1731
    %v1739 = vadd.f32 %v1724, %v1735
    %v1740 = vadd.f32 %v1725, %v1731
    %v1741 = vadd.f32 %v1726, %v1735
    %v1746 = vcombine.low %v1738, %v1739
    %v1747 = vcombine.high %v1738, %v1739
    %v1749 = vunpack.c.l.s4 1983009808
    %v1750 = vunpack.c.0.s8 %v1749
    %v1751 = vlaneseq
    %v1752 = vshrl.u32 %v1751, 7
    %v1753 = vsub.s32 %v1750, %v1752
    %v1754 = vrot.slane %v1746, %v1753
    %v1756 = vunpack.c.l.s4 1983009808
    %v1757 = vunpack.c.0.s8 %v1756
    %v1758 = vlaneseq
    %v1759 = vshrl.u32 %v1758, 7
    %v1760 = vsub.s32 %v1757, %v1759
    %v1761 = vrot.slane %v1747, %v1760
    %v1762 = vcombine.high %v1754, %v1754
    %v1763 = vcombine.high %v1761, %v1761
    %v1764 = vcombine.low %v1740, %v1741
    %v1765 = vcombine.high %v1740, %v1741
    %v1767 = vunpack.c.l.s4 1983009808
    %v1768 = vunpack.c.0.s8 %v1767
    %v1769 = vlaneseq
    %v1770 = vshrl.u32 %v1769, 7
    %v1771 = vsub.s32 %v1768, %v1770
    %v1772 = vrot.slane %v1764, %v1771
    %v1774 = vunpack.c.l.s4 1983009808
    %v1775 = vunpack.c.0.s8 %v1774
    %v1776 = vlaneseq
    %v1777 = vshrl.u32 %v1776, 7
    %v1778 = vsub.s32 %v1775, %v1777
    %v1779 = vrot.slane %v1765, %v1778
    %v1780 = vcombine.high %v1772, %v1772
    %v1781 = vcombine.high %v1779, %v1779
    %1790 = vst [vmem:[#allocation13] sm:$0xf] %v1754
    %1791 = vst [vmem:[#allocation13 + $0x4] sm:$0xf] %v1762
    %1792 = vst [vmem:[#allocation13 + $0x8] sm:$0xf] %v1761
    %1793 = vst [vmem:[#allocation13 + $0xc] sm:$0xf] %v1763
    %1794 = vst [vmem:[#allocation13 + $0x10] sm:$0xf] %v1772
    %1795 = vst [vmem:[#allocation13 + $0x14] sm:$0xf] %v1780
    %1796 = vst [vmem:[#allocation13 + $0x18] sm:$0xf] %v1779
    %1797 = vst [vmem:[#allocation13 + $0x1c] sm:$0xf] %v1781
    %v1798 = vsel %vm729, %v749, 0.0
    %v1799 = vsel %vm729, %v751, 0.0
    %1800 = vst [vmem:[#allocation14] sm:$0xff] %v1798
    %1801 = vst [vmem:[#allocation14 + $0x8] sm:$0xff] %v1799
    // Predicated region
    $region82: #{tpu_custom_call.1} parent=1 // pred_check
      _
    $region83: #{tpu_custom_call.1} parent=1 // pred_check_branch
      %1803 = sbr.rel (0) target = $region85
    $region84: #{tpu_custom_call.1} parent=1 // pred_region
      %s1805 = ssub.s32 512, 512
      %1806 = vsyncadd [#allocation4], %s1805
      %s1807 = sshll.u32 [#allocation13], 4
      %s1808 = int_to_ptr.vmem [resolvable:$true] %s1807
      %1813 = dma.vmem_to_hbm [thread:$0]  %s1808, 512, %s14, [#allocation4], 64, 64, 4
    $region85: #{tpu_custom_call.1} parent=1 // pred_fallthru
      _
    // Predicated region
    $region86: #{tpu_custom_call.1} parent=1 // pred_check
      _
    $region87: #{tpu_custom_call.1} parent=1 // pred_check_branch
      %1815 = sbr.rel (0) target = $region89
    $region88: #{tpu_custom_call.1} parent=1 // pred_region
      %s1817 = ssub.s32 256, 256
      %1818 = vsyncadd [#allocation15], %s1817
      %s1819 = sshll.u32 [#allocation14], 4
      %s1820 = int_to_ptr.vmem [resolvable:$true] %s1819
      %1825 = dma.vmem_to_hbm [thread:$0]  %s1820, 256, %s15, [#allocation15], 128, 128, 8
    $region89: #{tpu_custom_call.1} parent=1 // pred_fallthru
      _
    // Predicated region
    $region90: #{tpu_custom_call.1} parent=1 // pred_check
      _
    $region91: #{tpu_custom_call.1} parent=1 // pred_check_branch
      %1827 = sbr.rel (0) target = $region93
    $region92: #{tpu_custom_call.1} parent=1 // pred_region
      %1828 = dma.done [#allocation4], 512
    $region93: #{tpu_custom_call.1} parent=1 // pred_fallthru
      _
    // Predicated region
    $region94: #{tpu_custom_call.1} parent=1 // pred_check
      _
    $region95: #{tpu_custom_call.1} parent=1 // pred_check_branch
      %1830 = sbr.rel (0) target = $region97
    $region96: #{tpu_custom_call.1} parent=1 // pred_region
      %1831 = dma.done [#allocation15], 256
    $region97: #{tpu_custom_call.1} parent=1 // pred_fallthru
      _
    %1832 = vsyncpa [#allocation3], 1
    %1833 = vsyncpa [#allocation6], 1
    %1834 = vsyncpa [#allocation9], 1
    %1835 = vsyncpa [#allocation12], 1
    %1836 = vsyncpa [#allocation4], 1
    %1837 = vsyncpa [#allocation15], 1

</llo_original>
